<compile_context>
chip_gen: v7x
topology: tpu7x:2x2x1
jax: 0.10.0
libtpu: 0.0.40
codegen_flags: <defaults>
</compile_context>

<pallas_src>
import functools

import jax
import jax.numpy as jnp
from jax.experimental import pallas as pl
from jax.experimental.pallas import tpu as pltpu


# ----------------------------------------------------------------------------- kernel


def rnnet_kernel(x_ref, wih0_ref, bi0_ref, whh0_ref, bhn0_ref,
                 wih1_ref, bi1_ref, whh1_ref, bhn1_ref,
                 wo_ref, bo_ref, w1_ref, b1_ref, w2_ref, b2_ref,
                 o_ref,
                 gi0f_ref, gi0b_ref, seqf_ref, seqb_ref, gi1b_ref):
    # x_ref:    (T*NP, C*K)  im2col conv patches, time-major rows (row = t*NP + n)
    # wih0_ref: (2, C*K, 3H) conv-folded layer-0 input weights [fwd, bwd], gates [r|z|n]
    # bi0_ref:  (2, 1, 3H)   conv-folded b_ih0, with b_hh0 pre-summed into the r,z cols
    # whh0_ref: (2, H, 3H)   layer-0 recurrent weights
    # bhn0_ref: (2, 1, H)    layer-0 b_hh for the n gate only (sits inside r * (...))
    # wih1/bi1/whh1/bhn1:    same layout for layer 1 (wih1 rows [:H]=fwd in, [H:]=bwd in)
    # wo/bo, w1/b1, w2/b2:   out_net Linear + projector (ReLU, Linear, ReLU, Linear)
    # o_ref:    (NP, out_dim)
    # scratch:  gi0f/gi0b/gi1b (T,NP,3H) hoisted input projections; seqf/seqb (T,NP,H)
    T, NP, H = seqf_ref.shape
    G = 3 * H
    f32 = jnp.float32

    def dot(a, b):
        return jnp.dot(a, b, preferred_element_type=f32)

    def cell(gi, gh, bhn, h_prev):
        # gi already holds b_ih (all gates) + b_hh (r,z gates); gh = h_prev @ Whh.
        rz = jax.nn.sigmoid(gi[:, :2 * H] + gh[:, :2 * H])   # lane-aligned (NP, 128)
        r = rz[:, :H]
        z = rz[:, H:]
        n = jnp.tanh(gi[:, 2 * H:] + r * (gh[:, 2 * H:] + bhn))
        return (1.0 - z) * n + z * h_prev

    # ---- layer-0 input projection (Conv1d folded in), both directions, all T ----
    x = x_ref[...]                                            # (T*NP, C*K)
    gi0f_ref[...] = (dot(x, wih0_ref[0]) + bi0_ref[0]).reshape(T, NP, G)
    gi0b_ref[...] = (dot(x, wih0_ref[1]) + bi0_ref[1]).reshape(T, NP, G)

    h0 = jnp.zeros((NP, H), f32)

    # ---- layer 0: forward + backward recurrences fused, fully unrolled ----
    whh0f = whh0_ref[0]
    whh0b = whh0_ref[1]
    bhn0f = jnp.broadcast_to(bhn0_ref[0], (NP, H))
    bhn0b = jnp.broadcast_to(bhn0_ref[1], (NP, H))
    hf = h0
    hb = h0
    for t in range(T):
        tb = T - 1 - t
        hf = cell(gi0f_ref[t], dot(hf, whh0f), bhn0f, hf)
        hb = cell(gi0b_ref[tb], dot(hb, whh0b), bhn0b, hb)
        seqf_ref[t] = hf
        seqb_ref[tb] = hb

    # ---- layer 1 backward: hoisted input projection, then unrolled recurrence ----
    # (weight rows are split at H so no per-step concatenation of fwd/bwd is needed)
    seqf_flat = seqf_ref[...].reshape(T * NP, H)
    seqb_flat = seqb_ref[...].reshape(T * NP, H)
    gi1b_ref[...] = (dot(seqf_flat, wih1_ref[1, 0:H, :])
                     + dot(seqb_flat, wih1_ref[1, H:2 * H, :])
                     + bi1_ref[1]).reshape(T, NP, G)
    whh1b = whh1_ref[1]
    bhn1b = jnp.broadcast_to(bhn1_ref[1], (NP, H))
    h1b = h0
    for s in range(T):
        t = T - 1 - s
        h1b = cell(gi1b_ref[t], dot(h1b, whh1b), bhn1b, h1b)

    # ---- layer 1 forward: only t=0 is consumed downstream -> a single cell step ----
    gi1f0 = (dot(seqf_ref[0], wih1_ref[0, 0:H, :])
             + dot(seqb_ref[0], wih1_ref[0, H:2 * H, :])
             + bi1_ref[0])
    bhn1f = jnp.broadcast_to(bhn1_ref[0], (NP, H))
    h1f = cell(gi1f0, jnp.zeros((NP, G), f32), bhn1f, h0)

    # ---- out_net + projector epilogue (Wo rows split: [:H] fwd, [H:] bwd) ----
    y = dot(h1f, wo_ref[0:H, :]) + dot(h1b, wo_ref[H:2 * H, :]) + bo_ref[...]
    y = jnp.maximum(y, 0.0)
    y = dot(y, w1_ref[...]) + b1_ref[...]
    y = jnp.maximum(y, 0.0)
    o_ref[...] = dot(y, w2_ref[...]) + b2_ref[...]


# ----------------------------------------------------------------------------- wrapper


def _full_spec(shape):
    # whole-array block, grid=(1,)
    return pl.BlockSpec(shape, lambda i, s=shape: (0,) * len(s))


def rnnet_pallas(x2d, wih0, bi0, whh0, bhn0, wih1, bi1, whh1, bhn1,
                 wo, bo, w1, b1, w2, b2, *, T, NP, H, out_dim):
    # TODO(synk): for long sequences, chunk the time axis (grid dim / emit_pipeline)
    # instead of holding the whole sequence in VMEM (v7x has only 64 MiB).
    args = (x2d, wih0, bi0, whh0, bhn0, wih1, bi1, whh1, bhn1,
            wo, bo, w1, b1, w2, b2)
    return pl.pallas_call(
        rnnet_kernel,
        grid=(1,),
        in_specs=[_full_spec(a.shape) for a in args],
        out_specs=_full_spec((NP, out_dim)),
        out_shape=jax.ShapeDtypeStruct((NP, out_dim), jnp.float32),
        scratch_shapes=[pltpu.VMEM((T, NP, 3 * H), jnp.float32),   # gi0f
                        pltpu.VMEM((T, NP, 3 * H), jnp.float32),   # gi0b
                        pltpu.VMEM((T, NP, H), jnp.float32),       # seqf
                        pltpu.VMEM((T, NP, H), jnp.float32),       # seqb
                        pltpu.VMEM((T, NP, 3 * H), jnp.float32)],  # gi1b
        compiler_params=pltpu.CompilerParams(
            dimension_semantics=("arbitrary",)),
    )(*args)


# ----------------------------------------------------------------------------- params


def init_params(key, in_dim=1, out_dim=128, n_dim=64, n_layer=2, k=7):
    H = n_dim
    keys = iter(jax.random.split(key, 64))

    def u(shape, bound):
        return jax.random.uniform(next(keys), shape, jnp.float32, -bound, bound)

    params = {}
    cb = 1.0 / (in_dim * k) ** 0.5
    params['conv_w'] = u((n_dim, in_dim, k), cb)          # (out, in, K) like PyTorch
    params['conv_b'] = u((n_dim,), cb)

    gb = 1.0 / H ** 0.5
    gru = []
    for layer in range(n_layer):
        in_sz = n_dim if layer == 0 else 2 * n_dim
        dirs = []
        for _ in range(2):  # forward, reverse
            wih = u((3 * H, in_sz), gb)   # rows ordered [r; z; n] like PyTorch
            whh = u((3 * H, H), gb)
            bih = u((3 * H,), gb)
            bhh = u((3 * H,), gb)
            dirs.append((wih, whh, bih, bhh))
        gru.append(dirs)
    params['gru'] = gru

    ob = 1.0 / (2 * H) ** 0.5
    params['out_w'] = u((out_dim, 2 * H), ob)
    params['out_b'] = u((out_dim,), ob)

    p1 = 1.0 / out_dim ** 0.5
    params['p1_w'] = u((out_dim * 2, out_dim), p1)
    params['p1_b'] = u((out_dim * 2,), p1)
    p2 = 1.0 / (out_dim * 2) ** 0.5
    params['p2_w'] = u((out_dim, out_dim * 2), p2)
    params['p2_b'] = u((out_dim,), p2)
    return params


# ----------------------------------------------------------------------------- forward


@functools.partial(jax.jit, static_argnames=("normalize",))
def rnnet_forward(ts, params, normalize=True):
    # Accept (L,), (N, L) or (N, C_in, L), like the PyTorch module.
    if ts.ndim == 1:
        ts = ts[None, None, :]
    elif ts.ndim == 2:
        ts = ts[:, None, :]
    ts = ts.astype(jnp.float32)
    if normalize:
        # TODO(synk): _normalize_t source is not provided; approximated with
        # per-series z-normalization over the time axis.
        mu = jnp.mean(ts, axis=-1, keepdims=True)
        sd = jnp.std(ts, axis=-1, keepdims=True)
        ts = (ts - mu) / (sd + 1e-8)

    N, C, L = ts.shape
    K, S, P = 7, 2, 3
    T = (L + 2 * P - K) // S + 1
    NP = max(8, ((N + 7) // 8) * 8)     # pad batch to a sublane multiple (free on MXU)

    # --- im2col patches for Conv1d(in_dim, n_dim, 7, stride=2, padding=3), time-major ---
    ts_p = jnp.pad(ts, ((0, NP - N), (0, 0), (P, P)))                   # (NP, C, L+2P)
    idx = S * jnp.arange(T)[:, None] + jnp.arange(K)[None, :]           # (T, K)
    patches = ts_p[:, :, idx]                                           # (NP, C, T, K)
    patches = patches.transpose(2, 0, 1, 3).reshape(T * NP, C * K)      # (T*NP, C*K)

    # --- weight prep (tiny, traced JAX): fold conv into layer-0 input projection,
    #     transpose to (in, out), pre-sum b_ih + b_hh for the r/z gates. ---
    n_dim = params['conv_w'].shape[0]
    H = n_dim
    wc_flat = params['conv_w'].transpose(1, 2, 0).reshape(C * K, n_dim)  # (C*K, n_dim)
    bc = params['conv_b']

    def prep_layer(layer_dirs, fold_conv):
        wihs, bis, whhs, bhns = [], [], [], []
        for wih, whh, bih, bhh in layer_dirs:
            wih_t = wih.T                      # (D_in, 3H), gates [r | z | n]
            whh_t = whh.T                      # (H, 3H)
            if fold_conv:
                bi = bc @ wih_t + bih          # fold conv bias into b_ih
                wih_t = wc_flat @ wih_t        # fold conv weight: (C*K, 3H)
            else:
                bi = bih
            bi = jnp.concatenate([bi[:2 * H] + bhh[:2 * H], bi[2 * H:]])
            wihs.append(wih_t)
            bis.append(bi[None, :])
            whhs.append(whh_t)
            bhns.append(bhh[2 * H:][None, :])
        return jnp.stack(wihs), jnp.stack(bis), jnp.stack(whhs), jnp.stack(bhns)

    wih0, bi0, whh0, bhn0 = prep_layer(params['gru'][0], fold_conv=True)
    wih1, bi1, whh1, bhn1 = prep_layer(params['gru'][1], fold_conv=False)

    out_dim = params['out_w'].shape[0]
    out = rnnet_pallas(
        patches, wih0, bi0, whh0, bhn0, wih1, bi1, whh1, bhn1,
        params['out_w'].T, params['out_b'].reshape(1, -1),
        params['p1_w'].T, params['p1_b'].reshape(1, -1),
        params['p2_w'].T, params['p2_b'].reshape(1, -1),
        T=T, NP=NP, H=H, out_dim=out_dim)
    return out[:N]                                                       # (N, out_dim)


# ----------------------------------------------------------------------------- main


if __name__ == "__main__":
    key = jax.random.PRNGKey(0)
    pkey, xkey = jax.random.split(key)
    params = init_params(pkey, in_dim=1, out_dim=128, n_dim=64, n_layer=2)

    ts = jax.random.normal(xkey, (2, 1, 16), jnp.float32)   # (N, C_in, L)
    out = rnnet_forward(ts, params)
    out = jax.block_until_ready(out)
    assert out.shape == (2, 128), out.shape
    assert bool(jnp.all(jnp.isfinite(out)))
    print("KERNEL_OK")
</pallas_src>

<mosaic_0001>
module attributes {stable_mosaic.version = 11 : i64} {
  func.func @rnnet_kernel(%arg0: i32, %arg1: memref<64x7xf32, #tpu.memory_space<vmem>>, %arg2: memref<2x7x192xf32, #tpu.memory_space<vmem>>, %arg3: memref<2x1x192xf32, #tpu.memory_space<vmem>>, %arg4: memref<2x64x192xf32, #tpu.memory_space<vmem>>, %arg5: memref<2x1x64xf32, #tpu.memory_space<vmem>>, %arg6: memref<2x128x192xf32, #tpu.memory_space<vmem>>, %arg7: memref<2x1x192xf32, #tpu.memory_space<vmem>>, %arg8: memref<2x64x192xf32, #tpu.memory_space<vmem>>, %arg9: memref<2x1x64xf32, #tpu.memory_space<vmem>>, %arg10: memref<128x128xf32, #tpu.memory_space<vmem>>, %arg11: memref<1x128xf32, #tpu.memory_space<vmem>>, %arg12: memref<128x256xf32, #tpu.memory_space<vmem>>, %arg13: memref<1x256xf32, #tpu.memory_space<vmem>>, %arg14: memref<256x128xf32, #tpu.memory_space<vmem>>, %arg15: memref<1x128xf32, #tpu.memory_space<vmem>>, %arg16: memref<8x128xf32, #tpu.memory_space<vmem>>, %arg17: memref<8x8x192xf32, #tpu.memory_space<vmem>>, %arg18: memref<8x8x192xf32, #tpu.memory_space<vmem>>, %arg19: memref<8x8x64xf32, #tpu.memory_space<vmem>>, %arg20: memref<8x8x64xf32, #tpu.memory_space<vmem>>, %arg21: memref<8x8x192xf32, #tpu.memory_space<vmem>>) attributes {dimension_semantics = [#tpu.dimension_semantics<arbitrary>], iteration_bounds = array<i64: 1>, scalar_prefetch = 0 : i64, scratch_operands = 5 : i64, tpu.core_type = #tpu.core_type<tc>, window_params = [{pipeline_mode = #tpu.pipeline_mode<synchronous>, transform_indices = @transform_0, window_bounds = array<i64: 64, 7>}, {pipeline_mode = #tpu.pipeline_mode<synchronous>, transform_indices = @transform_1, window_bounds = array<i64: 2, 7, 192>}, {pipeline_mode = #tpu.pipeline_mode<synchronous>, transform_indices = @transform_2, window_bounds = array<i64: 2, 1, 192>}, {pipeline_mode = #tpu.pipeline_mode<synchronous>, transform_indices = @transform_3, window_bounds = array<i64: 2, 64, 192>}, {pipeline_mode = #tpu.pipeline_mode<synchronous>, transform_indices = @transform_4, window_bounds = array<i64: 2, 1, 64>}, {pipeline_mode = #tpu.pipeline_mode<synchronous>, transform_indices = @transform_5, window_bounds = array<i64: 2, 128, 192>}, {pipeline_mode = #tpu.pipeline_mode<synchronous>, transform_indices = @transform_6, window_bounds = array<i64: 2, 1, 192>}, {pipeline_mode = #tpu.pipeline_mode<synchronous>, transform_indices = @transform_7, window_bounds = array<i64: 2, 64, 192>}, {pipeline_mode = #tpu.pipeline_mode<synchronous>, transform_indices = @transform_8, window_bounds = array<i64: 2, 1, 64>}, {pipeline_mode = #tpu.pipeline_mode<synchronous>, transform_indices = @transform_9, window_bounds = array<i64: 128, 128>}, {pipeline_mode = #tpu.pipeline_mode<synchronous>, transform_indices = @transform_10, window_bounds = array<i64: 1, 128>}, {pipeline_mode = #tpu.pipeline_mode<synchronous>, transform_indices = @transform_11, window_bounds = array<i64: 128, 256>}, {pipeline_mode = #tpu.pipeline_mode<synchronous>, transform_indices = @transform_12, window_bounds = array<i64: 1, 256>}, {pipeline_mode = #tpu.pipeline_mode<synchronous>, transform_indices = @transform_13, window_bounds = array<i64: 256, 128>}, {pipeline_mode = #tpu.pipeline_mode<synchronous>, transform_indices = @transform_14, window_bounds = array<i64: 1, 128>}, {pipeline_mode = #tpu.pipeline_mode<synchronous>, transform_indices = @transform_15, window_bounds = array<i64: 8, 128>}]} {
    %c0 = arith.constant 0 : index
    %c0_0 = arith.constant 0 : index
    %0 = vector.load %arg1[%c0, %c0_0] : memref<64x7xf32, #tpu.memory_space<vmem>>, vector<64x7xf32>
    %c0_1 = arith.constant 0 : index
    %c0_2 = arith.constant 0 : index
    %c0_3 = arith.constant 0 : index
    %1 = vector.load %arg2[%c0_1, %c0_2, %c0_3] : memref<2x7x192xf32, #tpu.memory_space<vmem>>, vector<1x7x192xf32>
    %2 = vector.shape_cast %1 : vector<1x7x192xf32> to vector<7x192xf32>
    %cst = arith.constant dense<0.000000e+00> : vector<64x192xf32>
    %3 = tpu.matmul %0, %2, %cst {dimension_numbers = #tpu.dot_dimension_numbers<[1], [0], [0], [1], [0, 0, 1, 1], [], []>} : vector<64x7xf32>, vector<7x192xf32>, vector<64x192xf32> -> vector<64x192xf32>
    %c0_4 = arith.constant 0 : index
    %c0_5 = arith.constant 0 : index
    %c0_6 = arith.constant 0 : index
    %4 = vector.load %arg3[%c0_4, %c0_5, %c0_6] : memref<2x1x192xf32, #tpu.memory_space<vmem>>, vector<1x1x192xf32>
    %5 = vector.shape_cast %4 : vector<1x1x192xf32> to vector<1x192xf32>
    %6 = vector.broadcast %5 : vector<1x192xf32> to vector<64x192xf32>
    %7 = arith.addf %3, %6 : vector<64x192xf32>
    %8 = vector.shape_cast %7 : vector<64x192xf32> to vector<8x8x192xf32>
    %c0_7 = arith.constant 0 : index
    %c0_8 = arith.constant 0 : index
    %c0_9 = arith.constant 0 : index
    %9 = vector.load %arg17[%c0_7, %c0_8, %c0_9] : memref<8x8x192xf32, #tpu.memory_space<vmem>>, vector<8x8x192xf32>
    tpu.vector_store %arg17[%c0_7, %c0_8, %c0_9], %8 {strides = array<i32>} : memref<8x8x192xf32, #tpu.memory_space<vmem>>, vector<8x8x192xf32>,
    %c1 = arith.constant 1 : index
    %c0_10 = arith.constant 0 : index
    %c0_11 = arith.constant 0 : index
    %10 = vector.load %arg2[%c1, %c0_10, %c0_11] : memref<2x7x192xf32, #tpu.memory_space<vmem>>, vector<1x7x192xf32>
    %11 = vector.shape_cast %10 : vector<1x7x192xf32> to vector<7x192xf32>
    %cst_12 = arith.constant dense<0.000000e+00> : vector<64x192xf32>
    %12 = tpu.matmul %0, %11, %cst_12 {dimension_numbers = #tpu.dot_dimension_numbers<[1], [0], [0], [1], [0, 0, 1, 1], [], []>} : vector<64x7xf32>, vector<7x192xf32>, vector<64x192xf32> -> vector<64x192xf32>
    %c1_13 = arith.constant 1 : index
    %c0_14 = arith.constant 0 : index
    %c0_15 = arith.constant 0 : index
    %13 = vector.load %arg3[%c1_13, %c0_14, %c0_15] : memref<2x1x192xf32, #tpu.memory_space<vmem>>, vector<1x1x192xf32>
    %14 = vector.shape_cast %13 : vector<1x1x192xf32> to vector<1x192xf32>
    %15 = vector.broadcast %14 : vector<1x192xf32> to vector<64x192xf32>
    %16 = arith.addf %12, %15 : vector<64x192xf32>
    %17 = vector.shape_cast %16 : vector<64x192xf32> to vector<8x8x192xf32>
    %c0_16 = arith.constant 0 : index
    %c0_17 = arith.constant 0 : index
    %c0_18 = arith.constant 0 : index
    %18 = vector.load %arg18[%c0_16, %c0_17, %c0_18] : memref<8x8x192xf32, #tpu.memory_space<vmem>>, vector<8x8x192xf32>
    tpu.vector_store %arg18[%c0_16, %c0_17, %c0_18], %17 {strides = array<i32>} : memref<8x8x192xf32, #tpu.memory_space<vmem>>, vector<8x8x192xf32>,
    %cst_19 = arith.constant 0.000000e+00 : f32
    %19 = vector.broadcast %cst_19 : f32 to vector<8x64xf32>
    %c0_20 = arith.constant 0 : index
    %c0_21 = arith.constant 0 : index
    %c0_22 = arith.constant 0 : index
    %20 = vector.load %arg4[%c0_20, %c0_21, %c0_22] : memref<2x64x192xf32, #tpu.memory_space<vmem>>, vector<1x64x192xf32>
    %21 = vector.shape_cast %20 : vector<1x64x192xf32> to vector<64x192xf32>
    %c1_23 = arith.constant 1 : index
    %c0_24 = arith.constant 0 : index
    %c0_25 = arith.constant 0 : index
    %22 = vector.load %arg4[%c1_23, %c0_24, %c0_25] : memref<2x64x192xf32, #tpu.memory_space<vmem>>, vector<1x64x192xf32>
    %23 = vector.shape_cast %22 : vector<1x64x192xf32> to vector<64x192xf32>
    %c0_26 = arith.constant 0 : index
    %c0_27 = arith.constant 0 : index
    %c0_28 = arith.constant 0 : index
    %24 = vector.load %arg5[%c0_26, %c0_27, %c0_28] : memref<2x1x64xf32, #tpu.memory_space<vmem>>, vector<1x1x64xf32>
    %25 = vector.shape_cast %24 : vector<1x1x64xf32> to vector<1x64xf32>
    %26 = vector.shape_cast %25 : vector<1x64xf32> to vector<1x64xf32>
    %27 = vector.broadcast %26 : vector<1x64xf32> to vector<8x64xf32>
    %c1_29 = arith.constant 1 : index
    %c0_30 = arith.constant 0 : index
    %c0_31 = arith.constant 0 : index
    %28 = vector.load %arg5[%c1_29, %c0_30, %c0_31] : memref<2x1x64xf32, #tpu.memory_space<vmem>>, vector<1x1x64xf32>
    %29 = vector.shape_cast %28 : vector<1x1x64xf32> to vector<1x64xf32>
    %30 = vector.shape_cast %29 : vector<1x64xf32> to vector<1x64xf32>
    %31 = vector.broadcast %30 : vector<1x64xf32> to vector<8x64xf32>
    %c0_32 = arith.constant 0 : index
    %c0_33 = arith.constant 0 : index
    %c0_34 = arith.constant 0 : index
    %32 = vector.load %arg17[%c0_32, %c0_33, %c0_34] : memref<8x8x192xf32, #tpu.memory_space<vmem>>, vector<1x8x192xf32>
    %33 = vector.shape_cast %32 : vector<1x8x192xf32> to vector<8x192xf32>
    %cst_35 = arith.constant dense<0.000000e+00> : vector<8x192xf32>
    %34 = tpu.matmul %19, %21, %cst_35 {dimension_numbers = #tpu.dot_dimension_numbers<[1], [0], [0], [1], [0, 0, 1, 1], [], []>} : vector<8x64xf32>, vector<64x192xf32>, vector<8x192xf32> -> vector<8x192xf32>
    %35 = vector.extract_strided_slice %33 {offsets = [0, 0], sizes = [8, 128], strides = [1, 1]} : vector<8x192xf32> to vector<8x128xf32>
    %36 = vector.extract_strided_slice %34 {offsets = [0, 0], sizes = [8, 128], strides = [1, 1]} : vector<8x192xf32> to vector<8x128xf32>
    %37 = arith.addf %35, %36 : vector<8x128xf32>
    %38 = arith.negf %37 : vector<8x128xf32>
    %39 = math.exp %38 : vector<8x128xf32>
    %cst_36 = arith.constant 1.000000e+00 : f32
    %40 = vector.broadcast %cst_36 : f32 to vector<8x128xf32>
    %41 = arith.addf %40, %39 : vector<8x128xf32>
    %42 = arith.divf %40, %41 : vector<8x128xf32>
    %43 = vector.extract_strided_slice %42 {offsets = [0, 0], sizes = [8, 64], strides = [1, 1]} : vector<8x128xf32> to vector<8x64xf32>
    %44 = vector.extract_strided_slice %42 {offsets = [0, 64], sizes = [8, 64], strides = [1, 1]} : vector<8x128xf32> to vector<8x64xf32>
    %45 = vector.extract_strided_slice %33 {offsets = [0, 128], sizes = [8, 64], strides = [1, 1]} : vector<8x192xf32> to vector<8x64xf32>
    %46 = vector.extract_strided_slice %34 {offsets = [0, 128], sizes = [8, 64], strides = [1, 1]} : vector<8x192xf32> to vector<8x64xf32>
    %47 = arith.addf %46, %27 : vector<8x64xf32>
    %48 = arith.mulf %43, %47 : vector<8x64xf32>
    %49 = arith.addf %45, %48 : vector<8x64xf32>
    %50 = math.tanh %49 : vector<8x64xf32>
    %cst_37 = arith.constant 1.000000e+00 : f32
    %51 = vector.broadcast %cst_37 : f32 to vector<8x64xf32>
    %52 = arith.subf %51, %44 : vector<8x64xf32>
    %53 = arith.mulf %52, %50 : vector<8x64xf32>
    %54 = arith.mulf %44, %19 : vector<8x64xf32>
    %55 = arith.addf %53, %54 : vector<8x64xf32>
    %c7 = arith.constant 7 : index
    %c0_38 = arith.constant 0 : index
    %c0_39 = arith.constant 0 : index
    %56 = vector.load %arg18[%c7, %c0_38, %c0_39] : memref<8x8x192xf32, #tpu.memory_space<vmem>>, vector<1x8x192xf32>
    %57 = vector.shape_cast %56 : vector<1x8x192xf32> to vector<8x192xf32>
    %cst_40 = arith.constant dense<0.000000e+00> : vector<8x192xf32>
    %58 = tpu.matmul %19, %23, %cst_40 {dimension_numbers = #tpu.dot_dimension_numbers<[1], [0], [0], [1], [0, 0, 1, 1], [], []>} : vector<8x64xf32>, vector<64x192xf32>, vector<8x192xf32> -> vector<8x192xf32>
    %59 = vector.extract_strided_slice %57 {offsets = [0, 0], sizes = [8, 128], strides = [1, 1]} : vector<8x192xf32> to vector<8x128xf32>
    %60 = vector.extract_strided_slice %58 {offsets = [0, 0], sizes = [8, 128], strides = [1, 1]} : vector<8x192xf32> to vector<8x128xf32>
    %61 = arith.addf %59, %60 : vector<8x128xf32>
    %62 = arith.negf %61 : vector<8x128xf32>
    %63 = math.exp %62 : vector<8x128xf32>
    %cst_41 = arith.constant 1.000000e+00 : f32
    %64 = vector.broadcast %cst_41 : f32 to vector<8x128xf32>
    %65 = arith.addf %64, %63 : vector<8x128xf32>
    %66 = arith.divf %64, %65 : vector<8x128xf32>
    %67 = vector.extract_strided_slice %66 {offsets = [0, 0], sizes = [8, 64], strides = [1, 1]} : vector<8x128xf32> to vector<8x64xf32>
    %68 = vector.extract_strided_slice %66 {offsets = [0, 64], sizes = [8, 64], strides = [1, 1]} : vector<8x128xf32> to vector<8x64xf32>
    %69 = vector.extract_strided_slice %57 {offsets = [0, 128], sizes = [8, 64], strides = [1, 1]} : vector<8x192xf32> to vector<8x64xf32>
    %70 = vector.extract_strided_slice %58 {offsets = [0, 128], sizes = [8, 64], strides = [1, 1]} : vector<8x192xf32> to vector<8x64xf32>
    %71 = arith.addf %70, %31 : vector<8x64xf32>
    %72 = arith.mulf %67, %71 : vector<8x64xf32>
    %73 = arith.addf %69, %72 : vector<8x64xf32>
    %74 = math.tanh %73 : vector<8x64xf32>
    %cst_42 = arith.constant 1.000000e+00 : f32
    %75 = vector.broadcast %cst_42 : f32 to vector<8x64xf32>
    %76 = arith.subf %75, %68 : vector<8x64xf32>
    %77 = arith.mulf %76, %74 : vector<8x64xf32>
    %78 = arith.mulf %68, %19 : vector<8x64xf32>
    %79 = arith.addf %77, %78 : vector<8x64xf32>
    %c0_43 = arith.constant 0 : index
    %c0_44 = arith.constant 0 : index
    %c0_45 = arith.constant 0 : index
    %80 = vector.load %arg19[%c0_43, %c0_44, %c0_45] : memref<8x8x64xf32, #tpu.memory_space<vmem>>, vector<1x8x64xf32>
    %81 = vector.shape_cast %80 : vector<1x8x64xf32> to vector<8x64xf32>
    %82 = vector.shape_cast %55 : vector<8x64xf32> to vector<1x8x64xf32>
    tpu.vector_store %arg19[%c0_43, %c0_44, %c0_45], %82 {strides = array<i32>} : memref<8x8x64xf32, #tpu.memory_space<vmem>>, vector<1x8x64xf32>,
    %c7_46 = arith.constant 7 : index
    %c0_47 = arith.constant 0 : index
    %c0_48 = arith.constant 0 : index
    %83 = vector.load %arg20[%c7_46, %c0_47, %c0_48] : memref<8x8x64xf32, #tpu.memory_space<vmem>>, vector<1x8x64xf32>
    %84 = vector.shape_cast %83 : vector<1x8x64xf32> to vector<8x64xf32>
    %85 = vector.shape_cast %79 : vector<8x64xf32> to vector<1x8x64xf32>
    tpu.vector_store %arg20[%c7_46, %c0_47, %c0_48], %85 {strides = array<i32>} : memref<8x8x64xf32, #tpu.memory_space<vmem>>, vector<1x8x64xf32>,
    %c1_49 = arith.constant 1 : index
    %c0_50 = arith.constant 0 : index
    %c0_51 = arith.constant 0 : index
    %86 = vector.load %arg17[%c1_49, %c0_50, %c0_51] : memref<8x8x192xf32, #tpu.memory_space<vmem>>, vector<1x8x192xf32>
    %87 = vector.shape_cast %86 : vector<1x8x192xf32> to vector<8x192xf32>
    %cst_52 = arith.constant dense<0.000000e+00> : vector<8x192xf32>
    %88 = tpu.matmul %55, %21, %cst_52 {dimension_numbers = #tpu.dot_dimension_numbers<[1], [0], [0], [1], [0, 0, 1, 1], [], []>} : vector<8x64xf32>, vector<64x192xf32>, vector<8x192xf32> -> vector<8x192xf32>
    %89 = vector.extract_strided_slice %87 {offsets = [0, 0], sizes = [8, 128], strides = [1, 1]} : vector<8x192xf32> to vector<8x128xf32>
    %90 = vector.extract_strided_slice %88 {offsets = [0, 0], sizes = [8, 128], strides = [1, 1]} : vector<8x192xf32> to vector<8x128xf32>
    %91 = arith.addf %89, %90 : vector<8x128xf32>
    %92 = arith.negf %91 : vector<8x128xf32>
    %93 = math.exp %92 : vector<8x128xf32>
    %cst_53 = arith.constant 1.000000e+00 : f32
    %94 = vector.broadcast %cst_53 : f32 to vector<8x128xf32>
    %95 = arith.addf %94, %93 : vector<8x128xf32>
    %96 = arith.divf %94, %95 : vector<8x128xf32>
    %97 = vector.extract_strided_slice %96 {offsets = [0, 0], sizes = [8, 64], strides = [1, 1]} : vector<8x128xf32> to vector<8x64xf32>
    %98 = vector.extract_strided_slice %96 {offsets = [0, 64], sizes = [8, 64], strides = [1, 1]} : vector<8x128xf32> to vector<8x64xf32>
    %99 = vector.extract_strided_slice %87 {offsets = [0, 128], sizes = [8, 64], strides = [1, 1]} : vector<8x192xf32> to vector<8x64xf32>
    %100 = vector.extract_strided_slice %88 {offsets = [0, 128], sizes = [8, 64], strides = [1, 1]} : vector<8x192xf32> to vector<8x64xf32>
    %101 = arith.addf %100, %27 : vector<8x64xf32>
    %102 = arith.mulf %97, %101 : vector<8x64xf32>
    %103 = arith.addf %99, %102 : vector<8x64xf32>
    %104 = math.tanh %103 : vector<8x64xf32>
    %cst_54 = arith.constant 1.000000e+00 : f32
    %105 = vector.broadcast %cst_54 : f32 to vector<8x64xf32>
    %106 = arith.subf %105, %98 : vector<8x64xf32>
    %107 = arith.mulf %106, %104 : vector<8x64xf32>
    %108 = arith.mulf %98, %55 : vector<8x64xf32>
    %109 = arith.addf %107, %108 : vector<8x64xf32>
    %c6 = arith.constant 6 : index
    %c0_55 = arith.constant 0 : index
    %c0_56 = arith.constant 0 : index
    %110 = vector.load %arg18[%c6, %c0_55, %c0_56] : memref<8x8x192xf32, #tpu.memory_space<vmem>>, vector<1x8x192xf32>
    %111 = vector.shape_cast %110 : vector<1x8x192xf32> to vector<8x192xf32>
    %cst_57 = arith.constant dense<0.000000e+00> : vector<8x192xf32>
    %112 = tpu.matmul %79, %23, %cst_57 {dimension_numbers = #tpu.dot_dimension_numbers<[1], [0], [0], [1], [0, 0, 1, 1], [], []>} : vector<8x64xf32>, vector<64x192xf32>, vector<8x192xf32> -> vector<8x192xf32>
    %113 = vector.extract_strided_slice %111 {offsets = [0, 0], sizes = [8, 128], strides = [1, 1]} : vector<8x192xf32> to vector<8x128xf32>
    %114 = vector.extract_strided_slice %112 {offsets = [0, 0], sizes = [8, 128], strides = [1, 1]} : vector<8x192xf32> to vector<8x128xf32>
    %115 = arith.addf %113, %114 : vector<8x128xf32>
    %116 = arith.negf %115 : vector<8x128xf32>
    %117 = math.exp %116 : vector<8x128xf32>
    %cst_58 = arith.constant 1.000000e+00 : f32
    %118 = vector.broadcast %cst_58 : f32 to vector<8x128xf32>
    %119 = arith.addf %118, %117 : vector<8x128xf32>
    %120 = arith.divf %118, %119 : vector<8x128xf32>
    %121 = vector.extract_strided_slice %120 {offsets = [0, 0], sizes = [8, 64], strides = [1, 1]} : vector<8x128xf32> to vector<8x64xf32>
    %122 = vector.extract_strided_slice %120 {offsets = [0, 64], sizes = [8, 64], strides = [1, 1]} : vector<8x128xf32> to vector<8x64xf32>
    %123 = vector.extract_strided_slice %111 {offsets = [0, 128], sizes = [8, 64], strides = [1, 1]} : vector<8x192xf32> to vector<8x64xf32>
    %124 = vector.extract_strided_slice %112 {offsets = [0, 128], sizes = [8, 64], strides = [1, 1]} : vector<8x192xf32> to vector<8x64xf32>
    %125 = arith.addf %124, %31 : vector<8x64xf32>
    %126 = arith.mulf %121, %125 : vector<8x64xf32>
    %127 = arith.addf %123, %126 : vector<8x64xf32>
    %128 = math.tanh %127 : vector<8x64xf32>
    %cst_59 = arith.constant 1.000000e+00 : f32
    %129 = vector.broadcast %cst_59 : f32 to vector<8x64xf32>
    %130 = arith.subf %129, %122 : vector<8x64xf32>
    %131 = arith.mulf %130, %128 : vector<8x64xf32>
    %132 = arith.mulf %122, %79 : vector<8x64xf32>
    %133 = arith.addf %131, %132 : vector<8x64xf32>
    %c1_60 = arith.constant 1 : index
    %c0_61 = arith.constant 0 : index
    %c0_62 = arith.constant 0 : index
    %134 = vector.load %arg19[%c1_60, %c0_61, %c0_62] : memref<8x8x64xf32, #tpu.memory_space<vmem>>, vector<1x8x64xf32>
    %135 = vector.shape_cast %134 : vector<1x8x64xf32> to vector<8x64xf32>
    %136 = vector.shape_cast %109 : vector<8x64xf32> to vector<1x8x64xf32>
    tpu.vector_store %arg19[%c1_60, %c0_61, %c0_62], %136 {strides = array<i32>} : memref<8x8x64xf32, #tpu.memory_space<vmem>>, vector<1x8x64xf32>,
    %c6_63 = arith.constant 6 : index
    %c0_64 = arith.constant 0 : index
    %c0_65 = arith.constant 0 : index
    %137 = vector.load %arg20[%c6_63, %c0_64, %c0_65] : memref<8x8x64xf32, #tpu.memory_space<vmem>>, vector<1x8x64xf32>
    %138 = vector.shape_cast %137 : vector<1x8x64xf32> to vector<8x64xf32>
    %139 = vector.shape_cast %133 : vector<8x64xf32> to vector<1x8x64xf32>
    tpu.vector_store %arg20[%c6_63, %c0_64, %c0_65], %139 {strides = array<i32>} : memref<8x8x64xf32, #tpu.memory_space<vmem>>, vector<1x8x64xf32>,
    %c2 = arith.constant 2 : index
    %c0_66 = arith.constant 0 : index
    %c0_67 = arith.constant 0 : index
    %140 = vector.load %arg17[%c2, %c0_66, %c0_67] : memref<8x8x192xf32, #tpu.memory_space<vmem>>, vector<1x8x192xf32>
    %141 = vector.shape_cast %140 : vector<1x8x192xf32> to vector<8x192xf32>
    %cst_68 = arith.constant dense<0.000000e+00> : vector<8x192xf32>
    %142 = tpu.matmul %109, %21, %cst_68 {dimension_numbers = #tpu.dot_dimension_numbers<[1], [0], [0], [1], [0, 0, 1, 1], [], []>} : vector<8x64xf32>, vector<64x192xf32>, vector<8x192xf32> -> vector<8x192xf32>
    %143 = vector.extract_strided_slice %141 {offsets = [0, 0], sizes = [8, 128], strides = [1, 1]} : vector<8x192xf32> to vector<8x128xf32>
    %144 = vector.extract_strided_slice %142 {offsets = [0, 0], sizes = [8, 128], strides = [1, 1]} : vector<8x192xf32> to vector<8x128xf32>
    %145 = arith.addf %143, %144 : vector<8x128xf32>
    %146 = arith.negf %145 : vector<8x128xf32>
    %147 = math.exp %146 : vector<8x128xf32>
    %cst_69 = arith.constant 1.000000e+00 : f32
    %148 = vector.broadcast %cst_69 : f32 to vector<8x128xf32>
    %149 = arith.addf %148, %147 : vector<8x128xf32>
    %150 = arith.divf %148, %149 : vector<8x128xf32>
    %151 = vector.extract_strided_slice %150 {offsets = [0, 0], sizes = [8, 64], strides = [1, 1]} : vector<8x128xf32> to vector<8x64xf32>
    %152 = vector.extract_strided_slice %150 {offsets = [0, 64], sizes = [8, 64], strides = [1, 1]} : vector<8x128xf32> to vector<8x64xf32>
    %153 = vector.extract_strided_slice %141 {offsets = [0, 128], sizes = [8, 64], strides = [1, 1]} : vector<8x192xf32> to vector<8x64xf32>
    %154 = vector.extract_strided_slice %142 {offsets = [0, 128], sizes = [8, 64], strides = [1, 1]} : vector<8x192xf32> to vector<8x64xf32>
    %155 = arith.addf %154, %27 : vector<8x64xf32>
    %156 = arith.mulf %151, %155 : vector<8x64xf32>
    %157 = arith.addf %153, %156 : vector<8x64xf32>
    %158 = math.tanh %157 : vector<8x64xf32>
    %cst_70 = arith.constant 1.000000e+00 : f32
    %159 = vector.broadcast %cst_70 : f32 to vector<8x64xf32>
    %160 = arith.subf %159, %152 : vector<8x64xf32>
    %161 = arith.mulf %160, %158 : vector<8x64xf32>
    %162 = arith.mulf %152, %109 : vector<8x64xf32>
    %163 = arith.addf %161, %162 : vector<8x64xf32>
    %c5 = arith.constant 5 : index
    %c0_71 = arith.constant 0 : index
    %c0_72 = arith.constant 0 : index
    %164 = vector.load %arg18[%c5, %c0_71, %c0_72] : memref<8x8x192xf32, #tpu.memory_space<vmem>>, vector<1x8x192xf32>
    %165 = vector.shape_cast %164 : vector<1x8x192xf32> to vector<8x192xf32>
    %cst_73 = arith.constant dense<0.000000e+00> : vector<8x192xf32>
    %166 = tpu.matmul %133, %23, %cst_73 {dimension_numbers = #tpu.dot_dimension_numbers<[1], [0], [0], [1], [0, 0, 1, 1], [], []>} : vector<8x64xf32>, vector<64x192xf32>, vector<8x192xf32> -> vector<8x192xf32>
    %167 = vector.extract_strided_slice %165 {offsets = [0, 0], sizes = [8, 128], strides = [1, 1]} : vector<8x192xf32> to vector<8x128xf32>
    %168 = vector.extract_strided_slice %166 {offsets = [0, 0], sizes = [8, 128], strides = [1, 1]} : vector<8x192xf32> to vector<8x128xf32>
    %169 = arith.addf %167, %168 : vector<8x128xf32>
    %170 = arith.negf %169 : vector<8x128xf32>
    %171 = math.exp %170 : vector<8x128xf32>
    %cst_74 = arith.constant 1.000000e+00 : f32
    %172 = vector.broadcast %cst_74 : f32 to vector<8x128xf32>
    %173 = arith.addf %172, %171 : vector<8x128xf32>
    %174 = arith.divf %172, %173 : vector<8x128xf32>
    %175 = vector.extract_strided_slice %174 {offsets = [0, 0], sizes = [8, 64], strides = [1, 1]} : vector<8x128xf32> to vector<8x64xf32>
    %176 = vector.extract_strided_slice %174 {offsets = [0, 64], sizes = [8, 64], strides = [1, 1]} : vector<8x128xf32> to vector<8x64xf32>
    %177 = vector.extract_strided_slice %165 {offsets = [0, 128], sizes = [8, 64], strides = [1, 1]} : vector<8x192xf32> to vector<8x64xf32>
    %178 = vector.extract_strided_slice %166 {offsets = [0, 128], sizes = [8, 64], strides = [1, 1]} : vector<8x192xf32> to vector<8x64xf32>
    %179 = arith.addf %178, %31 : vector<8x64xf32>
    %180 = arith.mulf %175, %179 : vector<8x64xf32>
    %181 = arith.addf %177, %180 : vector<8x64xf32>
    %182 = math.tanh %181 : vector<8x64xf32>
    %cst_75 = arith.constant 1.000000e+00 : f32
    %183 = vector.broadcast %cst_75 : f32 to vector<8x64xf32>
    %184 = arith.subf %183, %176 : vector<8x64xf32>
    %185 = arith.mulf %184, %182 : vector<8x64xf32>
    %186 = arith.mulf %176, %133 : vector<8x64xf32>
    %187 = arith.addf %185, %186 : vector<8x64xf32>
    %c2_76 = arith.constant 2 : index
    %c0_77 = arith.constant 0 : index
    %c0_78 = arith.constant 0 : index
    %188 = vector.load %arg19[%c2_76, %c0_77, %c0_78] : memref<8x8x64xf32, #tpu.memory_space<vmem>>, vector<1x8x64xf32>
    %189 = vector.shape_cast %188 : vector<1x8x64xf32> to vector<8x64xf32>
    %190 = vector.shape_cast %163 : vector<8x64xf32> to vector<1x8x64xf32>
    tpu.vector_store %arg19[%c2_76, %c0_77, %c0_78], %190 {strides = array<i32>} : memref<8x8x64xf32, #tpu.memory_space<vmem>>, vector<1x8x64xf32>,
    %c5_79 = arith.constant 5 : index
    %c0_80 = arith.constant 0 : index
    %c0_81 = arith.constant 0 : index
    %191 = vector.load %arg20[%c5_79, %c0_80, %c0_81] : memref<8x8x64xf32, #tpu.memory_space<vmem>>, vector<1x8x64xf32>
    %192 = vector.shape_cast %191 : vector<1x8x64xf32> to vector<8x64xf32>
    %193 = vector.shape_cast %187 : vector<8x64xf32> to vector<1x8x64xf32>
    tpu.vector_store %arg20[%c5_79, %c0_80, %c0_81], %193 {strides = array<i32>} : memref<8x8x64xf32, #tpu.memory_space<vmem>>, vector<1x8x64xf32>,
    %c3 = arith.constant 3 : index
    %c0_82 = arith.constant 0 : index
    %c0_83 = arith.constant 0 : index
    %194 = vector.load %arg17[%c3, %c0_82, %c0_83] : memref<8x8x192xf32, #tpu.memory_space<vmem>>, vector<1x8x192xf32>
    %195 = vector.shape_cast %194 : vector<1x8x192xf32> to vector<8x192xf32>
    %cst_84 = arith.constant dense<0.000000e+00> : vector<8x192xf32>
    %196 = tpu.matmul %163, %21, %cst_84 {dimension_numbers = #tpu.dot_dimension_numbers<[1], [0], [0], [1], [0, 0, 1, 1], [], []>} : vector<8x64xf32>, vector<64x192xf32>, vector<8x192xf32> -> vector<8x192xf32>
    %197 = vector.extract_strided_slice %195 {offsets = [0, 0], sizes = [8, 128], strides = [1, 1]} : vector<8x192xf32> to vector<8x128xf32>
    %198 = vector.extract_strided_slice %196 {offsets = [0, 0], sizes = [8, 128], strides = [1, 1]} : vector<8x192xf32> to vector<8x128xf32>
    %199 = arith.addf %197, %198 : vector<8x128xf32>
    %200 = arith.negf %199 : vector<8x128xf32>
    %201 = math.exp %200 : vector<8x128xf32>
    %cst_85 = arith.constant 1.000000e+00 : f32
    %202 = vector.broadcast %cst_85 : f32 to vector<8x128xf32>
    %203 = arith.addf %202, %201 : vector<8x128xf32>
    %204 = arith.divf %202, %203 : vector<8x128xf32>
    %205 = vector.extract_strided_slice %204 {offsets = [0, 0], sizes = [8, 64], strides = [1, 1]} : vector<8x128xf32> to vector<8x64xf32>
    %206 = vector.extract_strided_slice %204 {offsets = [0, 64], sizes = [8, 64], strides = [1, 1]} : vector<8x128xf32> to vector<8x64xf32>
    %207 = vector.extract_strided_slice %195 {offsets = [0, 128], sizes = [8, 64], strides = [1, 1]} : vector<8x192xf32> to vector<8x64xf32>
    %208 = vector.extract_strided_slice %196 {offsets = [0, 128], sizes = [8, 64], strides = [1, 1]} : vector<8x192xf32> to vector<8x64xf32>
    %209 = arith.addf %208, %27 : vector<8x64xf32>
    %210 = arith.mulf %205, %209 : vector<8x64xf32>
    %211 = arith.addf %207, %210 : vector<8x64xf32>
    %212 = math.tanh %211 : vector<8x64xf32>
    %cst_86 = arith.constant 1.000000e+00 : f32
    %213 = vector.broadcast %cst_86 : f32 to vector<8x64xf32>
    %214 = arith.subf %213, %206 : vector<8x64xf32>
    %215 = arith.mulf %214, %212 : vector<8x64xf32>
    %216 = arith.mulf %206, %163 : vector<8x64xf32>
    %217 = arith.addf %215, %216 : vector<8x64xf32>
    %c4 = arith.constant 4 : index
    %c0_87 = arith.constant 0 : index
    %c0_88 = arith.constant 0 : index
    %218 = vector.load %arg18[%c4, %c0_87, %c0_88] : memref<8x8x192xf32, #tpu.memory_space<vmem>>, vector<1x8x192xf32>
    %219 = vector.shape_cast %218 : vector<1x8x192xf32> to vector<8x192xf32>
    %cst_89 = arith.constant dense<0.000000e+00> : vector<8x192xf32>
    %220 = tpu.matmul %187, %23, %cst_89 {dimension_numbers = #tpu.dot_dimension_numbers<[1], [0], [0], [1], [0, 0, 1, 1], [], []>} : vector<8x64xf32>, vector<64x192xf32>, vector<8x192xf32> -> vector<8x192xf32>
    %221 = vector.extract_strided_slice %219 {offsets = [0, 0], sizes = [8, 128], strides = [1, 1]} : vector<8x192xf32> to vector<8x128xf32>
    %222 = vector.extract_strided_slice %220 {offsets = [0, 0], sizes = [8, 128], strides = [1, 1]} : vector<8x192xf32> to vector<8x128xf32>
    %223 = arith.addf %221, %222 : vector<8x128xf32>
    %224 = arith.negf %223 : vector<8x128xf32>
    %225 = math.exp %224 : vector<8x128xf32>
    %cst_90 = arith.constant 1.000000e+00 : f32
    %226 = vector.broadcast %cst_90 : f32 to vector<8x128xf32>
    %227 = arith.addf %226, %225 : vector<8x128xf32>
    %228 = arith.divf %226, %227 : vector<8x128xf32>
    %229 = vector.extract_strided_slice %228 {offsets = [0, 0], sizes = [8, 64], strides = [1, 1]} : vector<8x128xf32> to vector<8x64xf32>
    %230 = vector.extract_strided_slice %228 {offsets = [0, 64], sizes = [8, 64], strides = [1, 1]} : vector<8x128xf32> to vector<8x64xf32>
    %231 = vector.extract_strided_slice %219 {offsets = [0, 128], sizes = [8, 64], strides = [1, 1]} : vector<8x192xf32> to vector<8x64xf32>
    %232 = vector.extract_strided_slice %220 {offsets = [0, 128], sizes = [8, 64], strides = [1, 1]} : vector<8x192xf32> to vector<8x64xf32>
    %233 = arith.addf %232, %31 : vector<8x64xf32>
    %234 = arith.mulf %229, %233 : vector<8x64xf32>
    %235 = arith.addf %231, %234 : vector<8x64xf32>
    %236 = math.tanh %235 : vector<8x64xf32>
    %cst_91 = arith.constant 1.000000e+00 : f32
    %237 = vector.broadcast %cst_91 : f32 to vector<8x64xf32>
    %238 = arith.subf %237, %230 : vector<8x64xf32>
    %239 = arith.mulf %238, %236 : vector<8x64xf32>
    %240 = arith.mulf %230, %187 : vector<8x64xf32>
    %241 = arith.addf %239, %240 : vector<8x64xf32>
    %c3_92 = arith.constant 3 : index
    %c0_93 = arith.constant 0 : index
    %c0_94 = arith.constant 0 : index
    %242 = vector.load %arg19[%c3_92, %c0_93, %c0_94] : memref<8x8x64xf32, #tpu.memory_space<vmem>>, vector<1x8x64xf32>
    %243 = vector.shape_cast %242 : vector<1x8x64xf32> to vector<8x64xf32>
    %244 = vector.shape_cast %217 : vector<8x64xf32> to vector<1x8x64xf32>
    tpu.vector_store %arg19[%c3_92, %c0_93, %c0_94], %244 {strides = array<i32>} : memref<8x8x64xf32, #tpu.memory_space<vmem>>, vector<1x8x64xf32>,
    %c4_95 = arith.constant 4 : index
    %c0_96 = arith.constant 0 : index
    %c0_97 = arith.constant 0 : index
    %245 = vector.load %arg20[%c4_95, %c0_96, %c0_97] : memref<8x8x64xf32, #tpu.memory_space<vmem>>, vector<1x8x64xf32>
    %246 = vector.shape_cast %245 : vector<1x8x64xf32> to vector<8x64xf32>
    %247 = vector.shape_cast %241 : vector<8x64xf32> to vector<1x8x64xf32>
    tpu.vector_store %arg20[%c4_95, %c0_96, %c0_97], %247 {strides = array<i32>} : memref<8x8x64xf32, #tpu.memory_space<vmem>>, vector<1x8x64xf32>,
    %c4_98 = arith.constant 4 : index
    %c0_99 = arith.constant 0 : index
    %c0_100 = arith.constant 0 : index
    %248 = vector.load %arg17[%c4_98, %c0_99, %c0_100] : memref<8x8x192xf32, #tpu.memory_space<vmem>>, vector<1x8x192xf32>
    %249 = vector.shape_cast %248 : vector<1x8x192xf32> to vector<8x192xf32>
    %cst_101 = arith.constant dense<0.000000e+00> : vector<8x192xf32>
    %250 = tpu.matmul %217, %21, %cst_101 {dimension_numbers = #tpu.dot_dimension_numbers<[1], [0], [0], [1], [0, 0, 1, 1], [], []>} : vector<8x64xf32>, vector<64x192xf32>, vector<8x192xf32> -> vector<8x192xf32>
    %251 = vector.extract_strided_slice %249 {offsets = [0, 0], sizes = [8, 128], strides = [1, 1]} : vector<8x192xf32> to vector<8x128xf32>
    %252 = vector.extract_strided_slice %250 {offsets = [0, 0], sizes = [8, 128], strides = [1, 1]} : vector<8x192xf32> to vector<8x128xf32>
    %253 = arith.addf %251, %252 : vector<8x128xf32>
    %254 = arith.negf %253 : vector<8x128xf32>
    %255 = math.exp %254 : vector<8x128xf32>
    %cst_102 = arith.constant 1.000000e+00 : f32
    %256 = vector.broadcast %cst_102 : f32 to vector<8x128xf32>
    %257 = arith.addf %256, %255 : vector<8x128xf32>
    %258 = arith.divf %256, %257 : vector<8x128xf32>
    %259 = vector.extract_strided_slice %258 {offsets = [0, 0], sizes = [8, 64], strides = [1, 1]} : vector<8x128xf32> to vector<8x64xf32>
    %260 = vector.extract_strided_slice %258 {offsets = [0, 64], sizes = [8, 64], strides = [1, 1]} : vector<8x128xf32> to vector<8x64xf32>
    %261 = vector.extract_strided_slice %249 {offsets = [0, 128], sizes = [8, 64], strides = [1, 1]} : vector<8x192xf32> to vector<8x64xf32>
    %262 = vector.extract_strided_slice %250 {offsets = [0, 128], sizes = [8, 64], strides = [1, 1]} : vector<8x192xf32> to vector<8x64xf32>
    %263 = arith.addf %262, %27 : vector<8x64xf32>
    %264 = arith.mulf %259, %263 : vector<8x64xf32>
    %265 = arith.addf %261, %264 : vector<8x64xf32>
    %266 = math.tanh %265 : vector<8x64xf32>
    %cst_103 = arith.constant 1.000000e+00 : f32
    %267 = vector.broadcast %cst_103 : f32 to vector<8x64xf32>
    %268 = arith.subf %267, %260 : vector<8x64xf32>
    %269 = arith.mulf %268, %266 : vector<8x64xf32>
    %270 = arith.mulf %260, %217 : vector<8x64xf32>
    %271 = arith.addf %269, %270 : vector<8x64xf32>
    %c3_104 = arith.constant 3 : index
    %c0_105 = arith.constant 0 : index
    %c0_106 = arith.constant 0 : index
    %272 = vector.load %arg18[%c3_104, %c0_105, %c0_106] : memref<8x8x192xf32, #tpu.memory_space<vmem>>, vector<1x8x192xf32>
    %273 = vector.shape_cast %272 : vector<1x8x192xf32> to vector<8x192xf32>
    %cst_107 = arith.constant dense<0.000000e+00> : vector<8x192xf32>
    %274 = tpu.matmul %241, %23, %cst_107 {dimension_numbers = #tpu.dot_dimension_numbers<[1], [0], [0], [1], [0, 0, 1, 1], [], []>} : vector<8x64xf32>, vector<64x192xf32>, vector<8x192xf32> -> vector<8x192xf32>
    %275 = vector.extract_strided_slice %273 {offsets = [0, 0], sizes = [8, 128], strides = [1, 1]} : vector<8x192xf32> to vector<8x128xf32>
    %276 = vector.extract_strided_slice %274 {offsets = [0, 0], sizes = [8, 128], strides = [1, 1]} : vector<8x192xf32> to vector<8x128xf32>
    %277 = arith.addf %275, %276 : vector<8x128xf32>
    %278 = arith.negf %277 : vector<8x128xf32>
    %279 = math.exp %278 : vector<8x128xf32>
    %cst_108 = arith.constant 1.000000e+00 : f32
    %280 = vector.broadcast %cst_108 : f32 to vector<8x128xf32>
    %281 = arith.addf %280, %279 : vector<8x128xf32>
    %282 = arith.divf %280, %281 : vector<8x128xf32>
    %283 = vector.extract_strided_slice %282 {offsets = [0, 0], sizes = [8, 64], strides = [1, 1]} : vector<8x128xf32> to vector<8x64xf32>
    %284 = vector.extract_strided_slice %282 {offsets = [0, 64], sizes = [8, 64], strides = [1, 1]} : vector<8x128xf32> to vector<8x64xf32>
    %285 = vector.extract_strided_slice %273 {offsets = [0, 128], sizes = [8, 64], strides = [1, 1]} : vector<8x192xf32> to vector<8x64xf32>
    %286 = vector.extract_strided_slice %274 {offsets = [0, 128], sizes = [8, 64], strides = [1, 1]} : vector<8x192xf32> to vector<8x64xf32>
    %287 = arith.addf %286, %31 : vector<8x64xf32>
    %288 = arith.mulf %283, %287 : vector<8x64xf32>
    %289 = arith.addf %285, %288 : vector<8x64xf32>
    %290 = math.tanh %289 : vector<8x64xf32>
    %cst_109 = arith.constant 1.000000e+00 : f32
    %291 = vector.broadcast %cst_109 : f32 to vector<8x64xf32>
    %292 = arith.subf %291, %284 : vector<8x64xf32>
    %293 = arith.mulf %292, %290 : vector<8x64xf32>
    %294 = arith.mulf %284, %241 : vector<8x64xf32>
    %295 = arith.addf %293, %294 : vector<8x64xf32>
    %c4_110 = arith.constant 4 : index
    %c0_111 = arith.constant 0 : index
    %c0_112 = arith.constant 0 : index
    %296 = vector.load %arg19[%c4_110, %c0_111, %c0_112] : memref<8x8x64xf32, #tpu.memory_space<vmem>>, vector<1x8x64xf32>
    %297 = vector.shape_cast %296 : vector<1x8x64xf32> to vector<8x64xf32>
    %298 = vector.shape_cast %271 : vector<8x64xf32> to vector<1x8x64xf32>
    tpu.vector_store %arg19[%c4_110, %c0_111, %c0_112], %298 {strides = array<i32>} : memref<8x8x64xf32, #tpu.memory_space<vmem>>, vector<1x8x64xf32>,
    %c3_113 = arith.constant 3 : index
    %c0_114 = arith.constant 0 : index
    %c0_115 = arith.constant 0 : index
    %299 = vector.load %arg20[%c3_113, %c0_114, %c0_115] : memref<8x8x64xf32, #tpu.memory_space<vmem>>, vector<1x8x64xf32>
    %300 = vector.shape_cast %299 : vector<1x8x64xf32> to vector<8x64xf32>
    %301 = vector.shape_cast %295 : vector<8x64xf32> to vector<1x8x64xf32>
    tpu.vector_store %arg20[%c3_113, %c0_114, %c0_115], %301 {strides = array<i32>} : memref<8x8x64xf32, #tpu.memory_space<vmem>>, vector<1x8x64xf32>,
    %c5_116 = arith.constant 5 : index
    %c0_117 = arith.constant 0 : index
    %c0_118 = arith.constant 0 : index
    %302 = vector.load %arg17[%c5_116, %c0_117, %c0_118] : memref<8x8x192xf32, #tpu.memory_space<vmem>>, vector<1x8x192xf32>
    %303 = vector.shape_cast %302 : vector<1x8x192xf32> to vector<8x192xf32>
    %cst_119 = arith.constant dense<0.000000e+00> : vector<8x192xf32>
    %304 = tpu.matmul %271, %21, %cst_119 {dimension_numbers = #tpu.dot_dimension_numbers<[1], [0], [0], [1], [0, 0, 1, 1], [], []>} : vector<8x64xf32>, vector<64x192xf32>, vector<8x192xf32> -> vector<8x192xf32>
    %305 = vector.extract_strided_slice %303 {offsets = [0, 0], sizes = [8, 128], strides = [1, 1]} : vector<8x192xf32> to vector<8x128xf32>
    %306 = vector.extract_strided_slice %304 {offsets = [0, 0], sizes = [8, 128], strides = [1, 1]} : vector<8x192xf32> to vector<8x128xf32>
    %307 = arith.addf %305, %306 : vector<8x128xf32>
    %308 = arith.negf %307 : vector<8x128xf32>
    %309 = math.exp %308 : vector<8x128xf32>
    %cst_120 = arith.constant 1.000000e+00 : f32
    %310 = vector.broadcast %cst_120 : f32 to vector<8x128xf32>
    %311 = arith.addf %310, %309 : vector<8x128xf32>
    %312 = arith.divf %310, %311 : vector<8x128xf32>
    %313 = vector.extract_strided_slice %312 {offsets = [0, 0], sizes = [8, 64], strides = [1, 1]} : vector<8x128xf32> to vector<8x64xf32>
    %314 = vector.extract_strided_slice %312 {offsets = [0, 64], sizes = [8, 64], strides = [1, 1]} : vector<8x128xf32> to vector<8x64xf32>
    %315 = vector.extract_strided_slice %303 {offsets = [0, 128], sizes = [8, 64], strides = [1, 1]} : vector<8x192xf32> to vector<8x64xf32>
    %316 = vector.extract_strided_slice %304 {offsets = [0, 128], sizes = [8, 64], strides = [1, 1]} : vector<8x192xf32> to vector<8x64xf32>
    %317 = arith.addf %316, %27 : vector<8x64xf32>
    %318 = arith.mulf %313, %317 : vector<8x64xf32>
    %319 = arith.addf %315, %318 : vector<8x64xf32>
    %320 = math.tanh %319 : vector<8x64xf32>
    %cst_121 = arith.constant 1.000000e+00 : f32
    %321 = vector.broadcast %cst_121 : f32 to vector<8x64xf32>
    %322 = arith.subf %321, %314 : vector<8x64xf32>
    %323 = arith.mulf %322, %320 : vector<8x64xf32>
    %324 = arith.mulf %314, %271 : vector<8x64xf32>
    %325 = arith.addf %323, %324 : vector<8x64xf32>
    %c2_122 = arith.constant 2 : index
    %c0_123 = arith.constant 0 : index
    %c0_124 = arith.constant 0 : index
    %326 = vector.load %arg18[%c2_122, %c0_123, %c0_124] : memref<8x8x192xf32, #tpu.memory_space<vmem>>, vector<1x8x192xf32>
    %327 = vector.shape_cast %326 : vector<1x8x192xf32> to vector<8x192xf32>
    %cst_125 = arith.constant dense<0.000000e+00> : vector<8x192xf32>
    %328 = tpu.matmul %295, %23, %cst_125 {dimension_numbers = #tpu.dot_dimension_numbers<[1], [0], [0], [1], [0, 0, 1, 1], [], []>} : vector<8x64xf32>, vector<64x192xf32>, vector<8x192xf32> -> vector<8x192xf32>
    %329 = vector.extract_strided_slice %327 {offsets = [0, 0], sizes = [8, 128], strides = [1, 1]} : vector<8x192xf32> to vector<8x128xf32>
    %330 = vector.extract_strided_slice %328 {offsets = [0, 0], sizes = [8, 128], strides = [1, 1]} : vector<8x192xf32> to vector<8x128xf32>
    %331 = arith.addf %329, %330 : vector<8x128xf32>
    %332 = arith.negf %331 : vector<8x128xf32>
    %333 = math.exp %332 : vector<8x128xf32>
    %cst_126 = arith.constant 1.000000e+00 : f32
    %334 = vector.broadcast %cst_126 : f32 to vector<8x128xf32>
    %335 = arith.addf %334, %333 : vector<8x128xf32>
    %336 = arith.divf %334, %335 : vector<8x128xf32>
    %337 = vector.extract_strided_slice %336 {offsets = [0, 0], sizes = [8, 64], strides = [1, 1]} : vector<8x128xf32> to vector<8x64xf32>
    %338 = vector.extract_strided_slice %336 {offsets = [0, 64], sizes = [8, 64], strides = [1, 1]} : vector<8x128xf32> to vector<8x64xf32>
    %339 = vector.extract_strided_slice %327 {offsets = [0, 128], sizes = [8, 64], strides = [1, 1]} : vector<8x192xf32> to vector<8x64xf32>
    %340 = vector.extract_strided_slice %328 {offsets = [0, 128], sizes = [8, 64], strides = [1, 1]} : vector<8x192xf32> to vector<8x64xf32>
    %341 = arith.addf %340, %31 : vector<8x64xf32>
    %342 = arith.mulf %337, %341 : vector<8x64xf32>
    %343 = arith.addf %339, %342 : vector<8x64xf32>
    %344 = math.tanh %343 : vector<8x64xf32>
    %cst_127 = arith.constant 1.000000e+00 : f32
    %345 = vector.broadcast %cst_127 : f32 to vector<8x64xf32>
    %346 = arith.subf %345, %338 : vector<8x64xf32>
    %347 = arith.mulf %346, %344 : vector<8x64xf32>
    %348 = arith.mulf %338, %295 : vector<8x64xf32>
    %349 = arith.addf %347, %348 : vector<8x64xf32>
    %c5_128 = arith.constant 5 : index
    %c0_129 = arith.constant 0 : index
    %c0_130 = arith.constant 0 : index
    %350 = vector.load %arg19[%c5_128, %c0_129, %c0_130] : memref<8x8x64xf32, #tpu.memory_space<vmem>>, vector<1x8x64xf32>
    %351 = vector.shape_cast %350 : vector<1x8x64xf32> to vector<8x64xf32>
    %352 = vector.shape_cast %325 : vector<8x64xf32> to vector<1x8x64xf32>
    tpu.vector_store %arg19[%c5_128, %c0_129, %c0_130], %352 {strides = array<i32>} : memref<8x8x64xf32, #tpu.memory_space<vmem>>, vector<1x8x64xf32>,
    %c2_131 = arith.constant 2 : index
    %c0_132 = arith.constant 0 : index
    %c0_133 = arith.constant 0 : index
    %353 = vector.load %arg20[%c2_131, %c0_132, %c0_133] : memref<8x8x64xf32, #tpu.memory_space<vmem>>, vector<1x8x64xf32>
    %354 = vector.shape_cast %353 : vector<1x8x64xf32> to vector<8x64xf32>
    %355 = vector.shape_cast %349 : vector<8x64xf32> to vector<1x8x64xf32>
    tpu.vector_store %arg20[%c2_131, %c0_132, %c0_133], %355 {strides = array<i32>} : memref<8x8x64xf32, #tpu.memory_space<vmem>>, vector<1x8x64xf32>,
    %c6_134 = arith.constant 6 : index
    %c0_135 = arith.constant 0 : index
    %c0_136 = arith.constant 0 : index
    %356 = vector.load %arg17[%c6_134, %c0_135, %c0_136] : memref<8x8x192xf32, #tpu.memory_space<vmem>>, vector<1x8x192xf32>
    %357 = vector.shape_cast %356 : vector<1x8x192xf32> to vector<8x192xf32>
    %cst_137 = arith.constant dense<0.000000e+00> : vector<8x192xf32>
    %358 = tpu.matmul %325, %21, %cst_137 {dimension_numbers = #tpu.dot_dimension_numbers<[1], [0], [0], [1], [0, 0, 1, 1], [], []>} : vector<8x64xf32>, vector<64x192xf32>, vector<8x192xf32> -> vector<8x192xf32>
    %359 = vector.extract_strided_slice %357 {offsets = [0, 0], sizes = [8, 128], strides = [1, 1]} : vector<8x192xf32> to vector<8x128xf32>
    %360 = vector.extract_strided_slice %358 {offsets = [0, 0], sizes = [8, 128], strides = [1, 1]} : vector<8x192xf32> to vector<8x128xf32>
    %361 = arith.addf %359, %360 : vector<8x128xf32>
    %362 = arith.negf %361 : vector<8x128xf32>
    %363 = math.exp %362 : vector<8x128xf32>
    %cst_138 = arith.constant 1.000000e+00 : f32
    %364 = vector.broadcast %cst_138 : f32 to vector<8x128xf32>
    %365 = arith.addf %364, %363 : vector<8x128xf32>
    %366 = arith.divf %364, %365 : vector<8x128xf32>
    %367 = vector.extract_strided_slice %366 {offsets = [0, 0], sizes = [8, 64], strides = [1, 1]} : vector<8x128xf32> to vector<8x64xf32>
    %368 = vector.extract_strided_slice %366 {offsets = [0, 64], sizes = [8, 64], strides = [1, 1]} : vector<8x128xf32> to vector<8x64xf32>
    %369 = vector.extract_strided_slice %357 {offsets = [0, 128], sizes = [8, 64], strides = [1, 1]} : vector<8x192xf32> to vector<8x64xf32>
    %370 = vector.extract_strided_slice %358 {offsets = [0, 128], sizes = [8, 64], strides = [1, 1]} : vector<8x192xf32> to vector<8x64xf32>
    %371 = arith.addf %370, %27 : vector<8x64xf32>
    %372 = arith.mulf %367, %371 : vector<8x64xf32>
    %373 = arith.addf %369, %372 : vector<8x64xf32>
    %374 = math.tanh %373 : vector<8x64xf32>
    %cst_139 = arith.constant 1.000000e+00 : f32
    %375 = vector.broadcast %cst_139 : f32 to vector<8x64xf32>
    %376 = arith.subf %375, %368 : vector<8x64xf32>
    %377 = arith.mulf %376, %374 : vector<8x64xf32>
    %378 = arith.mulf %368, %325 : vector<8x64xf32>
    %379 = arith.addf %377, %378 : vector<8x64xf32>
    %c1_140 = arith.constant 1 : index
    %c0_141 = arith.constant 0 : index
    %c0_142 = arith.constant 0 : index
    %380 = vector.load %arg18[%c1_140, %c0_141, %c0_142] : memref<8x8x192xf32, #tpu.memory_space<vmem>>, vector<1x8x192xf32>
    %381 = vector.shape_cast %380 : vector<1x8x192xf32> to vector<8x192xf32>
    %cst_143 = arith.constant dense<0.000000e+00> : vector<8x192xf32>
    %382 = tpu.matmul %349, %23, %cst_143 {dimension_numbers = #tpu.dot_dimension_numbers<[1], [0], [0], [1], [0, 0, 1, 1], [], []>} : vector<8x64xf32>, vector<64x192xf32>, vector<8x192xf32> -> vector<8x192xf32>
    %383 = vector.extract_strided_slice %381 {offsets = [0, 0], sizes = [8, 128], strides = [1, 1]} : vector<8x192xf32> to vector<8x128xf32>
    %384 = vector.extract_strided_slice %382 {offsets = [0, 0], sizes = [8, 128], strides = [1, 1]} : vector<8x192xf32> to vector<8x128xf32>
    %385 = arith.addf %383, %384 : vector<8x128xf32>
    %386 = arith.negf %385 : vector<8x128xf32>
    %387 = math.exp %386 : vector<8x128xf32>
    %cst_144 = arith.constant 1.000000e+00 : f32
    %388 = vector.broadcast %cst_144 : f32 to vector<8x128xf32>
    %389 = arith.addf %388, %387 : vector<8x128xf32>
    %390 = arith.divf %388, %389 : vector<8x128xf32>
    %391 = vector.extract_strided_slice %390 {offsets = [0, 0], sizes = [8, 64], strides = [1, 1]} : vector<8x128xf32> to vector<8x64xf32>
    %392 = vector.extract_strided_slice %390 {offsets = [0, 64], sizes = [8, 64], strides = [1, 1]} : vector<8x128xf32> to vector<8x64xf32>
    %393 = vector.extract_strided_slice %381 {offsets = [0, 128], sizes = [8, 64], strides = [1, 1]} : vector<8x192xf32> to vector<8x64xf32>
    %394 = vector.extract_strided_slice %382 {offsets = [0, 128], sizes = [8, 64], strides = [1, 1]} : vector<8x192xf32> to vector<8x64xf32>
    %395 = arith.addf %394, %31 : vector<8x64xf32>
    %396 = arith.mulf %391, %395 : vector<8x64xf32>
    %397 = arith.addf %393, %396 : vector<8x64xf32>
    %398 = math.tanh %397 : vector<8x64xf32>
    %cst_145 = arith.constant 1.000000e+00 : f32
    %399 = vector.broadcast %cst_145 : f32 to vector<8x64xf32>
    %400 = arith.subf %399, %392 : vector<8x64xf32>
    %401 = arith.mulf %400, %398 : vector<8x64xf32>
    %402 = arith.mulf %392, %349 : vector<8x64xf32>
    %403 = arith.addf %401, %402 : vector<8x64xf32>
    %c6_146 = arith.constant 6 : index
    %c0_147 = arith.constant 0 : index
    %c0_148 = arith.constant 0 : index
    %404 = vector.load %arg19[%c6_146, %c0_147, %c0_148] : memref<8x8x64xf32, #tpu.memory_space<vmem>>, vector<1x8x64xf32>
    %405 = vector.shape_cast %404 : vector<1x8x64xf32> to vector<8x64xf32>
    %406 = vector.shape_cast %379 : vector<8x64xf32> to vector<1x8x64xf32>
    tpu.vector_store %arg19[%c6_146, %c0_147, %c0_148], %406 {strides = array<i32>} : memref<8x8x64xf32, #tpu.memory_space<vmem>>, vector<1x8x64xf32>,
    %c1_149 = arith.constant 1 : index
    %c0_150 = arith.constant 0 : index
    %c0_151 = arith.constant 0 : index
    %407 = vector.load %arg20[%c1_149, %c0_150, %c0_151] : memref<8x8x64xf32, #tpu.memory_space<vmem>>, vector<1x8x64xf32>
    %408 = vector.shape_cast %407 : vector<1x8x64xf32> to vector<8x64xf32>
    %409 = vector.shape_cast %403 : vector<8x64xf32> to vector<1x8x64xf32>
    tpu.vector_store %arg20[%c1_149, %c0_150, %c0_151], %409 {strides = array<i32>} : memref<8x8x64xf32, #tpu.memory_space<vmem>>, vector<1x8x64xf32>,
    %c7_152 = arith.constant 7 : index
    %c0_153 = arith.constant 0 : index
    %c0_154 = arith.constant 0 : index
    %410 = vector.load %arg17[%c7_152, %c0_153, %c0_154] : memref<8x8x192xf32, #tpu.memory_space<vmem>>, vector<1x8x192xf32>
    %411 = vector.shape_cast %410 : vector<1x8x192xf32> to vector<8x192xf32>
    %cst_155 = arith.constant dense<0.000000e+00> : vector<8x192xf32>
    %412 = tpu.matmul %379, %21, %cst_155 {dimension_numbers = #tpu.dot_dimension_numbers<[1], [0], [0], [1], [0, 0, 1, 1], [], []>} : vector<8x64xf32>, vector<64x192xf32>, vector<8x192xf32> -> vector<8x192xf32>
    %413 = vector.extract_strided_slice %411 {offsets = [0, 0], sizes = [8, 128], strides = [1, 1]} : vector<8x192xf32> to vector<8x128xf32>
    %414 = vector.extract_strided_slice %412 {offsets = [0, 0], sizes = [8, 128], strides = [1, 1]} : vector<8x192xf32> to vector<8x128xf32>
    %415 = arith.addf %413, %414 : vector<8x128xf32>
    %416 = arith.negf %415 : vector<8x128xf32>
    %417 = math.exp %416 : vector<8x128xf32>
    %cst_156 = arith.constant 1.000000e+00 : f32
    %418 = vector.broadcast %cst_156 : f32 to vector<8x128xf32>
    %419 = arith.addf %418, %417 : vector<8x128xf32>
    %420 = arith.divf %418, %419 : vector<8x128xf32>
    %421 = vector.extract_strided_slice %420 {offsets = [0, 0], sizes = [8, 64], strides = [1, 1]} : vector<8x128xf32> to vector<8x64xf32>
    %422 = vector.extract_strided_slice %420 {offsets = [0, 64], sizes = [8, 64], strides = [1, 1]} : vector<8x128xf32> to vector<8x64xf32>
    %423 = vector.extract_strided_slice %411 {offsets = [0, 128], sizes = [8, 64], strides = [1, 1]} : vector<8x192xf32> to vector<8x64xf32>
    %424 = vector.extract_strided_slice %412 {offsets = [0, 128], sizes = [8, 64], strides = [1, 1]} : vector<8x192xf32> to vector<8x64xf32>
    %425 = arith.addf %424, %27 : vector<8x64xf32>
    %426 = arith.mulf %421, %425 : vector<8x64xf32>
    %427 = arith.addf %423, %426 : vector<8x64xf32>
    %428 = math.tanh %427 : vector<8x64xf32>
    %cst_157 = arith.constant 1.000000e+00 : f32
    %429 = vector.broadcast %cst_157 : f32 to vector<8x64xf32>
    %430 = arith.subf %429, %422 : vector<8x64xf32>
    %431 = arith.mulf %430, %428 : vector<8x64xf32>
    %432 = arith.mulf %422, %379 : vector<8x64xf32>
    %433 = arith.addf %431, %432 : vector<8x64xf32>
    %c0_158 = arith.constant 0 : index
    %c0_159 = arith.constant 0 : index
    %c0_160 = arith.constant 0 : index
    %434 = vector.load %arg18[%c0_158, %c0_159, %c0_160] : memref<8x8x192xf32, #tpu.memory_space<vmem>>, vector<1x8x192xf32>
    %435 = vector.shape_cast %434 : vector<1x8x192xf32> to vector<8x192xf32>
    %cst_161 = arith.constant dense<0.000000e+00> : vector<8x192xf32>
    %436 = tpu.matmul %403, %23, %cst_161 {dimension_numbers = #tpu.dot_dimension_numbers<[1], [0], [0], [1], [0, 0, 1, 1], [], []>} : vector<8x64xf32>, vector<64x192xf32>, vector<8x192xf32> -> vector<8x192xf32>
    %437 = vector.extract_strided_slice %435 {offsets = [0, 0], sizes = [8, 128], strides = [1, 1]} : vector<8x192xf32> to vector<8x128xf32>
    %438 = vector.extract_strided_slice %436 {offsets = [0, 0], sizes = [8, 128], strides = [1, 1]} : vector<8x192xf32> to vector<8x128xf32>
    %439 = arith.addf %437, %438 : vector<8x128xf32>
    %440 = arith.negf %439 : vector<8x128xf32>
    %441 = math.exp %440 : vector<8x128xf32>
    %cst_162 = arith.constant 1.000000e+00 : f32
    %442 = vector.broadcast %cst_162 : f32 to vector<8x128xf32>
    %443 = arith.addf %442, %441 : vector<8x128xf32>
    %444 = arith.divf %442, %443 : vector<8x128xf32>
    %445 = vector.extract_strided_slice %444 {offsets = [0, 0], sizes = [8, 64], strides = [1, 1]} : vector<8x128xf32> to vector<8x64xf32>
    %446 = vector.extract_strided_slice %444 {offsets = [0, 64], sizes = [8, 64], strides = [1, 1]} : vector<8x128xf32> to vector<8x64xf32>
    %447 = vector.extract_strided_slice %435 {offsets = [0, 128], sizes = [8, 64], strides = [1, 1]} : vector<8x192xf32> to vector<8x64xf32>
    %448 = vector.extract_strided_slice %436 {offsets = [0, 128], sizes = [8, 64], strides = [1, 1]} : vector<8x192xf32> to vector<8x64xf32>
    %449 = arith.addf %448, %31 : vector<8x64xf32>
    %450 = arith.mulf %445, %449 : vector<8x64xf32>
    %451 = arith.addf %447, %450 : vector<8x64xf32>
    %452 = math.tanh %451 : vector<8x64xf32>
    %cst_163 = arith.constant 1.000000e+00 : f32
    %453 = vector.broadcast %cst_163 : f32 to vector<8x64xf32>
    %454 = arith.subf %453, %446 : vector<8x64xf32>
    %455 = arith.mulf %454, %452 : vector<8x64xf32>
    %456 = arith.mulf %446, %403 : vector<8x64xf32>
    %457 = arith.addf %455, %456 : vector<8x64xf32>
    %c7_164 = arith.constant 7 : index
    %c0_165 = arith.constant 0 : index
    %c0_166 = arith.constant 0 : index
    %458 = vector.load %arg19[%c7_164, %c0_165, %c0_166] : memref<8x8x64xf32, #tpu.memory_space<vmem>>, vector<1x8x64xf32>
    %459 = vector.shape_cast %458 : vector<1x8x64xf32> to vector<8x64xf32>
    %460 = vector.shape_cast %433 : vector<8x64xf32> to vector<1x8x64xf32>
    tpu.vector_store %arg19[%c7_164, %c0_165, %c0_166], %460 {strides = array<i32>} : memref<8x8x64xf32, #tpu.memory_space<vmem>>, vector<1x8x64xf32>,
    %c0_167 = arith.constant 0 : index
    %c0_168 = arith.constant 0 : index
    %c0_169 = arith.constant 0 : index
    %461 = vector.load %arg20[%c0_167, %c0_168, %c0_169] : memref<8x8x64xf32, #tpu.memory_space<vmem>>, vector<1x8x64xf32>
    %462 = vector.shape_cast %461 : vector<1x8x64xf32> to vector<8x64xf32>
    %463 = vector.shape_cast %457 : vector<8x64xf32> to vector<1x8x64xf32>
    tpu.vector_store %arg20[%c0_167, %c0_168, %c0_169], %463 {strides = array<i32>} : memref<8x8x64xf32, #tpu.memory_space<vmem>>, vector<1x8x64xf32>,
    %c0_170 = arith.constant 0 : index
    %c0_171 = arith.constant 0 : index
    %c0_172 = arith.constant 0 : index
    %464 = vector.load %arg19[%c0_170, %c0_171, %c0_172] : memref<8x8x64xf32, #tpu.memory_space<vmem>>, vector<8x8x64xf32>
    %465 = vector.shape_cast %464 : vector<8x8x64xf32> to vector<64x64xf32>
    %c0_173 = arith.constant 0 : index
    %c0_174 = arith.constant 0 : index
    %c0_175 = arith.constant 0 : index
    %466 = vector.load %arg20[%c0_173, %c0_174, %c0_175] : memref<8x8x64xf32, #tpu.memory_space<vmem>>, vector<8x8x64xf32>
    %467 = vector.shape_cast %466 : vector<8x8x64xf32> to vector<64x64xf32>
    %c1_176 = arith.constant 1 : index
    %c0_177 = arith.constant 0 : index
    %c0_178 = arith.constant 0 : index
    %468 = vector.load %arg6[%c1_176, %c0_177, %c0_178] : memref<2x128x192xf32, #tpu.memory_space<vmem>>, vector<1x64x192xf32>
    %469 = vector.shape_cast %468 : vector<1x64x192xf32> to vector<64x192xf32>
    %cst_179 = arith.constant dense<0.000000e+00> : vector<64x192xf32>
    %470 = tpu.matmul %465, %469, %cst_179 {dimension_numbers = #tpu.dot_dimension_numbers<[1], [0], [0], [1], [0, 0, 1, 1], [], []>} : vector<64x64xf32>, vector<64x192xf32>, vector<64x192xf32> -> vector<64x192xf32>
    %c1_180 = arith.constant 1 : index
    %c64 = arith.constant 64 : index
    %c0_181 = arith.constant 0 : index
    %471 = vector.load %arg6[%c1_180, %c64, %c0_181] : memref<2x128x192xf32, #tpu.memory_space<vmem>>, vector<1x64x192xf32>
    %472 = vector.shape_cast %471 : vector<1x64x192xf32> to vector<64x192xf32>
    %cst_182 = arith.constant dense<0.000000e+00> : vector<64x192xf32>
    %473 = tpu.matmul %467, %472, %cst_182 {dimension_numbers = #tpu.dot_dimension_numbers<[1], [0], [0], [1], [0, 0, 1, 1], [], []>} : vector<64x64xf32>, vector<64x192xf32>, vector<64x192xf32> -> vector<64x192xf32>
    %474 = arith.addf %470, %473 : vector<64x192xf32>
    %c1_183 = arith.constant 1 : index
    %c0_184 = arith.constant 0 : index
    %c0_185 = arith.constant 0 : index
    %475 = vector.load %arg7[%c1_183, %c0_184, %c0_185] : memref<2x1x192xf32, #tpu.memory_space<vmem>>, vector<1x1x192xf32>
    %476 = vector.shape_cast %475 : vector<1x1x192xf32> to vector<1x192xf32>
    %477 = vector.broadcast %476 : vector<1x192xf32> to vector<64x192xf32>
    %478 = arith.addf %474, %477 : vector<64x192xf32>
    %479 = vector.shape_cast %478 : vector<64x192xf32> to vector<8x8x192xf32>
    %c0_186 = arith.constant 0 : index
    %c0_187 = arith.constant 0 : index
    %c0_188 = arith.constant 0 : index
    %480 = vector.load %arg21[%c0_186, %c0_187, %c0_188] : memref<8x8x192xf32, #tpu.memory_space<vmem>>, vector<8x8x192xf32>
    tpu.vector_store %arg21[%c0_186, %c0_187, %c0_188], %479 {strides = array<i32>} : memref<8x8x192xf32, #tpu.memory_space<vmem>>, vector<8x8x192xf32>,
    %c1_189 = arith.constant 1 : index
    %c0_190 = arith.constant 0 : index
    %c0_191 = arith.constant 0 : index
    %481 = vector.load %arg8[%c1_189, %c0_190, %c0_191] : memref<2x64x192xf32, #tpu.memory_space<vmem>>, vector<1x64x192xf32>
    %482 = vector.shape_cast %481 : vector<1x64x192xf32> to vector<64x192xf32>
    %c1_192 = arith.constant 1 : index
    %c0_193 = arith.constant 0 : index
    %c0_194 = arith.constant 0 : index
    %483 = vector.load %arg9[%c1_192, %c0_193, %c0_194] : memref<2x1x64xf32, #tpu.memory_space<vmem>>, vector<1x1x64xf32>
    %484 = vector.shape_cast %483 : vector<1x1x64xf32> to vector<1x64xf32>
    %485 = vector.shape_cast %484 : vector<1x64xf32> to vector<1x64xf32>
    %486 = vector.broadcast %485 : vector<1x64xf32> to vector<8x64xf32>
    %c7_195 = arith.constant 7 : index
    %c0_196 = arith.constant 0 : index
    %c0_197 = arith.constant 0 : index
    %487 = vector.load %arg21[%c7_195, %c0_196, %c0_197] : memref<8x8x192xf32, #tpu.memory_space<vmem>>, vector<1x8x192xf32>
    %488 = vector.shape_cast %487 : vector<1x8x192xf32> to vector<8x192xf32>
    %cst_198 = arith.constant dense<0.000000e+00> : vector<8x192xf32>
    %489 = tpu.matmul %19, %482, %cst_198 {dimension_numbers = #tpu.dot_dimension_numbers<[1], [0], [0], [1], [0, 0, 1, 1], [], []>} : vector<8x64xf32>, vector<64x192xf32>, vector<8x192xf32> -> vector<8x192xf32>
    %490 = vector.extract_strided_slice %488 {offsets = [0, 0], sizes = [8, 128], strides = [1, 1]} : vector<8x192xf32> to vector<8x128xf32>
    %491 = vector.extract_strided_slice %489 {offsets = [0, 0], sizes = [8, 128], strides = [1, 1]} : vector<8x192xf32> to vector<8x128xf32>
    %492 = arith.addf %490, %491 : vector<8x128xf32>
    %493 = arith.negf %492 : vector<8x128xf32>
    %494 = math.exp %493 : vector<8x128xf32>
    %cst_199 = arith.constant 1.000000e+00 : f32
    %495 = vector.broadcast %cst_199 : f32 to vector<8x128xf32>
    %496 = arith.addf %495, %494 : vector<8x128xf32>
    %497 = arith.divf %495, %496 : vector<8x128xf32>
    %498 = vector.extract_strided_slice %497 {offsets = [0, 0], sizes = [8, 64], strides = [1, 1]} : vector<8x128xf32> to vector<8x64xf32>
    %499 = vector.extract_strided_slice %497 {offsets = [0, 64], sizes = [8, 64], strides = [1, 1]} : vector<8x128xf32> to vector<8x64xf32>
    %500 = vector.extract_strided_slice %488 {offsets = [0, 128], sizes = [8, 64], strides = [1, 1]} : vector<8x192xf32> to vector<8x64xf32>
    %501 = vector.extract_strided_slice %489 {offsets = [0, 128], sizes = [8, 64], strides = [1, 1]} : vector<8x192xf32> to vector<8x64xf32>
    %502 = arith.addf %501, %486 : vector<8x64xf32>
    %503 = arith.mulf %498, %502 : vector<8x64xf32>
    %504 = arith.addf %500, %503 : vector<8x64xf32>
    %505 = math.tanh %504 : vector<8x64xf32>
    %cst_200 = arith.constant 1.000000e+00 : f32
    %506 = vector.broadcast %cst_200 : f32 to vector<8x64xf32>
    %507 = arith.subf %506, %499 : vector<8x64xf32>
    %508 = arith.mulf %507, %505 : vector<8x64xf32>
    %509 = arith.mulf %499, %19 : vector<8x64xf32>
    %510 = arith.addf %508, %509 : vector<8x64xf32>
    %c6_201 = arith.constant 6 : index
    %c0_202 = arith.constant 0 : index
    %c0_203 = arith.constant 0 : index
    %511 = vector.load %arg21[%c6_201, %c0_202, %c0_203] : memref<8x8x192xf32, #tpu.memory_space<vmem>>, vector<1x8x192xf32>
    %512 = vector.shape_cast %511 : vector<1x8x192xf32> to vector<8x192xf32>
    %cst_204 = arith.constant dense<0.000000e+00> : vector<8x192xf32>
    %513 = tpu.matmul %510, %482, %cst_204 {dimension_numbers = #tpu.dot_dimension_numbers<[1], [0], [0], [1], [0, 0, 1, 1], [], []>} : vector<8x64xf32>, vector<64x192xf32>, vector<8x192xf32> -> vector<8x192xf32>
    %514 = vector.extract_strided_slice %512 {offsets = [0, 0], sizes = [8, 128], strides = [1, 1]} : vector<8x192xf32> to vector<8x128xf32>
    %515 = vector.extract_strided_slice %513 {offsets = [0, 0], sizes = [8, 128], strides = [1, 1]} : vector<8x192xf32> to vector<8x128xf32>
    %516 = arith.addf %514, %515 : vector<8x128xf32>
    %517 = arith.negf %516 : vector<8x128xf32>
    %518 = math.exp %517 : vector<8x128xf32>
    %cst_205 = arith.constant 1.000000e+00 : f32
    %519 = vector.broadcast %cst_205 : f32 to vector<8x128xf32>
    %520 = arith.addf %519, %518 : vector<8x128xf32>
    %521 = arith.divf %519, %520 : vector<8x128xf32>
    %522 = vector.extract_strided_slice %521 {offsets = [0, 0], sizes = [8, 64], strides = [1, 1]} : vector<8x128xf32> to vector<8x64xf32>
    %523 = vector.extract_strided_slice %521 {offsets = [0, 64], sizes = [8, 64], strides = [1, 1]} : vector<8x128xf32> to vector<8x64xf32>
    %524 = vector.extract_strided_slice %512 {offsets = [0, 128], sizes = [8, 64], strides = [1, 1]} : vector<8x192xf32> to vector<8x64xf32>
    %525 = vector.extract_strided_slice %513 {offsets = [0, 128], sizes = [8, 64], strides = [1, 1]} : vector<8x192xf32> to vector<8x64xf32>
    %526 = arith.addf %525, %486 : vector<8x64xf32>
    %527 = arith.mulf %522, %526 : vector<8x64xf32>
    %528 = arith.addf %524, %527 : vector<8x64xf32>
    %529 = math.tanh %528 : vector<8x64xf32>
    %cst_206 = arith.constant 1.000000e+00 : f32
    %530 = vector.broadcast %cst_206 : f32 to vector<8x64xf32>
    %531 = arith.subf %530, %523 : vector<8x64xf32>
    %532 = arith.mulf %531, %529 : vector<8x64xf32>
    %533 = arith.mulf %523, %510 : vector<8x64xf32>
    %534 = arith.addf %532, %533 : vector<8x64xf32>
    %c5_207 = arith.constant 5 : index
    %c0_208 = arith.constant 0 : index
    %c0_209 = arith.constant 0 : index
    %535 = vector.load %arg21[%c5_207, %c0_208, %c0_209] : memref<8x8x192xf32, #tpu.memory_space<vmem>>, vector<1x8x192xf32>
    %536 = vector.shape_cast %535 : vector<1x8x192xf32> to vector<8x192xf32>
    %cst_210 = arith.constant dense<0.000000e+00> : vector<8x192xf32>
    %537 = tpu.matmul %534, %482, %cst_210 {dimension_numbers = #tpu.dot_dimension_numbers<[1], [0], [0], [1], [0, 0, 1, 1], [], []>} : vector<8x64xf32>, vector<64x192xf32>, vector<8x192xf32> -> vector<8x192xf32>
    %538 = vector.extract_strided_slice %536 {offsets = [0, 0], sizes = [8, 128], strides = [1, 1]} : vector<8x192xf32> to vector<8x128xf32>
    %539 = vector.extract_strided_slice %537 {offsets = [0, 0], sizes = [8, 128], strides = [1, 1]} : vector<8x192xf32> to vector<8x128xf32>
    %540 = arith.addf %538, %539 : vector<8x128xf32>
    %541 = arith.negf %540 : vector<8x128xf32>
    %542 = math.exp %541 : vector<8x128xf32>
    %cst_211 = arith.constant 1.000000e+00 : f32
    %543 = vector.broadcast %cst_211 : f32 to vector<8x128xf32>
    %544 = arith.addf %543, %542 : vector<8x128xf32>
    %545 = arith.divf %543, %544 : vector<8x128xf32>
    %546 = vector.extract_strided_slice %545 {offsets = [0, 0], sizes = [8, 64], strides = [1, 1]} : vector<8x128xf32> to vector<8x64xf32>
    %547 = vector.extract_strided_slice %545 {offsets = [0, 64], sizes = [8, 64], strides = [1, 1]} : vector<8x128xf32> to vector<8x64xf32>
    %548 = vector.extract_strided_slice %536 {offsets = [0, 128], sizes = [8, 64], strides = [1, 1]} : vector<8x192xf32> to vector<8x64xf32>
    %549 = vector.extract_strided_slice %537 {offsets = [0, 128], sizes = [8, 64], strides = [1, 1]} : vector<8x192xf32> to vector<8x64xf32>
    %550 = arith.addf %549, %486 : vector<8x64xf32>
    %551 = arith.mulf %546, %550 : vector<8x64xf32>
    %552 = arith.addf %548, %551 : vector<8x64xf32>
    %553 = math.tanh %552 : vector<8x64xf32>
    %cst_212 = arith.constant 1.000000e+00 : f32
    %554 = vector.broadcast %cst_212 : f32 to vector<8x64xf32>
    %555 = arith.subf %554, %547 : vector<8x64xf32>
    %556 = arith.mulf %555, %553 : vector<8x64xf32>
    %557 = arith.mulf %547, %534 : vector<8x64xf32>
    %558 = arith.addf %556, %557 : vector<8x64xf32>
    %c4_213 = arith.constant 4 : index
    %c0_214 = arith.constant 0 : index
    %c0_215 = arith.constant 0 : index
    %559 = vector.load %arg21[%c4_213, %c0_214, %c0_215] : memref<8x8x192xf32, #tpu.memory_space<vmem>>, vector<1x8x192xf32>
    %560 = vector.shape_cast %559 : vector<1x8x192xf32> to vector<8x192xf32>
    %cst_216 = arith.constant dense<0.000000e+00> : vector<8x192xf32>
    %561 = tpu.matmul %558, %482, %cst_216 {dimension_numbers = #tpu.dot_dimension_numbers<[1], [0], [0], [1], [0, 0, 1, 1], [], []>} : vector<8x64xf32>, vector<64x192xf32>, vector<8x192xf32> -> vector<8x192xf32>
    %562 = vector.extract_strided_slice %560 {offsets = [0, 0], sizes = [8, 128], strides = [1, 1]} : vector<8x192xf32> to vector<8x128xf32>
    %563 = vector.extract_strided_slice %561 {offsets = [0, 0], sizes = [8, 128], strides = [1, 1]} : vector<8x192xf32> to vector<8x128xf32>
    %564 = arith.addf %562, %563 : vector<8x128xf32>
    %565 = arith.negf %564 : vector<8x128xf32>
    %566 = math.exp %565 : vector<8x128xf32>
    %cst_217 = arith.constant 1.000000e+00 : f32
    %567 = vector.broadcast %cst_217 : f32 to vector<8x128xf32>
    %568 = arith.addf %567, %566 : vector<8x128xf32>
    %569 = arith.divf %567, %568 : vector<8x128xf32>
    %570 = vector.extract_strided_slice %569 {offsets = [0, 0], sizes = [8, 64], strides = [1, 1]} : vector<8x128xf32> to vector<8x64xf32>
    %571 = vector.extract_strided_slice %569 {offsets = [0, 64], sizes = [8, 64], strides = [1, 1]} : vector<8x128xf32> to vector<8x64xf32>
    %572 = vector.extract_strided_slice %560 {offsets = [0, 128], sizes = [8, 64], strides = [1, 1]} : vector<8x192xf32> to vector<8x64xf32>
    %573 = vector.extract_strided_slice %561 {offsets = [0, 128], sizes = [8, 64], strides = [1, 1]} : vector<8x192xf32> to vector<8x64xf32>
    %574 = arith.addf %573, %486 : vector<8x64xf32>
    %575 = arith.mulf %570, %574 : vector<8x64xf32>
    %576 = arith.addf %572, %575 : vector<8x64xf32>
    %577 = math.tanh %576 : vector<8x64xf32>
    %cst_218 = arith.constant 1.000000e+00 : f32
    %578 = vector.broadcast %cst_218 : f32 to vector<8x64xf32>
    %579 = arith.subf %578, %571 : vector<8x64xf32>
    %580 = arith.mulf %579, %577 : vector<8x64xf32>
    %581 = arith.mulf %571, %558 : vector<8x64xf32>
    %582 = arith.addf %580, %581 : vector<8x64xf32>
    %c3_219 = arith.constant 3 : index
    %c0_220 = arith.constant 0 : index
    %c0_221 = arith.constant 0 : index
    %583 = vector.load %arg21[%c3_219, %c0_220, %c0_221] : memref<8x8x192xf32, #tpu.memory_space<vmem>>, vector<1x8x192xf32>
    %584 = vector.shape_cast %583 : vector<1x8x192xf32> to vector<8x192xf32>
    %cst_222 = arith.constant dense<0.000000e+00> : vector<8x192xf32>
    %585 = tpu.matmul %582, %482, %cst_222 {dimension_numbers = #tpu.dot_dimension_numbers<[1], [0], [0], [1], [0, 0, 1, 1], [], []>} : vector<8x64xf32>, vector<64x192xf32>, vector<8x192xf32> -> vector<8x192xf32>
    %586 = vector.extract_strided_slice %584 {offsets = [0, 0], sizes = [8, 128], strides = [1, 1]} : vector<8x192xf32> to vector<8x128xf32>
    %587 = vector.extract_strided_slice %585 {offsets = [0, 0], sizes = [8, 128], strides = [1, 1]} : vector<8x192xf32> to vector<8x128xf32>
    %588 = arith.addf %586, %587 : vector<8x128xf32>
    %589 = arith.negf %588 : vector<8x128xf32>
    %590 = math.exp %589 : vector<8x128xf32>
    %cst_223 = arith.constant 1.000000e+00 : f32
    %591 = vector.broadcast %cst_223 : f32 to vector<8x128xf32>
    %592 = arith.addf %591, %590 : vector<8x128xf32>
    %593 = arith.divf %591, %592 : vector<8x128xf32>
    %594 = vector.extract_strided_slice %593 {offsets = [0, 0], sizes = [8, 64], strides = [1, 1]} : vector<8x128xf32> to vector<8x64xf32>
    %595 = vector.extract_strided_slice %593 {offsets = [0, 64], sizes = [8, 64], strides = [1, 1]} : vector<8x128xf32> to vector<8x64xf32>
    %596 = vector.extract_strided_slice %584 {offsets = [0, 128], sizes = [8, 64], strides = [1, 1]} : vector<8x192xf32> to vector<8x64xf32>
    %597 = vector.extract_strided_slice %585 {offsets = [0, 128], sizes = [8, 64], strides = [1, 1]} : vector<8x192xf32> to vector<8x64xf32>
    %598 = arith.addf %597, %486 : vector<8x64xf32>
    %599 = arith.mulf %594, %598 : vector<8x64xf32>
    %600 = arith.addf %596, %599 : vector<8x64xf32>
    %601 = math.tanh %600 : vector<8x64xf32>
    %cst_224 = arith.constant 1.000000e+00 : f32
    %602 = vector.broadcast %cst_224 : f32 to vector<8x64xf32>
    %603 = arith.subf %602, %595 : vector<8x64xf32>
    %604 = arith.mulf %603, %601 : vector<8x64xf32>
    %605 = arith.mulf %595, %582 : vector<8x64xf32>
    %606 = arith.addf %604, %605 : vector<8x64xf32>
    %c2_225 = arith.constant 2 : index
    %c0_226 = arith.constant 0 : index
    %c0_227 = arith.constant 0 : index
    %607 = vector.load %arg21[%c2_225, %c0_226, %c0_227] : memref<8x8x192xf32, #tpu.memory_space<vmem>>, vector<1x8x192xf32>
    %608 = vector.shape_cast %607 : vector<1x8x192xf32> to vector<8x192xf32>
    %cst_228 = arith.constant dense<0.000000e+00> : vector<8x192xf32>
    %609 = tpu.matmul %606, %482, %cst_228 {dimension_numbers = #tpu.dot_dimension_numbers<[1], [0], [0], [1], [0, 0, 1, 1], [], []>} : vector<8x64xf32>, vector<64x192xf32>, vector<8x192xf32> -> vector<8x192xf32>
    %610 = vector.extract_strided_slice %608 {offsets = [0, 0], sizes = [8, 128], strides = [1, 1]} : vector<8x192xf32> to vector<8x128xf32>
    %611 = vector.extract_strided_slice %609 {offsets = [0, 0], sizes = [8, 128], strides = [1, 1]} : vector<8x192xf32> to vector<8x128xf32>
    %612 = arith.addf %610, %611 : vector<8x128xf32>
    %613 = arith.negf %612 : vector<8x128xf32>
    %614 = math.exp %613 : vector<8x128xf32>
    %cst_229 = arith.constant 1.000000e+00 : f32
    %615 = vector.broadcast %cst_229 : f32 to vector<8x128xf32>
    %616 = arith.addf %615, %614 : vector<8x128xf32>
    %617 = arith.divf %615, %616 : vector<8x128xf32>
    %618 = vector.extract_strided_slice %617 {offsets = [0, 0], sizes = [8, 64], strides = [1, 1]} : vector<8x128xf32> to vector<8x64xf32>
    %619 = vector.extract_strided_slice %617 {offsets = [0, 64], sizes = [8, 64], strides = [1, 1]} : vector<8x128xf32> to vector<8x64xf32>
    %620 = vector.extract_strided_slice %608 {offsets = [0, 128], sizes = [8, 64], strides = [1, 1]} : vector<8x192xf32> to vector<8x64xf32>
    %621 = vector.extract_strided_slice %609 {offsets = [0, 128], sizes = [8, 64], strides = [1, 1]} : vector<8x192xf32> to vector<8x64xf32>
    %622 = arith.addf %621, %486 : vector<8x64xf32>
    %623 = arith.mulf %618, %622 : vector<8x64xf32>
    %624 = arith.addf %620, %623 : vector<8x64xf32>
    %625 = math.tanh %624 : vector<8x64xf32>
    %cst_230 = arith.constant 1.000000e+00 : f32
    %626 = vector.broadcast %cst_230 : f32 to vector<8x64xf32>
    %627 = arith.subf %626, %619 : vector<8x64xf32>
    %628 = arith.mulf %627, %625 : vector<8x64xf32>
    %629 = arith.mulf %619, %606 : vector<8x64xf32>
    %630 = arith.addf %628, %629 : vector<8x64xf32>
    %c1_231 = arith.constant 1 : index
    %c0_232 = arith.constant 0 : index
    %c0_233 = arith.constant 0 : index
    %631 = vector.load %arg21[%c1_231, %c0_232, %c0_233] : memref<8x8x192xf32, #tpu.memory_space<vmem>>, vector<1x8x192xf32>
    %632 = vector.shape_cast %631 : vector<1x8x192xf32> to vector<8x192xf32>
    %cst_234 = arith.constant dense<0.000000e+00> : vector<8x192xf32>
    %633 = tpu.matmul %630, %482, %cst_234 {dimension_numbers = #tpu.dot_dimension_numbers<[1], [0], [0], [1], [0, 0, 1, 1], [], []>} : vector<8x64xf32>, vector<64x192xf32>, vector<8x192xf32> -> vector<8x192xf32>
    %634 = vector.extract_strided_slice %632 {offsets = [0, 0], sizes = [8, 128], strides = [1, 1]} : vector<8x192xf32> to vector<8x128xf32>
    %635 = vector.extract_strided_slice %633 {offsets = [0, 0], sizes = [8, 128], strides = [1, 1]} : vector<8x192xf32> to vector<8x128xf32>
    %636 = arith.addf %634, %635 : vector<8x128xf32>
    %637 = arith.negf %636 : vector<8x128xf32>
    %638 = math.exp %637 : vector<8x128xf32>
    %cst_235 = arith.constant 1.000000e+00 : f32
    %639 = vector.broadcast %cst_235 : f32 to vector<8x128xf32>
    %640 = arith.addf %639, %638 : vector<8x128xf32>
    %641 = arith.divf %639, %640 : vector<8x128xf32>
    %642 = vector.extract_strided_slice %641 {offsets = [0, 0], sizes = [8, 64], strides = [1, 1]} : vector<8x128xf32> to vector<8x64xf32>
    %643 = vector.extract_strided_slice %641 {offsets = [0, 64], sizes = [8, 64], strides = [1, 1]} : vector<8x128xf32> to vector<8x64xf32>
    %644 = vector.extract_strided_slice %632 {offsets = [0, 128], sizes = [8, 64], strides = [1, 1]} : vector<8x192xf32> to vector<8x64xf32>
    %645 = vector.extract_strided_slice %633 {offsets = [0, 128], sizes = [8, 64], strides = [1, 1]} : vector<8x192xf32> to vector<8x64xf32>
    %646 = arith.addf %645, %486 : vector<8x64xf32>
    %647 = arith.mulf %642, %646 : vector<8x64xf32>
    %648 = arith.addf %644, %647 : vector<8x64xf32>
    %649 = math.tanh %648 : vector<8x64xf32>
    %cst_236 = arith.constant 1.000000e+00 : f32
    %650 = vector.broadcast %cst_236 : f32 to vector<8x64xf32>
    %651 = arith.subf %650, %643 : vector<8x64xf32>
    %652 = arith.mulf %651, %649 : vector<8x64xf32>
    %653 = arith.mulf %643, %630 : vector<8x64xf32>
    %654 = arith.addf %652, %653 : vector<8x64xf32>
    %c0_237 = arith.constant 0 : index
    %c0_238 = arith.constant 0 : index
    %c0_239 = arith.constant 0 : index
    %655 = vector.load %arg21[%c0_237, %c0_238, %c0_239] : memref<8x8x192xf32, #tpu.memory_space<vmem>>, vector<1x8x192xf32>
    %656 = vector.shape_cast %655 : vector<1x8x192xf32> to vector<8x192xf32>
    %cst_240 = arith.constant dense<0.000000e+00> : vector<8x192xf32>
    %657 = tpu.matmul %654, %482, %cst_240 {dimension_numbers = #tpu.dot_dimension_numbers<[1], [0], [0], [1], [0, 0, 1, 1], [], []>} : vector<8x64xf32>, vector<64x192xf32>, vector<8x192xf32> -> vector<8x192xf32>
    %658 = vector.extract_strided_slice %656 {offsets = [0, 0], sizes = [8, 128], strides = [1, 1]} : vector<8x192xf32> to vector<8x128xf32>
    %659 = vector.extract_strided_slice %657 {offsets = [0, 0], sizes = [8, 128], strides = [1, 1]} : vector<8x192xf32> to vector<8x128xf32>
    %660 = arith.addf %658, %659 : vector<8x128xf32>
    %661 = arith.negf %660 : vector<8x128xf32>
    %662 = math.exp %661 : vector<8x128xf32>
    %cst_241 = arith.constant 1.000000e+00 : f32
    %663 = vector.broadcast %cst_241 : f32 to vector<8x128xf32>
    %664 = arith.addf %663, %662 : vector<8x128xf32>
    %665 = arith.divf %663, %664 : vector<8x128xf32>
    %666 = vector.extract_strided_slice %665 {offsets = [0, 0], sizes = [8, 64], strides = [1, 1]} : vector<8x128xf32> to vector<8x64xf32>
    %667 = vector.extract_strided_slice %665 {offsets = [0, 64], sizes = [8, 64], strides = [1, 1]} : vector<8x128xf32> to vector<8x64xf32>
    %668 = vector.extract_strided_slice %656 {offsets = [0, 128], sizes = [8, 64], strides = [1, 1]} : vector<8x192xf32> to vector<8x64xf32>
    %669 = vector.extract_strided_slice %657 {offsets = [0, 128], sizes = [8, 64], strides = [1, 1]} : vector<8x192xf32> to vector<8x64xf32>
    %670 = arith.addf %669, %486 : vector<8x64xf32>
    %671 = arith.mulf %666, %670 : vector<8x64xf32>
    %672 = arith.addf %668, %671 : vector<8x64xf32>
    %673 = math.tanh %672 : vector<8x64xf32>
    %cst_242 = arith.constant 1.000000e+00 : f32
    %674 = vector.broadcast %cst_242 : f32 to vector<8x64xf32>
    %675 = arith.subf %674, %667 : vector<8x64xf32>
    %676 = arith.mulf %675, %673 : vector<8x64xf32>
    %677 = arith.mulf %667, %654 : vector<8x64xf32>
    %678 = arith.addf %676, %677 : vector<8x64xf32>
    %c0_243 = arith.constant 0 : index
    %c0_244 = arith.constant 0 : index
    %c0_245 = arith.constant 0 : index
    %679 = vector.load %arg19[%c0_243, %c0_244, %c0_245] : memref<8x8x64xf32, #tpu.memory_space<vmem>>, vector<1x8x64xf32>
    %680 = vector.shape_cast %679 : vector<1x8x64xf32> to vector<8x64xf32>
    %c0_246 = arith.constant 0 : index
    %c0_247 = arith.constant 0 : index
    %c0_248 = arith.constant 0 : index
    %681 = vector.load %arg6[%c0_246, %c0_247, %c0_248] : memref<2x128x192xf32, #tpu.memory_space<vmem>>, vector<1x64x192xf32>
    %682 = vector.shape_cast %681 : vector<1x64x192xf32> to vector<64x192xf32>
    %cst_249 = arith.constant dense<0.000000e+00> : vector<8x192xf32>
    %683 = tpu.matmul %680, %682, %cst_249 {dimension_numbers = #tpu.dot_dimension_numbers<[1], [0], [0], [1], [0, 0, 1, 1], [], []>} : vector<8x64xf32>, vector<64x192xf32>, vector<8x192xf32> -> vector<8x192xf32>
    %c0_250 = arith.constant 0 : index
    %c0_251 = arith.constant 0 : index
    %c0_252 = arith.constant 0 : index
    %684 = vector.load %arg20[%c0_250, %c0_251, %c0_252] : memref<8x8x64xf32, #tpu.memory_space<vmem>>, vector<1x8x64xf32>
    %685 = vector.shape_cast %684 : vector<1x8x64xf32> to vector<8x64xf32>
    %c0_253 = arith.constant 0 : index
    %c64_254 = arith.constant 64 : index
    %c0_255 = arith.constant 0 : index
    %686 = vector.load %arg6[%c0_253, %c64_254, %c0_255] : memref<2x128x192xf32, #tpu.memory_space<vmem>>, vector<1x64x192xf32>
    %687 = vector.shape_cast %686 : vector<1x64x192xf32> to vector<64x192xf32>
    %cst_256 = arith.constant dense<0.000000e+00> : vector<8x192xf32>
    %688 = tpu.matmul %685, %687, %cst_256 {dimension_numbers = #tpu.dot_dimension_numbers<[1], [0], [0], [1], [0, 0, 1, 1], [], []>} : vector<8x64xf32>, vector<64x192xf32>, vector<8x192xf32> -> vector<8x192xf32>
    %689 = arith.addf %683, %688 : vector<8x192xf32>
    %c0_257 = arith.constant 0 : index
    %c0_258 = arith.constant 0 : index
    %c0_259 = arith.constant 0 : index
    %690 = vector.load %arg7[%c0_257, %c0_258, %c0_259] : memref<2x1x192xf32, #tpu.memory_space<vmem>>, vector<1x1x192xf32>
    %691 = vector.shape_cast %690 : vector<1x1x192xf32> to vector<1x192xf32>
    %692 = vector.broadcast %691 : vector<1x192xf32> to vector<8x192xf32>
    %693 = arith.addf %689, %692 : vector<8x192xf32>
    %c0_260 = arith.constant 0 : index
    %c0_261 = arith.constant 0 : index
    %c0_262 = arith.constant 0 : index
    %694 = vector.load %arg9[%c0_260, %c0_261, %c0_262] : memref<2x1x64xf32, #tpu.memory_space<vmem>>, vector<1x1x64xf32>
    %695 = vector.shape_cast %694 : vector<1x1x64xf32> to vector<1x64xf32>
    %696 = vector.shape_cast %695 : vector<1x64xf32> to vector<1x64xf32>
    %697 = vector.broadcast %696 : vector<1x64xf32> to vector<8x64xf32>
    %cst_263 = arith.constant 0.000000e+00 : f32
    %698 = vector.broadcast %cst_263 : f32 to vector<8x192xf32>
    %699 = vector.extract_strided_slice %693 {offsets = [0, 0], sizes = [8, 128], strides = [1, 1]} : vector<8x192xf32> to vector<8x128xf32>
    %700 = vector.extract_strided_slice %698 {offsets = [0, 0], sizes = [8, 128], strides = [1, 1]} : vector<8x192xf32> to vector<8x128xf32>
    %701 = arith.addf %699, %700 : vector<8x128xf32>
    %702 = arith.negf %701 : vector<8x128xf32>
    %703 = math.exp %702 : vector<8x128xf32>
    %cst_264 = arith.constant 1.000000e+00 : f32
    %704 = vector.broadcast %cst_264 : f32 to vector<8x128xf32>
    %705 = arith.addf %704, %703 : vector<8x128xf32>
    %706 = arith.divf %704, %705 : vector<8x128xf32>
    %707 = vector.extract_strided_slice %706 {offsets = [0, 0], sizes = [8, 64], strides = [1, 1]} : vector<8x128xf32> to vector<8x64xf32>
    %708 = vector.extract_strided_slice %706 {offsets = [0, 64], sizes = [8, 64], strides = [1, 1]} : vector<8x128xf32> to vector<8x64xf32>
    %709 = vector.extract_strided_slice %693 {offsets = [0, 128], sizes = [8, 64], strides = [1, 1]} : vector<8x192xf32> to vector<8x64xf32>
    %710 = vector.extract_strided_slice %698 {offsets = [0, 128], sizes = [8, 64], strides = [1, 1]} : vector<8x192xf32> to vector<8x64xf32>
    %711 = arith.addf %710, %697 : vector<8x64xf32>
    %712 = arith.mulf %707, %711 : vector<8x64xf32>
    %713 = arith.addf %709, %712 : vector<8x64xf32>
    %714 = math.tanh %713 : vector<8x64xf32>
    %cst_265 = arith.constant 1.000000e+00 : f32
    %715 = vector.broadcast %cst_265 : f32 to vector<8x64xf32>
    %716 = arith.subf %715, %708 : vector<8x64xf32>
    %717 = arith.mulf %716, %714 : vector<8x64xf32>
    %718 = arith.mulf %708, %19 : vector<8x64xf32>
    %719 = arith.addf %717, %718 : vector<8x64xf32>
    %c0_266 = arith.constant 0 : index
    %c0_267 = arith.constant 0 : index
    %720 = vector.load %arg10[%c0_266, %c0_267] : memref<128x128xf32, #tpu.memory_space<vmem>>, vector<64x128xf32>
    %cst_268 = arith.constant dense<0.000000e+00> : vector<8x128xf32>
    %721 = tpu.matmul %719, %720, %cst_268 {dimension_numbers = #tpu.dot_dimension_numbers<[1], [0], [0], [1], [0, 0, 1, 1], [], []>} : vector<8x64xf32>, vector<64x128xf32>, vector<8x128xf32> -> vector<8x128xf32>
    %c64_269 = arith.constant 64 : index
    %c0_270 = arith.constant 0 : index
    %722 = vector.load %arg10[%c64_269, %c0_270] : memref<128x128xf32, #tpu.memory_space<vmem>>, vector<64x128xf32>
    %cst_271 = arith.constant dense<0.000000e+00> : vector<8x128xf32>
    %723 = tpu.matmul %678, %722, %cst_271 {dimension_numbers = #tpu.dot_dimension_numbers<[1], [0], [0], [1], [0, 0, 1, 1], [], []>} : vector<8x64xf32>, vector<64x128xf32>, vector<8x128xf32> -> vector<8x128xf32>
    %724 = arith.addf %721, %723 : vector<8x128xf32>
    %c0_272 = arith.constant 0 : index
    %c0_273 = arith.constant 0 : index
    %725 = vector.load %arg11[%c0_272, %c0_273] : memref<1x128xf32, #tpu.memory_space<vmem>>, vector<1x128xf32>
    %726 = vector.broadcast %725 : vector<1x128xf32> to vector<8x128xf32>
    %727 = arith.addf %724, %726 : vector<8x128xf32>
    %cst_274 = arith.constant 0.000000e+00 : f32
    %728 = vector.broadcast %cst_274 : f32 to vector<8x128xf32>
    %729 = arith.maximumf %727, %728 : vector<8x128xf32>
    %c0_275 = arith.constant 0 : index
    %c0_276 = arith.constant 0 : index
    %730 = vector.load %arg12[%c0_275, %c0_276] : memref<128x256xf32, #tpu.memory_space<vmem>>, vector<128x256xf32>
    %cst_277 = arith.constant dense<0.000000e+00> : vector<8x256xf32>
    %731 = tpu.matmul %729, %730, %cst_277 {dimension_numbers = #tpu.dot_dimension_numbers<[1], [0], [0], [1], [0, 0, 1, 1], [], []>} : vector<8x128xf32>, vector<128x256xf32>, vector<8x256xf32> -> vector<8x256xf32>
    %c0_278 = arith.constant 0 : index
    %c0_279 = arith.constant 0 : index
    %732 = vector.load %arg13[%c0_278, %c0_279] : memref<1x256xf32, #tpu.memory_space<vmem>>, vector<1x256xf32>
    %733 = vector.broadcast %732 : vector<1x256xf32> to vector<8x256xf32>
    %734 = arith.addf %731, %733 : vector<8x256xf32>
    %cst_280 = arith.constant 0.000000e+00 : f32
    %735 = vector.broadcast %cst_280 : f32 to vector<8x256xf32>
    %736 = arith.maximumf %734, %735 : vector<8x256xf32>
    %c0_281 = arith.constant 0 : index
    %c0_282 = arith.constant 0 : index
    %737 = vector.load %arg14[%c0_281, %c0_282] : memref<256x128xf32, #tpu.memory_space<vmem>>, vector<256x128xf32>
    %cst_283 = arith.constant dense<0.000000e+00> : vector<8x128xf32>
    %738 = tpu.matmul %736, %737, %cst_283 {dimension_numbers = #tpu.dot_dimension_numbers<[1], [0], [0], [1], [0, 0, 1, 1], [], []>} : vector<8x256xf32>, vector<256x128xf32>, vector<8x128xf32> -> vector<8x128xf32>
    %c0_284 = arith.constant 0 : index
    %c0_285 = arith.constant 0 : index
    %739 = vector.load %arg15[%c0_284, %c0_285] : memref<1x128xf32, #tpu.memory_space<vmem>>, vector<1x128xf32>
    %740 = vector.broadcast %739 : vector<1x128xf32> to vector<8x128xf32>
    %741 = arith.addf %738, %740 : vector<8x128xf32>
    %c0_286 = arith.constant 0 : index
    %c0_287 = arith.constant 0 : index
    %742 = vector.load %arg16[%c0_286, %c0_287] : memref<8x128xf32, #tpu.memory_space<vmem>>, vector<8x128xf32>
    tpu.vector_store %arg16[%c0_286, %c0_287], %741 {strides = array<i32>} : memref<8x128xf32, #tpu.memory_space<vmem>>, vector<8x128xf32>,
    return
  }
  func.func @transform_0(%arg0: i32) -> (i32, i32) {
    %c0_i32 = arith.constant 0 : i32
    %c0_i32_0 = arith.constant 0 : i32
    %c0_i32_1 = arith.constant 0 : i32
    return %c0_i32, %c0_i32_0 : i32, i32
  }
  func.func @transform_1(%arg0: i32) -> (i32, i32, i32) {
    %c0_i32 = arith.constant 0 : i32
    %c0_i32_0 = arith.constant 0 : i32
    %c0_i32_1 = arith.constant 0 : i32
    %c0_i32_2 = arith.constant 0 : i32
    return %c0_i32, %c0_i32_0, %c0_i32_1 : i32, i32, i32
  }
  func.func @transform_2(%arg0: i32) -> (i32, i32, i32) {
    %c0_i32 = arith.constant 0 : i32
    %c0_i32_0 = arith.constant 0 : i32
    %c0_i32_1 = arith.constant 0 : i32
    %c0_i32_2 = arith.constant 0 : i32
    return %c0_i32, %c0_i32_0, %c0_i32_1 : i32, i32, i32
  }
  func.func @transform_3(%arg0: i32) -> (i32, i32, i32) {
    %c0_i32 = arith.constant 0 : i32
    %c0_i32_0 = arith.constant 0 : i32
    %c0_i32_1 = arith.constant 0 : i32
    %c0_i32_2 = arith.constant 0 : i32
    return %c0_i32, %c0_i32_0, %c0_i32_1 : i32, i32, i32
  }
  func.func @transform_4(%arg0: i32) -> (i32, i32, i32) {
    %c0_i32 = arith.constant 0 : i32
    %c0_i32_0 = arith.constant 0 : i32
    %c0_i32_1 = arith.constant 0 : i32
    %c0_i32_2 = arith.constant 0 : i32
    return %c0_i32, %c0_i32_0, %c0_i32_1 : i32, i32, i32
  }
  func.func @transform_5(%arg0: i32) -> (i32, i32, i32) {
    %c0_i32 = arith.constant 0 : i32
    %c0_i32_0 = arith.constant 0 : i32
    %c0_i32_1 = arith.constant 0 : i32
    %c0_i32_2 = arith.constant 0 : i32
    return %c0_i32, %c0_i32_0, %c0_i32_1 : i32, i32, i32
  }
  func.func @transform_6(%arg0: i32) -> (i32, i32, i32) {
    %c0_i32 = arith.constant 0 : i32
    %c0_i32_0 = arith.constant 0 : i32
    %c0_i32_1 = arith.constant 0 : i32
    %c0_i32_2 = arith.constant 0 : i32
    return %c0_i32, %c0_i32_0, %c0_i32_1 : i32, i32, i32
  }
  func.func @transform_7(%arg0: i32) -> (i32, i32, i32) {
    %c0_i32 = arith.constant 0 : i32
    %c0_i32_0 = arith.constant 0 : i32
    %c0_i32_1 = arith.constant 0 : i32
    %c0_i32_2 = arith.constant 0 : i32
    return %c0_i32, %c0_i32_0, %c0_i32_1 : i32, i32, i32
  }
  func.func @transform_8(%arg0: i32) -> (i32, i32, i32) {
    %c0_i32 = arith.constant 0 : i32
    %c0_i32_0 = arith.constant 0 : i32
    %c0_i32_1 = arith.constant 0 : i32
    %c0_i32_2 = arith.constant 0 : i32
    return %c0_i32, %c0_i32_0, %c0_i32_1 : i32, i32, i32
  }
  func.func @transform_9(%arg0: i32) -> (i32, i32) {
    %c0_i32 = arith.constant 0 : i32
    %c0_i32_0 = arith.constant 0 : i32
    %c0_i32_1 = arith.constant 0 : i32
    return %c0_i32, %c0_i32_0 : i32, i32
  }
  func.func @transform_10(%arg0: i32) -> (i32, i32) {
    %c0_i32 = arith.constant 0 : i32
    %c0_i32_0 = arith.constant 0 : i32
    %c0_i32_1 = arith.constant 0 : i32
    return %c0_i32, %c0_i32_0 : i32, i32
  }
  func.func @transform_11(%arg0: i32) -> (i32, i32) {
    %c0_i32 = arith.constant 0 : i32
    %c0_i32_0 = arith.constant 0 : i32
    %c0_i32_1 = arith.constant 0 : i32
    return %c0_i32, %c0_i32_0 : i32, i32
  }
  func.func @transform_12(%arg0: i32) -> (i32, i32) {
    %c0_i32 = arith.constant 0 : i32
    %c0_i32_0 = arith.constant 0 : i32
    %c0_i32_1 = arith.constant 0 : i32
    return %c0_i32, %c0_i32_0 : i32, i32
  }
  func.func @transform_13(%arg0: i32) -> (i32, i32) {
    %c0_i32 = arith.constant 0 : i32
    %c0_i32_0 = arith.constant 0 : i32
    %c0_i32_1 = arith.constant 0 : i32
    return %c0_i32, %c0_i32_0 : i32, i32
  }
  func.func @transform_14(%arg0: i32) -> (i32, i32) {
    %c0_i32 = arith.constant 0 : i32
    %c0_i32_0 = arith.constant 0 : i32
    %c0_i32_1 = arith.constant 0 : i32
    return %c0_i32, %c0_i32_0 : i32, i32
  }
  func.func @transform_15(%arg0: i32) -> (i32, i32) {
    %c0_i32 = arith.constant 0 : i32
    %c0_i32_0 = arith.constant 0 : i32
    %c0_i32_1 = arith.constant 0 : i32
    return %c0_i32, %c0_i32_0 : i32, i32
  }
}

</mosaic_0001>

<llo_original>
// kernel: rnnet_forward.1
$region0: #{rnnet_forward.1}
  #allocation0 [shape = 'u32[]', space=smem, size = 0x4, offset = 0x4, fixed_abs, tag = 'smem constant byte address 0x4 - core index']
  #allocation1 [shape = 'u32[144,128]{1,0:T(1,128)}', space=vmem, size = 0x12000, scoped, tag = 'internal scratch']
  #allocation2 [shape = 'f32[8,8,192]{2,1,0:T(8,128)}', space=vmem, size = 0x10000, scoped, tag = 'scratch operand']
  #allocation3 [shape = 'f32[8,8,192]{2,1,0:T(8,128)}', space=vmem, size = 0x10000, scoped, tag = 'scratch operand']
  #allocation4 [shape = 'f32[8,8,64]{2,1,0:T(8,128)}', space=vmem, size = 0x8000, scoped, tag = 'scratch operand']
  #allocation5 [shape = 'f32[8,8,64]{2,1,0:T(8,128)}', space=vmem, size = 0x8000, scoped, tag = 'scratch operand']
  #allocation6 [shape = 'f32[8,8,192]{2,1,0:T(8,128)}', space=vmem, size = 0x10000, scoped, tag = 'scratch operand']
  %s0 = inlined_call_operand.vmem [shape: f32[64,7], index: 0, kind: input, shape index: {}]
  %s1 = inlined_call_operand.vmem [shape: f32[2,7,192], index: 1, kind: input, shape index: {}]
  %s2 = inlined_call_operand.vmem [shape: f32[2,1,192], index: 2, kind: input, shape index: {}]
  %s3 = inlined_call_operand.vmem [shape: f32[2,64,192], index: 3, kind: input, shape index: {}]
  %s4 = inlined_call_operand.vmem [shape: f32[2,1,64], index: 4, kind: input, shape index: {}]
  %s5 = inlined_call_operand.vmem [shape: f32[2,128,192], index: 5, kind: input, shape index: {}]
  %s6 = inlined_call_operand.vmem [shape: f32[2,1,192], index: 6, kind: input, shape index: {}]
  %s7 = inlined_call_operand.vmem [shape: f32[2,64,192], index: 7, kind: input, shape index: {}]
  %s8 = inlined_call_operand.vmem [shape: f32[2,1,64], index: 8, kind: input, shape index: {}]
  %s9 = inlined_call_operand.vmem [shape: f32[128,128], index: 9, kind: input, shape index: {}]
  %s10 = inlined_call_operand.vmem [shape: f32[1,128], index: 10, kind: input, shape index: {}]
  %s11 = inlined_call_operand.vmem [shape: f32[128,256], index: 11, kind: input, shape index: {}]
  %s12 = inlined_call_operand.vmem [shape: f32[1,256], index: 12, kind: input, shape index: {}]
  %s13 = inlined_call_operand.vmem [shape: f32[256,128], index: 13, kind: input, shape index: {}]
  %s14 = inlined_call_operand.vmem [shape: f32[1,128], index: 14, kind: input, shape index: {}]
  %s15 = inlined_call_operand.vmem [shape: f32[8,128], index: 15, kind: output, shape index: {}]
  %s16 = sld [smem:[#allocation0]]
  $region70: #{rnnet_forward.1} parent=0
    _
  %s18 = ssub.s32 1, %s16
  %s19 = scalar_select 0, %s18, %s16
  // Predicated region
  $region2: #{rnnet_forward.1} parent=0 // pred_check
    _
  $region3: #{rnnet_forward.1} parent=0 // pred_check_branch
    %21 = sbr.rel (0) target = $region5
  $region4: #{rnnet_forward.1} parent=0 // pred_region
    _
  $region5: #{rnnet_forward.1} parent=0 // pred_fallthru
    _
  // Predicated region
  $region6: #{rnnet_forward.1} parent=0 // pred_check
    _
  $region7: #{rnnet_forward.1} parent=0 // pred_check_branch
    %23 = sbr.rel (0) target = $region9
  $region8: #{rnnet_forward.1} parent=0 // pred_region
    _
  $region9: #{rnnet_forward.1} parent=0 // pred_fallthru
    _
  // Predicated region
  $region10: #{rnnet_forward.1} parent=0 // pred_check
    _
  $region11: #{rnnet_forward.1} parent=0 // pred_check_branch
    %25 = sbr.rel (0) target = $region13
  $region12: #{rnnet_forward.1} parent=0 // pred_region
    _
  $region13: #{rnnet_forward.1} parent=0 // pred_fallthru
    _
  // Predicated region
  $region14: #{rnnet_forward.1} parent=0 // pred_check
    _
  $region15: #{rnnet_forward.1} parent=0 // pred_check_branch
    %27 = sbr.rel (0) target = $region17
  $region16: #{rnnet_forward.1} parent=0 // pred_region
    _
  $region17: #{rnnet_forward.1} parent=0 // pred_fallthru
    _
  // Predicated region
  $region18: #{rnnet_forward.1} parent=0 // pred_check
    _
  $region19: #{rnnet_forward.1} parent=0 // pred_check_branch
    %29 = sbr.rel (0) target = $region21
  $region20: #{rnnet_forward.1} parent=0 // pred_region
    _
  $region21: #{rnnet_forward.1} parent=0 // pred_fallthru
    _
  // Predicated region
  $region22: #{rnnet_forward.1} parent=0 // pred_check
    _
  $region23: #{rnnet_forward.1} parent=0 // pred_check_branch
    %31 = sbr.rel (0) target = $region25
  $region24: #{rnnet_forward.1} parent=0 // pred_region
    _
  $region25: #{rnnet_forward.1} parent=0 // pred_fallthru
    _
  // Predicated region
  $region26: #{rnnet_forward.1} parent=0 // pred_check
    _
  $region27: #{rnnet_forward.1} parent=0 // pred_check_branch
    %33 = sbr.rel (0) target = $region29
  $region28: #{rnnet_forward.1} parent=0 // pred_region
    _
  $region29: #{rnnet_forward.1} parent=0 // pred_fallthru
    _
  // Predicated region
  $region30: #{rnnet_forward.1} parent=0 // pred_check
    _
  $region31: #{rnnet_forward.1} parent=0 // pred_check_branch
    %35 = sbr.rel (0) target = $region33
  $region32: #{rnnet_forward.1} parent=0 // pred_region
    _
  $region33: #{rnnet_forward.1} parent=0 // pred_fallthru
    _
  // Predicated region
  $region34: #{rnnet_forward.1} parent=0 // pred_check
    _
  $region35: #{rnnet_forward.1} parent=0 // pred_check_branch
    %37 = sbr.rel (0) target = $region37
  $region36: #{rnnet_forward.1} parent=0 // pred_region
    _
  $region37: #{rnnet_forward.1} parent=0 // pred_fallthru
    _
  // Predicated region
  $region38: #{rnnet_forward.1} parent=0 // pred_check
    _
  $region39: #{rnnet_forward.1} parent=0 // pred_check_branch
    %39 = sbr.rel (0) target = $region41
  $region40: #{rnnet_forward.1} parent=0 // pred_region
    _
  $region41: #{rnnet_forward.1} parent=0 // pred_fallthru
    _
  // Predicated region
  $region42: #{rnnet_forward.1} parent=0 // pred_check
    _
  $region43: #{rnnet_forward.1} parent=0 // pred_check_branch
    %41 = sbr.rel (0) target = $region45
  $region44: #{rnnet_forward.1} parent=0 // pred_region
    _
  $region45: #{rnnet_forward.1} parent=0 // pred_fallthru
    _
  // Predicated region
  $region46: #{rnnet_forward.1} parent=0 // pred_check
    _
  $region47: #{rnnet_forward.1} parent=0 // pred_check_branch
    %43 = sbr.rel (0) target = $region49
  $region48: #{rnnet_forward.1} parent=0 // pred_region
    _
  $region49: #{rnnet_forward.1} parent=0 // pred_fallthru
    _
  // Predicated region
  $region50: #{rnnet_forward.1} parent=0 // pred_check
    _
  $region51: #{rnnet_forward.1} parent=0 // pred_check_branch
    %45 = sbr.rel (0) target = $region53
  $region52: #{rnnet_forward.1} parent=0 // pred_region
    _
  $region53: #{rnnet_forward.1} parent=0 // pred_fallthru
    _
  // Predicated region
  $region54: #{rnnet_forward.1} parent=0 // pred_check
    _
  $region55: #{rnnet_forward.1} parent=0 // pred_check_branch
    %47 = sbr.rel (0) target = $region57
  $region56: #{rnnet_forward.1} parent=0 // pred_region
    _
  $region57: #{rnnet_forward.1} parent=0 // pred_fallthru
    _
  // Predicated region
  $region58: #{rnnet_forward.1} parent=0 // pred_check
    _
  $region59: #{rnnet_forward.1} parent=0 // pred_check_branch
    %49 = sbr.rel (0) target = $region61
  $region60: #{rnnet_forward.1} parent=0 // pred_region
    _
  $region61: #{rnnet_forward.1} parent=0 // pred_fallthru
    _
  %v50 = vld [vmem:[%s0] sm:$0xff]
  %v51 = vld [vmem:[%s0 + $0x8] sm:$0xff]
  %v52 = vld [vmem:[%s0 + $0x10] sm:$0xff]
  %v53 = vld [vmem:[%s0 + $0x18] sm:$0xff]
  %v54 = vld [vmem:[%s0 + $0x20] sm:$0xff]
  %v55 = vld [vmem:[%s0 + $0x28] sm:$0xff]
  %v56 = vld [vmem:[%s0 + $0x30] sm:$0xff]
  %v57 = vld [vmem:[%s0 + $0x38] sm:$0xff]
  %v58 = vld [vmem:[%s1] sm:$0x7f]
  %v59 = vld [vmem:[%s1 + $0x8] sm:$0x7f]
  %v60 = vld [vmem:[%s2] sm:$0x3]
  %v62 = vlaneseq
  %v63 = vshrl.u32 %v62, 7
  %v64 = vsub.s32 0, %v63
  %v65 = vrot.slane %v60, %v64
  %v66 = vlaneseq
  %v67 = vshrl.u32 %v66, 7
  %v68 = vsub.s32 1, %v67
  %v69 = vrot.slane %v60, %v68
  %vm72 = vcmask 56320
  %v74 = vsel %vm72, %v50, 0
  %v77 = vsel %vm72, %v51, 0
  %v80 = vsel %vm72, %v52, 0
  %v83 = vsel %vm72, %v53, 0
  %v86 = vsel %vm72, %v54, 0
  %v89 = vsel %vm72, %v55, 0
  %v92 = vsel %vm72, %v56, 0
  %v95 = vsel %vm72, %v57, 0
  %vm97 = vcmask 1046528
  %v99 = vsel %vm97, %v58, 0
  %v102 = vsel %vm97, %v59, 0
  %104 = vmatprep.subr.mxu0 %v102
  %105 = vmatpush1.msra.mxu0 %v99
  %106 = vmatprep.subr.mxu0 0.0
  %107 = vmatpush1.msra.mxu0 0.0
  %108 = vmatprep.subr.mxu0 0.0
  %109 = vmatpush1.msra.mxu0 0.0
  %110 = vmatprep.subr.mxu0 0.0
  %111 = vmatpush1.msra.mxu0 0.0
  %112 = vmatprep.subr.mxu0 0.0
  %113 = vmatpush1.msra.mxu0 0.0
  %114 = vmatprep.subr.mxu0 0.0
  %115 = vmatpush1.msra.mxu0 0.0
  %116 = vmatprep.subr.mxu0 0.0
  %117 = vmatpush1.msra.mxu0 0.0
  %118 = vmatprep.subr.mxu0 0.0
  %119 = vmatpush1.msra.mxu0 0.0
  %120 = vmatprep.subr.mxu0 0.0
  %121 = vmatpush1.msra.mxu0 0.0
  %122 = vmatprep.subr.mxu0 0.0
  %123 = vmatpush1.msra.mxu0 0.0
  %124 = vmatprep.subr.mxu0 0.0
  %125 = vmatpush1.msra.mxu0 0.0
  %126 = vmatprep.subr.mxu0 0.0
  %127 = vmatpush1.msra.mxu0 0.0
  %128 = vmatprep.subr.mxu0 0.0
  %129 = vmatpush1.msra.mxu0 0.0
  %130 = vmatprep.subr.mxu0 0.0
  %131 = vmatpush1.msra.mxu0 0.0
  %132 = vmatprep.subr.mxu0 0.0
  %133 = vmatpush1.msra.mxu0 0.0
  %134 = vmatprep.subr.mxu0 0.0
  %135 = vmatpush1.msra.mxu0 0.0
  %136 = vmatprep.subr.mxu0 0.0
  %137 = vmatpush1.msra.mxu0 0.0
  %138 = vmatprep.subr.mxu0 0.0
  %139 = vmatpush1.msra.mxu0 0.0
  %140 = vmatprep.subr.mxu0 0.0
  %141 = vmatpush1.msra.mxu0 0.0
  %142 = vmatprep.subr.mxu0 0.0
  %143 = vmatpush1.msra.mxu0 0.0
  %144 = vmatprep.subr.mxu0 0.0
  %145 = vmatpush1.msra.mxu0 0.0
  %146 = vmatprep.subr.mxu0 0.0
  %147 = vmatpush1.msra.mxu0 0.0
  %148 = vmatprep.subr.mxu0 0.0
  %149 = vmatpush1.msra.mxu0 0.0
  %150 = vmatprep.subr.mxu0 0.0
  %151 = vmatpush1.msra.mxu0 0.0
  %152 = vmatprep.subr.mxu0 0.0
  %153 = vmatpush1.msra.mxu0 0.0
  %154 = vmatprep.subr.mxu0 0.0
  %155 = vmatpush1.msra.mxu0 0.0
  %156 = vmatprep.subr.mxu0 0.0
  %157 = vmatpush1.msra.mxu0 0.0
  %158 = vmatprep.subr.mxu0 0.0
  %159 = vmatpush1.msra.mxu0 0.0
  %160 = vmatprep.subr.mxu0 0.0
  %161 = vmatpush1.msra.mxu0 0.0
  %162 = vmatprep.subr.mxu0 0.0
  %163 = vmatpush1.msra.mxu0 0.0
  %164 = vmatprep.subr.mxu0 0.0
  %165 = vmatpush1.msra.mxu0 0.0
  %166 = vmatprep.subr.mxu0 0.0
  %167 = vmatpush1.msra.mxu0 0.0
  %168 = vmatprep.mubr.f32.mxu0 0.0
  %169 = vmatmul.mubr.f32.gmra.mrb[0].mxu0 %v74
  %v170 = vpop.f32.mrb[0].mxu0
  %v171 = vadd.f32 %v65, %v170
  %v172 = vpop.f32.mrb[0].mxu0
  %v173 = vadd.f32 %v69, %v172
  %174 = vmatprep.mubr.f32.mxu0 0.0
  %175 = vmatmul.mubr.f32.gmra.mrb[0].mxu0 %v77
  %v176 = vpop.f32.mrb[0].mxu0
  %v177 = vadd.f32 %v65, %v176
  %v178 = vpop.f32.mrb[0].mxu0
  %v179 = vadd.f32 %v69, %v178
  %180 = vmatprep.mubr.f32.mxu0 0.0
  %181 = vmatmul.mubr.f32.gmra.mrb[0].mxu0 %v80
  %v182 = vpop.f32.mrb[0].mxu0
  %v183 = vadd.f32 %v65, %v182
  %v184 = vpop.f32.mrb[0].mxu0
  %v185 = vadd.f32 %v69, %v184
  %186 = vmatprep.mubr.f32.mxu0 0.0
  %187 = vmatmul.mubr.f32.gmra.mrb[0].mxu0 %v83
  %v188 = vpop.f32.mrb[0].mxu0
  %v189 = vadd.f32 %v65, %v188
  %v190 = vpop.f32.mrb[0].mxu0
  %v191 = vadd.f32 %v69, %v190
  %192 = vmatprep.mubr.f32.mxu0 0.0
  %193 = vmatmul.mubr.f32.gmra.mrb[0].mxu0 %v86
  %v194 = vpop.f32.mrb[0].mxu0
  %v195 = vadd.f32 %v65, %v194
  %v196 = vpop.f32.mrb[0].mxu0
  %v197 = vadd.f32 %v69, %v196
  %198 = vmatprep.mubr.f32.mxu0 0.0
  %199 = vmatmul.mubr.f32.gmra.mrb[0].mxu0 %v89
  %v200 = vpop.f32.mrb[0].mxu0
  %v201 = vadd.f32 %v65, %v200
  %v202 = vpop.f32.mrb[0].mxu0
  %v203 = vadd.f32 %v69, %v202
  %204 = vmatprep.mubr.f32.mxu0 0.0
  %205 = vmatmul.mubr.f32.gmra.mrb[0].mxu0 %v92
  %v206 = vpop.f32.mrb[0].mxu0
  %v207 = vadd.f32 %v65, %v206
  %v208 = vpop.f32.mrb[0].mxu0
  %v209 = vadd.f32 %v69, %v208
  %210 = vmatprep.mubr.f32.mxu0 0.0
  %211 = vmatmul.mubr.f32.gmra.mrb[0].mxu0 %v95
  %v212 = vpop.f32.mrb[0].mxu0
  %v213 = vadd.f32 %v65, %v212
  %v214 = vpop.f32.mrb[0].mxu0
  %v215 = vadd.f32 %v69, %v214
  %216 = vdwg.mxu0
  %217 = vst [vmem:[#allocation2] sm:$0xff] %v171
  %vm218 = vcmask 523264
  %219 = vst.msk [vmem:[#allocation2 + $0x8] sm:$0xff] %vm218, %v173
  %220 = vst [vmem:[#allocation2 + $0x10] sm:$0xff] %v177
  %221 = vst.msk [vmem:[#allocation2 + $0x18] sm:$0xff] %vm218, %v179
  %222 = vst [vmem:[#allocation2 + $0x20] sm:$0xff] %v183
  %223 = vst.msk [vmem:[#allocation2 + $0x28] sm:$0xff] %vm218, %v185
  %224 = vst [vmem:[#allocation2 + $0x30] sm:$0xff] %v189
  %225 = vst.msk [vmem:[#allocation2 + $0x38] sm:$0xff] %vm218, %v191
  %226 = vst [vmem:[#allocation2 + $0x40] sm:$0xff] %v195
  %227 = vst.msk [vmem:[#allocation2 + $0x48] sm:$0xff] %vm218, %v197
  %228 = vst [vmem:[#allocation2 + $0x50] sm:$0xff] %v201
  %229 = vst.msk [vmem:[#allocation2 + $0x58] sm:$0xff] %vm218, %v203
  %230 = vst [vmem:[#allocation2 + $0x60] sm:$0xff] %v207
  %231 = vst.msk [vmem:[#allocation2 + $0x68] sm:$0xff] %vm218, %v209
  %232 = vst [vmem:[#allocation2 + $0x70] sm:$0xff] %v213
  %233 = vst.msk [vmem:[#allocation2 + $0x78] sm:$0xff] %vm218, %v215
  %s234 = scalar_lea.vmem %s1, 16
  %v235 = vld [vmem:[%s234] sm:$0x7f]
  %v236 = vld [vmem:[%s234 + $0x8] sm:$0x7f]
  %s237 = scalar_lea.vmem %s2, 2
  %v238 = vld [vmem:[%s237] sm:$0x3]
  %v240 = vlaneseq
  %v241 = vshrl.u32 %v240, 7
  %v242 = vsub.s32 0, %v241
  %v243 = vrot.slane %v238, %v242
  %v244 = vlaneseq
  %v245 = vshrl.u32 %v244, 7
  %v246 = vsub.s32 1, %v245
  %v247 = vrot.slane %v238, %v246
  %v251 = vsel %vm97, %v235, 0
  %v254 = vsel %vm97, %v236, 0
  %256 = vmatprep.subr.mxu0 %v254
  %257 = vmatpush1.msra.mxu0 %v251
  %258 = vmatprep.subr.mxu0 0.0
  %259 = vmatpush1.msra.mxu0 0.0
  %260 = vmatprep.subr.mxu0 0.0
  %261 = vmatpush1.msra.mxu0 0.0
  %262 = vmatprep.subr.mxu0 0.0
  %263 = vmatpush1.msra.mxu0 0.0
  %264 = vmatprep.subr.mxu0 0.0
  %265 = vmatpush1.msra.mxu0 0.0
  %266 = vmatprep.subr.mxu0 0.0
  %267 = vmatpush1.msra.mxu0 0.0
  %268 = vmatprep.subr.mxu0 0.0
  %269 = vmatpush1.msra.mxu0 0.0
  %270 = vmatprep.subr.mxu0 0.0
  %271 = vmatpush1.msra.mxu0 0.0
  %272 = vmatprep.subr.mxu0 0.0
  %273 = vmatpush1.msra.mxu0 0.0
  %274 = vmatprep.subr.mxu0 0.0
  %275 = vmatpush1.msra.mxu0 0.0
  %276 = vmatprep.subr.mxu0 0.0
  %277 = vmatpush1.msra.mxu0 0.0
  %278 = vmatprep.subr.mxu0 0.0
  %279 = vmatpush1.msra.mxu0 0.0
  %280 = vmatprep.subr.mxu0 0.0
  %281 = vmatpush1.msra.mxu0 0.0
  %282 = vmatprep.subr.mxu0 0.0
  %283 = vmatpush1.msra.mxu0 0.0
  %284 = vmatprep.subr.mxu0 0.0
  %285 = vmatpush1.msra.mxu0 0.0
  %286 = vmatprep.subr.mxu0 0.0
  %287 = vmatpush1.msra.mxu0 0.0
  %288 = vmatprep.subr.mxu0 0.0
  %289 = vmatpush1.msra.mxu0 0.0
  %290 = vmatprep.subr.mxu0 0.0
  %291 = vmatpush1.msra.mxu0 0.0
  %292 = vmatprep.subr.mxu0 0.0
  %293 = vmatpush1.msra.mxu0 0.0
  %294 = vmatprep.subr.mxu0 0.0
  %295 = vmatpush1.msra.mxu0 0.0
  %296 = vmatprep.subr.mxu0 0.0
  %297 = vmatpush1.msra.mxu0 0.0
  %298 = vmatprep.subr.mxu0 0.0
  %299 = vmatpush1.msra.mxu0 0.0
  %300 = vmatprep.subr.mxu0 0.0
  %301 = vmatpush1.msra.mxu0 0.0
  %302 = vmatprep.subr.mxu0 0.0
  %303 = vmatpush1.msra.mxu0 0.0
  %304 = vmatprep.subr.mxu0 0.0
  %305 = vmatpush1.msra.mxu0 0.0
  %306 = vmatprep.subr.mxu0 0.0
  %307 = vmatpush1.msra.mxu0 0.0
  %308 = vmatprep.subr.mxu0 0.0
  %309 = vmatpush1.msra.mxu0 0.0
  %310 = vmatprep.subr.mxu0 0.0
  %311 = vmatpush1.msra.mxu0 0.0
  %312 = vmatprep.subr.mxu0 0.0
  %313 = vmatpush1.msra.mxu0 0.0
  %314 = vmatprep.subr.mxu0 0.0
  %315 = vmatpush1.msra.mxu0 0.0
  %316 = vmatprep.subr.mxu0 0.0
  %317 = vmatpush1.msra.mxu0 0.0
  %318 = vmatprep.subr.mxu0 0.0
  %319 = vmatpush1.msra.mxu0 0.0
  %320 = vmatprep.mubr.f32.mxu0 0.0
  %321 = vmatmul.mubr.f32.gmra.mrb[0].mxu0 %v74
  %v322 = vpop.f32.mrb[0].mxu0
  %v323 = vadd.f32 %v243, %v322
  %v324 = vpop.f32.mrb[0].mxu0
  %v325 = vadd.f32 %v247, %v324
  %326 = vmatprep.mubr.f32.mxu0 0.0
  %327 = vmatmul.mubr.f32.gmra.mrb[0].mxu0 %v77
  %v328 = vpop.f32.mrb[0].mxu0
  %v329 = vadd.f32 %v243, %v328
  %v330 = vpop.f32.mrb[0].mxu0
  %v331 = vadd.f32 %v247, %v330
  %332 = vmatprep.mubr.f32.mxu0 0.0
  %333 = vmatmul.mubr.f32.gmra.mrb[0].mxu0 %v80
  %v334 = vpop.f32.mrb[0].mxu0
  %v335 = vadd.f32 %v243, %v334
  %v336 = vpop.f32.mrb[0].mxu0
  %v337 = vadd.f32 %v247, %v336
  %338 = vmatprep.mubr.f32.mxu0 0.0
  %339 = vmatmul.mubr.f32.gmra.mrb[0].mxu0 %v83
  %v340 = vpop.f32.mrb[0].mxu0
  %v341 = vadd.f32 %v243, %v340
  %v342 = vpop.f32.mrb[0].mxu0
  %v343 = vadd.f32 %v247, %v342
  %344 = vmatprep.mubr.f32.mxu0 0.0
  %345 = vmatmul.mubr.f32.gmra.mrb[0].mxu0 %v86
  %v346 = vpop.f32.mrb[0].mxu0
  %v347 = vadd.f32 %v243, %v346
  %v348 = vpop.f32.mrb[0].mxu0
  %v349 = vadd.f32 %v247, %v348
  %350 = vmatprep.mubr.f32.mxu0 0.0
  %351 = vmatmul.mubr.f32.gmra.mrb[0].mxu0 %v89
  %v352 = vpop.f32.mrb[0].mxu0
  %v353 = vadd.f32 %v243, %v352
  %v354 = vpop.f32.mrb[0].mxu0
  %v355 = vadd.f32 %v247, %v354
  %356 = vmatprep.mubr.f32.mxu0 0.0
  %357 = vmatmul.mubr.f32.gmra.mrb[0].mxu0 %v92
  %v358 = vpop.f32.mrb[0].mxu0
  %v359 = vadd.f32 %v243, %v358
  %v360 = vpop.f32.mrb[0].mxu0
  %v361 = vadd.f32 %v247, %v360
  %362 = vmatprep.mubr.f32.mxu0 0.0
  %363 = vmatmul.mubr.f32.gmra.mrb[0].mxu0 %v95
  %v364 = vpop.f32.mrb[0].mxu0
  %v365 = vadd.f32 %v243, %v364
  %v366 = vpop.f32.mrb[0].mxu0
  %v367 = vadd.f32 %v247, %v366
  %368 = vdwg.mxu0
  %369 = vst [vmem:[#allocation3] sm:$0xff] %v323
  %370 = vst.msk [vmem:[#allocation3 + $0x8] sm:$0xff] %vm218, %v325
  %371 = vst [vmem:[#allocation3 + $0x10] sm:$0xff] %v329
  %372 = vst.msk [vmem:[#allocation3 + $0x18] sm:$0xff] %vm218, %v331
  %373 = vst [vmem:[#allocation3 + $0x20] sm:$0xff] %v335
  %374 = vst.msk [vmem:[#allocation3 + $0x28] sm:$0xff] %vm218, %v337
  %375 = vst [vmem:[#allocation3 + $0x30] sm:$0xff] %v341
  %376 = vst.msk [vmem:[#allocation3 + $0x38] sm:$0xff] %vm218, %v343
  %377 = vst [vmem:[#allocation3 + $0x40] sm:$0xff] %v347
  %378 = vst.msk [vmem:[#allocation3 + $0x48] sm:$0xff] %vm218, %v349
  %379 = vst [vmem:[#allocation3 + $0x50] sm:$0xff] %v353
  %380 = vst.msk [vmem:[#allocation3 + $0x58] sm:$0xff] %vm218, %v355
  %381 = vst [vmem:[#allocation3 + $0x60] sm:$0xff] %v359
  %382 = vst.msk [vmem:[#allocation3 + $0x68] sm:$0xff] %vm218, %v361
  %383 = vst [vmem:[#allocation3 + $0x70] sm:$0xff] %v365
  %384 = vst.msk [vmem:[#allocation3 + $0x78] sm:$0xff] %vm218, %v367
  %v385 = vld [vmem:[%s3] sm:$0xff]
  %v386 = vld [vmem:[%s3 + $0x8] sm:$0xff]
  %v387 = vld [vmem:[%s3 + $0x10] sm:$0xff]
  %v388 = vld [vmem:[%s3 + $0x18] sm:$0xff]
  %v389 = vld [vmem:[%s3 + $0x20] sm:$0xff]
  %v390 = vld [vmem:[%s3 + $0x28] sm:$0xff]
  %v391 = vld [vmem:[%s3 + $0x30] sm:$0xff]
  %v392 = vld [vmem:[%s3 + $0x38] sm:$0xff]
  %v393 = vld [vmem:[%s3 + $0x40] sm:$0xff]
  %v394 = vld [vmem:[%s3 + $0x48] sm:$0xff]
  %v395 = vld [vmem:[%s3 + $0x50] sm:$0xff]
  %v396 = vld [vmem:[%s3 + $0x58] sm:$0xff]
  %v397 = vld [vmem:[%s3 + $0x60] sm:$0xff]
  %v398 = vld [vmem:[%s3 + $0x68] sm:$0xff]
  %v399 = vld [vmem:[%s3 + $0x70] sm:$0xff]
  %v400 = vld [vmem:[%s3 + $0x78] sm:$0xff]
  %s401 = scalar_lea.vmem %s3, 128
  %v402 = vld [vmem:[%s401] sm:$0xff]
  %v403 = vld [vmem:[%s401 + $0x8] sm:$0xff]
  %v404 = vld [vmem:[%s401 + $0x10] sm:$0xff]
  %v405 = vld [vmem:[%s401 + $0x18] sm:$0xff]
  %v406 = vld [vmem:[%s401 + $0x20] sm:$0xff]
  %v407 = vld [vmem:[%s401 + $0x28] sm:$0xff]
  %v408 = vld [vmem:[%s401 + $0x30] sm:$0xff]
  %v409 = vld [vmem:[%s401 + $0x38] sm:$0xff]
  %v410 = vld [vmem:[%s401 + $0x40] sm:$0xff]
  %v411 = vld [vmem:[%s401 + $0x48] sm:$0xff]
  %v412 = vld [vmem:[%s401 + $0x50] sm:$0xff]
  %v413 = vld [vmem:[%s401 + $0x58] sm:$0xff]
  %v414 = vld [vmem:[%s401 + $0x60] sm:$0xff]
  %v415 = vld [vmem:[%s401 + $0x68] sm:$0xff]
  %v416 = vld [vmem:[%s401 + $0x70] sm:$0xff]
  %v417 = vld [vmem:[%s401 + $0x78] sm:$0xff]
  %v418 = vld [vmem:[%s4] sm:$0x1]
  %v420 = vlaneseq
  %v421 = vshrl.u32 %v420, 7
  %v422 = vsub.s32 0, %v421
  %v423 = vrot.slane %v418, %v422
  %s425 = scalar_lea.vmem %s4, 1
  %v426 = vld [vmem:[%s425] sm:$0x1]
  %v428 = vlaneseq
  %v429 = vshrl.u32 %v428, 7
  %v430 = vsub.s32 0, %v429
  %v431 = vrot.slane %v426, %v430
  %v433 = vld [vmem:[#allocation2] sm:$0xff]
  %v434 = vld [vmem:[#allocation2 + $0x8] sm:$0xff]
  %v436 = vsel %vm218, 0.0, 0
  %438 = vmatprep.subr.mxu0 %v386
  %439 = vmatpush1.msra.mxu0 %v385
  %440 = vmatprep.subr.mxu0 %v388
  %441 = vmatpush1.msra.mxu0 %v387
  %442 = vmatprep.subr.mxu0 %v390
  %443 = vmatpush1.msra.mxu0 %v389
  %444 = vmatprep.subr.mxu0 %v392
  %445 = vmatpush1.msra.mxu0 %v391
  %446 = vmatprep.subr.mxu0 %v394
  %447 = vmatpush1.msra.mxu0 %v393
  %448 = vmatprep.subr.mxu0 %v396
  %449 = vmatpush1.msra.mxu0 %v395
  %450 = vmatprep.subr.mxu0 %v398
  %451 = vmatpush1.msra.mxu0 %v397
  %452 = vmatprep.subr.mxu0 %v400
  %453 = vmatpush1.msra.mxu0 %v399
  %454 = vmatprep.subr.mxu0 0.0
  %455 = vmatpush1.msra.mxu0 0.0
  %456 = vmatprep.subr.mxu0 0.0
  %457 = vmatpush1.msra.mxu0 0.0
  %458 = vmatprep.subr.mxu0 0.0
  %459 = vmatpush1.msra.mxu0 0.0
  %460 = vmatprep.subr.mxu0 0.0
  %461 = vmatpush1.msra.mxu0 0.0
  %462 = vmatprep.subr.mxu0 0.0
  %463 = vmatpush1.msra.mxu0 0.0
  %464 = vmatprep.subr.mxu0 0.0
  %465 = vmatpush1.msra.mxu0 0.0
  %466 = vmatprep.subr.mxu0 0.0
  %467 = vmatpush1.msra.mxu0 0.0
  %468 = vmatprep.subr.mxu0 0.0
  %469 = vmatpush1.msra.mxu0 0.0
  %470 = vmatprep.subr.mxu0 0.0
  %471 = vmatpush1.msra.mxu0 0.0
  %472 = vmatprep.subr.mxu0 0.0
  %473 = vmatpush1.msra.mxu0 0.0
  %474 = vmatprep.subr.mxu0 0.0
  %475 = vmatpush1.msra.mxu0 0.0
  %476 = vmatprep.subr.mxu0 0.0
  %477 = vmatpush1.msra.mxu0 0.0
  %478 = vmatprep.subr.mxu0 0.0
  %479 = vmatpush1.msra.mxu0 0.0
  %480 = vmatprep.subr.mxu0 0.0
  %481 = vmatpush1.msra.mxu0 0.0
  %482 = vmatprep.subr.mxu0 0.0
  %483 = vmatpush1.msra.mxu0 0.0
  %484 = vmatprep.subr.mxu0 0.0
  %485 = vmatpush1.msra.mxu0 0.0
  %486 = vmatprep.subr.mxu0 0.0
  %487 = vmatpush1.msra.mxu0 0.0
  %488 = vmatprep.subr.mxu0 0.0
  %489 = vmatpush1.msra.mxu0 0.0
  %490 = vmatprep.subr.mxu0 0.0
  %491 = vmatpush1.msra.mxu0 0.0
  %492 = vmatprep.subr.mxu0 0.0
  %493 = vmatpush1.msra.mxu0 0.0
  %494 = vmatprep.subr.mxu0 0.0
  %495 = vmatpush1.msra.mxu0 0.0
  %496 = vmatprep.subr.mxu0 0.0
  %497 = vmatpush1.msra.mxu0 0.0
  %498 = vmatprep.subr.mxu0 0.0
  %499 = vmatpush1.msra.mxu0 0.0
  %500 = vmatprep.subr.mxu0 0.0
  %501 = vmatpush1.msra.mxu0 0.0
  %502 = vmatprep.mubr.f32.mxu0 0.0
  %503 = vmatmul.mubr.f32.gmra.mrb[0].mxu0 %v436
  %v504 = vpop.f32.mrb[0].mxu0
  %v505 = vadd.f32 0.0, %v504
  %v506 = vpop.f32.mrb[0].mxu0
  %v507 = vadd.f32 0.0, %v506
  %508 = vdwg.mxu0
  %v509 = vadd.f32 %v433, %v505
  %v510 = vxor.u32 %v509, 2147483648
  %v511 = vmul.f32 %v510, 1.442695
  %v512 = vpow.pop %v511
  %v513 = vadd.f32 %v512, 1.0
  %v514 = vrcp.pop %v513
  %v515 = vmul.f32 1.0, %v514
  %v516 = vadd.f32 %v507, %v423
  %v517 = vmul.f32 %v515, %v516
  %v518 = vadd.f32 %v434, %v517
  %v519 = vtanh.pop %v518
  %v520 = vsub.f32 1.0, %v515
  %522 = vrot.lane.b32.xlu0 %v519, 64
  %v523 = vpop.permute.xlu0 %522
  %v525 = vmul.f32 %v520, %v523
  %v526 = vmul.f32 %v515, 0.0
  %v527 = vadd.f32 %v525, %v526
  %s528 = scalar_lea.vmem [#allocation3], 112
  %v529 = vld [vmem:[%s528] sm:$0xff]
  %v530 = vld [vmem:[%s528 + $0x8] sm:$0xff]
  %531 = vmatprep.subr.mxu0 %v403
  %532 = vmatpush1.msra.mxu0 %v402
  %533 = vmatprep.subr.mxu0 %v405
  %534 = vmatpush1.msra.mxu0 %v404
  %535 = vmatprep.subr.mxu0 %v407
  %536 = vmatpush1.msra.mxu0 %v406
  %537 = vmatprep.subr.mxu0 %v409
  %538 = vmatpush1.msra.mxu0 %v408
  %539 = vmatprep.subr.mxu0 %v411
  %540 = vmatpush1.msra.mxu0 %v410
  %541 = vmatprep.subr.mxu0 %v413
  %542 = vmatpush1.msra.mxu0 %v412
  %543 = vmatprep.subr.mxu0 %v415
  %544 = vmatpush1.msra.mxu0 %v414
  %545 = vmatprep.subr.mxu0 %v417
  %546 = vmatpush1.msra.mxu0 %v416
  %547 = vmatprep.subr.mxu0 0.0
  %548 = vmatpush1.msra.mxu0 0.0
  %549 = vmatprep.subr.mxu0 0.0
  %550 = vmatpush1.msra.mxu0 0.0
  %551 = vmatprep.subr.mxu0 0.0
  %552 = vmatpush1.msra.mxu0 0.0
  %553 = vmatprep.subr.mxu0 0.0
  %554 = vmatpush1.msra.mxu0 0.0
  %555 = vmatprep.subr.mxu0 0.0
  %556 = vmatpush1.msra.mxu0 0.0
  %557 = vmatprep.subr.mxu0 0.0
  %558 = vmatpush1.msra.mxu0 0.0
  %559 = vmatprep.subr.mxu0 0.0
  %560 = vmatpush1.msra.mxu0 0.0
  %561 = vmatprep.subr.mxu0 0.0
  %562 = vmatpush1.msra.mxu0 0.0
  %563 = vmatprep.subr.mxu0 0.0
  %564 = vmatpush1.msra.mxu0 0.0
  %565 = vmatprep.subr.mxu0 0.0
  %566 = vmatpush1.msra.mxu0 0.0
  %567 = vmatprep.subr.mxu0 0.0
  %568 = vmatpush1.msra.mxu0 0.0
  %569 = vmatprep.subr.mxu0 0.0
  %570 = vmatpush1.msra.mxu0 0.0
  %571 = vmatprep.subr.mxu0 0.0
  %572 = vmatpush1.msra.mxu0 0.0
  %573 = vmatprep.subr.mxu0 0.0
  %574 = vmatpush1.msra.mxu0 0.0
  %575 = vmatprep.subr.mxu0 0.0
  %576 = vmatpush1.msra.mxu0 0.0
  %577 = vmatprep.subr.mxu0 0.0
  %578 = vmatpush1.msra.mxu0 0.0
  %579 = vmatprep.subr.mxu0 0.0
  %580 = vmatpush1.msra.mxu0 0.0
  %581 = vmatprep.subr.mxu0 0.0
  %582 = vmatpush1.msra.mxu0 0.0
  %583 = vmatprep.subr.mxu0 0.0
  %584 = vmatpush1.msra.mxu0 0.0
  %585 = vmatprep.subr.mxu0 0.0
  %586 = vmatpush1.msra.mxu0 0.0
  %587 = vmatprep.subr.mxu0 0.0
  %588 = vmatpush1.msra.mxu0 0.0
  %589 = vmatprep.subr.mxu0 0.0
  %590 = vmatpush1.msra.mxu0 0.0
  %591 = vmatprep.subr.mxu0 0.0
  %592 = vmatpush1.msra.mxu0 0.0
  %593 = vmatprep.subr.mxu0 0.0
  %594 = vmatpush1.msra.mxu0 0.0
  %595 = vmatprep.mubr.f32.mxu0 0.0
  %596 = vmatmul.mubr.f32.gmra.mrb[0].mxu0 %v436
  %v597 = vpop.f32.mrb[0].mxu0
  %v598 = vadd.f32 0.0, %v597
  %v599 = vpop.f32.mrb[0].mxu0
  %v600 = vadd.f32 0.0, %v599
  %601 = vdwg.mxu0
  %v602 = vadd.f32 %v529, %v598
  %v603 = vxor.u32 %v602, 2147483648
  %v604 = vmul.f32 %v603, 1.442695
  %v605 = vpow.pop %v604
  %v606 = vadd.f32 %v605, 1.0
  %v607 = vrcp.pop %v606
  %v608 = vmul.f32 1.0, %v607
  %v609 = vadd.f32 %v600, %v431
  %v610 = vmul.f32 %v608, %v609
  %v611 = vadd.f32 %v530, %v610
  %v612 = vtanh.pop %v611
  %v613 = vsub.f32 1.0, %v608
  %615 = vrot.lane.b32.xlu0 %v612, 64
  %v616 = vpop.permute.xlu0 %615
  %v618 = vmul.f32 %v613, %v616
  %v619 = vmul.f32 %v608, 0.0
  %v620 = vadd.f32 %v618, %v619
  %622 = vrot.lane.b32.xlu0 %v527, 64
  %v623 = vpop.permute.xlu0 %622
  %625 = vst.msk [vmem:[#allocation4] sm:$0xff] %vm218, %v623
  %627 = vrot.lane.b32.xlu0 %v620, 64
  %v628 = vpop.permute.xlu0 %627
  %s630 = scalar_lea.vmem [#allocation5], 56
  %631 = vst.msk [vmem:[%s630] sm:$0xff] %vm218, %v628
  %s632 = scalar_lea.vmem [#allocation2], 16
  %v633 = vld [vmem:[%s632] sm:$0xff]
  %v634 = vld [vmem:[%s632 + $0x8] sm:$0xff]
  %v635 = vsel %vm218, %v623, 0
  %637 = vmatprep.subr.mxu0 %v386
  %638 = vmatpush1.msra.mxu0 %v385
  %639 = vmatprep.subr.mxu0 %v388
  %640 = vmatpush1.msra.mxu0 %v387
  %641 = vmatprep.subr.mxu0 %v390
  %642 = vmatpush1.msra.mxu0 %v389
  %643 = vmatprep.subr.mxu0 %v392
  %644 = vmatpush1.msra.mxu0 %v391
  %645 = vmatprep.subr.mxu0 %v394
  %646 = vmatpush1.msra.mxu0 %v393
  %647 = vmatprep.subr.mxu0 %v396
  %648 = vmatpush1.msra.mxu0 %v395
  %649 = vmatprep.subr.mxu0 %v398
  %650 = vmatpush1.msra.mxu0 %v397
  %651 = vmatprep.subr.mxu0 %v400
  %652 = vmatpush1.msra.mxu0 %v399
  %653 = vmatprep.subr.mxu0 0.0
  %654 = vmatpush1.msra.mxu0 0.0
  %655 = vmatprep.subr.mxu0 0.0
  %656 = vmatpush1.msra.mxu0 0.0
  %657 = vmatprep.subr.mxu0 0.0
  %658 = vmatpush1.msra.mxu0 0.0
  %659 = vmatprep.subr.mxu0 0.0
  %660 = vmatpush1.msra.mxu0 0.0
  %661 = vmatprep.subr.mxu0 0.0
  %662 = vmatpush1.msra.mxu0 0.0
  %663 = vmatprep.subr.mxu0 0.0
  %664 = vmatpush1.msra.mxu0 0.0
  %665 = vmatprep.subr.mxu0 0.0
  %666 = vmatpush1.msra.mxu0 0.0
  %667 = vmatprep.subr.mxu0 0.0
  %668 = vmatpush1.msra.mxu0 0.0
  %669 = vmatprep.subr.mxu0 0.0
  %670 = vmatpush1.msra.mxu0 0.0
  %671 = vmatprep.subr.mxu0 0.0
  %672 = vmatpush1.msra.mxu0 0.0
  %673 = vmatprep.subr.mxu0 0.0
  %674 = vmatpush1.msra.mxu0 0.0
  %675 = vmatprep.subr.mxu0 0.0
  %676 = vmatpush1.msra.mxu0 0.0
  %677 = vmatprep.subr.mxu0 0.0
  %678 = vmatpush1.msra.mxu0 0.0
  %679 = vmatprep.subr.mxu0 0.0
  %680 = vmatpush1.msra.mxu0 0.0
  %681 = vmatprep.subr.mxu0 0.0
  %682 = vmatpush1.msra.mxu0 0.0
  %683 = vmatprep.subr.mxu0 0.0
  %684 = vmatpush1.msra.mxu0 0.0
  %685 = vmatprep.subr.mxu0 0.0
  %686 = vmatpush1.msra.mxu0 0.0
  %687 = vmatprep.subr.mxu0 0.0
  %688 = vmatpush1.msra.mxu0 0.0
  %689 = vmatprep.subr.mxu0 0.0
  %690 = vmatpush1.msra.mxu0 0.0
  %691 = vmatprep.subr.mxu0 0.0
  %692 = vmatpush1.msra.mxu0 0.0
  %693 = vmatprep.subr.mxu0 0.0
  %694 = vmatpush1.msra.mxu0 0.0
  %695 = vmatprep.subr.mxu0 0.0
  %696 = vmatpush1.msra.mxu0 0.0
  %697 = vmatprep.subr.mxu0 0.0
  %698 = vmatpush1.msra.mxu0 0.0
  %699 = vmatprep.subr.mxu0 0.0
  %700 = vmatpush1.msra.mxu0 0.0
  %701 = vmatprep.mubr.f32.mxu0 0.0
  %702 = vmatmul.mubr.f32.gmra.mrb[0].mxu0 %v635
  %v703 = vpop.f32.mrb[0].mxu0
  %v704 = vadd.f32 0.0, %v703
  %v705 = vpop.f32.mrb[0].mxu0
  %v706 = vadd.f32 0.0, %v705
  %707 = vdwg.mxu0
  %v708 = vadd.f32 %v633, %v704
  %v709 = vxor.u32 %v708, 2147483648
  %v710 = vmul.f32 %v709, 1.442695
  %v711 = vpow.pop %v710
  %v712 = vadd.f32 %v711, 1.0
  %v713 = vrcp.pop %v712
  %v714 = vmul.f32 1.0, %v713
  %v715 = vadd.f32 %v706, %v423
  %v716 = vmul.f32 %v714, %v715
  %v717 = vadd.f32 %v634, %v716
  %v718 = vtanh.pop %v717
  %v719 = vsub.f32 1.0, %v714
  %721 = vrot.lane.b32.xlu0 %v718, 64
  %v722 = vpop.permute.xlu0 %721
  %v724 = vmul.f32 %v719, %v722
  %v725 = vmul.f32 %v714, %v527
  %v726 = vadd.f32 %v724, %v725
  %s727 = scalar_lea.vmem [#allocation3], 96
  %v728 = vld [vmem:[%s727] sm:$0xff]
  %v729 = vld [vmem:[%s727 + $0x8] sm:$0xff]
  %v730 = vsel %vm218, %v628, 0
  %732 = vmatprep.subr.mxu0 %v403
  %733 = vmatpush1.msra.mxu0 %v402
  %734 = vmatprep.subr.mxu0 %v405
  %735 = vmatpush1.msra.mxu0 %v404
  %736 = vmatprep.subr.mxu0 %v407
  %737 = vmatpush1.msra.mxu0 %v406
  %738 = vmatprep.subr.mxu0 %v409
  %739 = vmatpush1.msra.mxu0 %v408
  %740 = vmatprep.subr.mxu0 %v411
  %741 = vmatpush1.msra.mxu0 %v410
  %742 = vmatprep.subr.mxu0 %v413
  %743 = vmatpush1.msra.mxu0 %v412
  %744 = vmatprep.subr.mxu0 %v415
  %745 = vmatpush1.msra.mxu0 %v414
  %746 = vmatprep.subr.mxu0 %v417
  %747 = vmatpush1.msra.mxu0 %v416
  %748 = vmatprep.subr.mxu0 0.0
  %749 = vmatpush1.msra.mxu0 0.0
  %750 = vmatprep.subr.mxu0 0.0
  %751 = vmatpush1.msra.mxu0 0.0
  %752 = vmatprep.subr.mxu0 0.0
  %753 = vmatpush1.msra.mxu0 0.0
  %754 = vmatprep.subr.mxu0 0.0
  %755 = vmatpush1.msra.mxu0 0.0
  %756 = vmatprep.subr.mxu0 0.0
  %757 = vmatpush1.msra.mxu0 0.0
  %758 = vmatprep.subr.mxu0 0.0
  %759 = vmatpush1.msra.mxu0 0.0
  %760 = vmatprep.subr.mxu0 0.0
  %761 = vmatpush1.msra.mxu0 0.0
  %762 = vmatprep.subr.mxu0 0.0
  %763 = vmatpush1.msra.mxu0 0.0
  %764 = vmatprep.subr.mxu0 0.0
  %765 = vmatpush1.msra.mxu0 0.0
  %766 = vmatprep.subr.mxu0 0.0
  %767 = vmatpush1.msra.mxu0 0.0
  %768 = vmatprep.subr.mxu0 0.0
  %769 = vmatpush1.msra.mxu0 0.0
  %770 = vmatprep.subr.mxu0 0.0
  %771 = vmatpush1.msra.mxu0 0.0
  %772 = vmatprep.subr.mxu0 0.0
  %773 = vmatpush1.msra.mxu0 0.0
  %774 = vmatprep.subr.mxu0 0.0
  %775 = vmatpush1.msra.mxu0 0.0
  %776 = vmatprep.subr.mxu0 0.0
  %777 = vmatpush1.msra.mxu0 0.0
  %778 = vmatprep.subr.mxu0 0.0
  %779 = vmatpush1.msra.mxu0 0.0
  %780 = vmatprep.subr.mxu0 0.0
  %781 = vmatpush1.msra.mxu0 0.0
  %782 = vmatprep.subr.mxu0 0.0
  %783 = vmatpush1.msra.mxu0 0.0
  %784 = vmatprep.subr.mxu0 0.0
  %785 = vmatpush1.msra.mxu0 0.0
  %786 = vmatprep.subr.mxu0 0.0
  %787 = vmatpush1.msra.mxu0 0.0
  %788 = vmatprep.subr.mxu0 0.0
  %789 = vmatpush1.msra.mxu0 0.0
  %790 = vmatprep.subr.mxu0 0.0
  %791 = vmatpush1.msra.mxu0 0.0
  %792 = vmatprep.subr.mxu0 0.0
  %793 = vmatpush1.msra.mxu0 0.0
  %794 = vmatprep.subr.mxu0 0.0
  %795 = vmatpush1.msra.mxu0 0.0
  %796 = vmatprep.mubr.f32.mxu0 0.0
  %797 = vmatmul.mubr.f32.gmra.mrb[0].mxu0 %v730
  %v798 = vpop.f32.mrb[0].mxu0
  %v799 = vadd.f32 0.0, %v798
  %v800 = vpop.f32.mrb[0].mxu0
  %v801 = vadd.f32 0.0, %v800
  %802 = vdwg.mxu0
  %v803 = vadd.f32 %v728, %v799
  %v804 = vxor.u32 %v803, 2147483648
  %v805 = vmul.f32 %v804, 1.442695
  %v806 = vpow.pop %v805
  %v807 = vadd.f32 %v806, 1.0
  %v808 = vrcp.pop %v807
  %v809 = vmul.f32 1.0, %v808
  %v810 = vadd.f32 %v801, %v431
  %v811 = vmul.f32 %v809, %v810
  %v812 = vadd.f32 %v729, %v811
  %v813 = vtanh.pop %v812
  %v814 = vsub.f32 1.0, %v809
  %816 = vrot.lane.b32.xlu0 %v813, 64
  %v817 = vpop.permute.xlu0 %816
  %v819 = vmul.f32 %v814, %v817
  %v820 = vmul.f32 %v809, %v620
  %v821 = vadd.f32 %v819, %v820
  %823 = vrot.lane.b32.xlu0 %v726, 64
  %v824 = vpop.permute.xlu0 %823
  %s826 = scalar_lea.vmem [#allocation4], 8
  %827 = vst.msk [vmem:[%s826] sm:$0xff] %vm218, %v824
  %829 = vrot.lane.b32.xlu0 %v821, 64
  %v830 = vpop.permute.xlu0 %829
  %s832 = scalar_lea.vmem [#allocation5], 48
  %833 = vst.msk [vmem:[%s832] sm:$0xff] %vm218, %v830
  %s834 = scalar_lea.vmem [#allocation2], 32
  %v835 = vld [vmem:[%s834] sm:$0xff]
  %v836 = vld [vmem:[%s834 + $0x8] sm:$0xff]
  %v837 = vsel %vm218, %v824, 0
  %839 = vmatprep.subr.mxu0 %v386
  %840 = vmatpush1.msra.mxu0 %v385
  %841 = vmatprep.subr.mxu0 %v388
  %842 = vmatpush1.msra.mxu0 %v387
  %843 = vmatprep.subr.mxu0 %v390
  %844 = vmatpush1.msra.mxu0 %v389
  %845 = vmatprep.subr.mxu0 %v392
  %846 = vmatpush1.msra.mxu0 %v391
  %847 = vmatprep.subr.mxu0 %v394
  %848 = vmatpush1.msra.mxu0 %v393
  %849 = vmatprep.subr.mxu0 %v396
  %850 = vmatpush1.msra.mxu0 %v395
  %851 = vmatprep.subr.mxu0 %v398
  %852 = vmatpush1.msra.mxu0 %v397
  %853 = vmatprep.subr.mxu0 %v400
  %854 = vmatpush1.msra.mxu0 %v399
  %855 = vmatprep.subr.mxu0 0.0
  %856 = vmatpush1.msra.mxu0 0.0
  %857 = vmatprep.subr.mxu0 0.0
  %858 = vmatpush1.msra.mxu0 0.0
  %859 = vmatprep.subr.mxu0 0.0
  %860 = vmatpush1.msra.mxu0 0.0
  %861 = vmatprep.subr.mxu0 0.0
  %862 = vmatpush1.msra.mxu0 0.0
  %863 = vmatprep.subr.mxu0 0.0
  %864 = vmatpush1.msra.mxu0 0.0
  %865 = vmatprep.subr.mxu0 0.0
  %866 = vmatpush1.msra.mxu0 0.0
  %867 = vmatprep.subr.mxu0 0.0
  %868 = vmatpush1.msra.mxu0 0.0
  %869 = vmatprep.subr.mxu0 0.0
  %870 = vmatpush1.msra.mxu0 0.0
  %871 = vmatprep.subr.mxu0 0.0
  %872 = vmatpush1.msra.mxu0 0.0
  %873 = vmatprep.subr.mxu0 0.0
  %874 = vmatpush1.msra.mxu0 0.0
  %875 = vmatprep.subr.mxu0 0.0
  %876 = vmatpush1.msra.mxu0 0.0
  %877 = vmatprep.subr.mxu0 0.0
  %878 = vmatpush1.msra.mxu0 0.0
  %879 = vmatprep.subr.mxu0 0.0
  %880 = vmatpush1.msra.mxu0 0.0
  %881 = vmatprep.subr.mxu0 0.0
  %882 = vmatpush1.msra.mxu0 0.0
  %883 = vmatprep.subr.mxu0 0.0
  %884 = vmatpush1.msra.mxu0 0.0
  %885 = vmatprep.subr.mxu0 0.0
  %886 = vmatpush1.msra.mxu0 0.0
  %887 = vmatprep.subr.mxu0 0.0
  %888 = vmatpush1.msra.mxu0 0.0
  %889 = vmatprep.subr.mxu0 0.0
  %890 = vmatpush1.msra.mxu0 0.0
  %891 = vmatprep.subr.mxu0 0.0
  %892 = vmatpush1.msra.mxu0 0.0
  %893 = vmatprep.subr.mxu0 0.0
  %894 = vmatpush1.msra.mxu0 0.0
  %895 = vmatprep.subr.mxu0 0.0
  %896 = vmatpush1.msra.mxu0 0.0
  %897 = vmatprep.subr.mxu0 0.0
  %898 = vmatpush1.msra.mxu0 0.0
  %899 = vmatprep.subr.mxu0 0.0
  %900 = vmatpush1.msra.mxu0 0.0
  %901 = vmatprep.subr.mxu0 0.0
  %902 = vmatpush1.msra.mxu0 0.0
  %903 = vmatprep.mubr.f32.mxu0 0.0
  %904 = vmatmul.mubr.f32.gmra.mrb[0].mxu0 %v837
  %v905 = vpop.f32.mrb[0].mxu0
  %v906 = vadd.f32 0.0, %v905
  %v907 = vpop.f32.mrb[0].mxu0
  %v908 = vadd.f32 0.0, %v907
  %909 = vdwg.mxu0
  %v910 = vadd.f32 %v835, %v906
  %v911 = vxor.u32 %v910, 2147483648
  %v912 = vmul.f32 %v911, 1.442695
  %v913 = vpow.pop %v912
  %v914 = vadd.f32 %v913, 1.0
  %v915 = vrcp.pop %v914
  %v916 = vmul.f32 1.0, %v915
  %v917 = vadd.f32 %v908, %v423
  %v918 = vmul.f32 %v916, %v917
  %v919 = vadd.f32 %v836, %v918
  %v920 = vtanh.pop %v919
  %v921 = vsub.f32 1.0, %v916
  %923 = vrot.lane.b32.xlu0 %v920, 64
  %v924 = vpop.permute.xlu0 %923
  %v926 = vmul.f32 %v921, %v924
  %v927 = vmul.f32 %v916, %v726
  %v928 = vadd.f32 %v926, %v927
  %s929 = scalar_lea.vmem [#allocation3], 80
  %v930 = vld [vmem:[%s929] sm:$0xff]
  %v931 = vld [vmem:[%s929 + $0x8] sm:$0xff]
  %v932 = vsel %vm218, %v830, 0
  %934 = vmatprep.subr.mxu0 %v403
  %935 = vmatpush1.msra.mxu0 %v402
  %936 = vmatprep.subr.mxu0 %v405
  %937 = vmatpush1.msra.mxu0 %v404
  %938 = vmatprep.subr.mxu0 %v407
  %939 = vmatpush1.msra.mxu0 %v406
  %940 = vmatprep.subr.mxu0 %v409
  %941 = vmatpush1.msra.mxu0 %v408
  %942 = vmatprep.subr.mxu0 %v411
  %943 = vmatpush1.msra.mxu0 %v410
  %944 = vmatprep.subr.mxu0 %v413
  %945 = vmatpush1.msra.mxu0 %v412
  %946 = vmatprep.subr.mxu0 %v415
  %947 = vmatpush1.msra.mxu0 %v414
  %948 = vmatprep.subr.mxu0 %v417
  %949 = vmatpush1.msra.mxu0 %v416
  %950 = vmatprep.subr.mxu0 0.0
  %951 = vmatpush1.msra.mxu0 0.0
  %952 = vmatprep.subr.mxu0 0.0
  %953 = vmatpush1.msra.mxu0 0.0
  %954 = vmatprep.subr.mxu0 0.0
  %955 = vmatpush1.msra.mxu0 0.0
  %956 = vmatprep.subr.mxu0 0.0
  %957 = vmatpush1.msra.mxu0 0.0
  %958 = vmatprep.subr.mxu0 0.0
  %959 = vmatpush1.msra.mxu0 0.0
  %960 = vmatprep.subr.mxu0 0.0
  %961 = vmatpush1.msra.mxu0 0.0
  %962 = vmatprep.subr.mxu0 0.0
  %963 = vmatpush1.msra.mxu0 0.0
  %964 = vmatprep.subr.mxu0 0.0
  %965 = vmatpush1.msra.mxu0 0.0
  %966 = vmatprep.subr.mxu0 0.0
  %967 = vmatpush1.msra.mxu0 0.0
  %968 = vmatprep.subr.mxu0 0.0
  %969 = vmatpush1.msra.mxu0 0.0
  %970 = vmatprep.subr.mxu0 0.0
  %971 = vmatpush1.msra.mxu0 0.0
  %972 = vmatprep.subr.mxu0 0.0
  %973 = vmatpush1.msra.mxu0 0.0
  %974 = vmatprep.subr.mxu0 0.0
  %975 = vmatpush1.msra.mxu0 0.0
  %976 = vmatprep.subr.mxu0 0.0
  %977 = vmatpush1.msra.mxu0 0.0
  %978 = vmatprep.subr.mxu0 0.0
  %979 = vmatpush1.msra.mxu0 0.0
  %980 = vmatprep.subr.mxu0 0.0
  %981 = vmatpush1.msra.mxu0 0.0
  %982 = vmatprep.subr.mxu0 0.0
  %983 = vmatpush1.msra.mxu0 0.0
  %984 = vmatprep.subr.mxu0 0.0
  %985 = vmatpush1.msra.mxu0 0.0
  %986 = vmatprep.subr.mxu0 0.0
  %987 = vmatpush1.msra.mxu0 0.0
  %988 = vmatprep.subr.mxu0 0.0
  %989 = vmatpush1.msra.mxu0 0.0
  %990 = vmatprep.subr.mxu0 0.0
  %991 = vmatpush1.msra.mxu0 0.0
  %992 = vmatprep.subr.mxu0 0.0
  %993 = vmatpush1.msra.mxu0 0.0
  %994 = vmatprep.subr.mxu0 0.0
  %995 = vmatpush1.msra.mxu0 0.0
  %996 = vmatprep.subr.mxu0 0.0
  %997 = vmatpush1.msra.mxu0 0.0
  %998 = vmatprep.mubr.f32.mxu0 0.0
  %999 = vmatmul.mubr.f32.gmra.mrb[0].mxu0 %v932
  %v1000 = vpop.f32.mrb[0].mxu0
  %v1001 = vadd.f32 0.0, %v1000
  %v1002 = vpop.f32.mrb[0].mxu0
  %v1003 = vadd.f32 0.0, %v1002
  %1004 = vdwg.mxu0
  %v1005 = vadd.f32 %v930, %v1001
  %v1006 = vxor.u32 %v1005, 2147483648
  %v1007 = vmul.f32 %v1006, 1.442695
  %v1008 = vpow.pop %v1007
  %v1009 = vadd.f32 %v1008, 1.0
  %v1010 = vrcp.pop %v1009
  %v1011 = vmul.f32 1.0, %v1010
  %v1012 = vadd.f32 %v1003, %v431
  %v1013 = vmul.f32 %v1011, %v1012
  %v1014 = vadd.f32 %v931, %v1013
  %v1015 = vtanh.pop %v1014
  %v1016 = vsub.f32 1.0, %v1011
  %1018 = vrot.lane.b32.xlu0 %v1015, 64
  %v1019 = vpop.permute.xlu0 %1018
  %v1021 = vmul.f32 %v1016, %v1019
  %v1022 = vmul.f32 %v1011, %v821
  %v1023 = vadd.f32 %v1021, %v1022
  %1025 = vrot.lane.b32.xlu0 %v928, 64
  %v1026 = vpop.permute.xlu0 %1025
  %s1028 = scalar_lea.vmem [#allocation4], 16
  %1029 = vst.msk [vmem:[%s1028] sm:$0xff] %vm218, %v1026
  %1031 = vrot.lane.b32.xlu0 %v1023, 64
  %v1032 = vpop.permute.xlu0 %1031
  %s1034 = scalar_lea.vmem [#allocation5], 40
  %1035 = vst.msk [vmem:[%s1034] sm:$0xff] %vm218, %v1032
  %s1036 = scalar_lea.vmem [#allocation2], 48
  %v1037 = vld [vmem:[%s1036] sm:$0xff]
  %v1038 = vld [vmem:[%s1036 + $0x8] sm:$0xff]
  %v1039 = vsel %vm218, %v1026, 0
  %1041 = vmatprep.subr.mxu0 %v386
  %1042 = vmatpush1.msra.mxu0 %v385
  %1043 = vmatprep.subr.mxu0 %v388
  %1044 = vmatpush1.msra.mxu0 %v387
  %1045 = vmatprep.subr.mxu0 %v390
  %1046 = vmatpush1.msra.mxu0 %v389
  %1047 = vmatprep.subr.mxu0 %v392
  %1048 = vmatpush1.msra.mxu0 %v391
  %1049 = vmatprep.subr.mxu0 %v394
  %1050 = vmatpush1.msra.mxu0 %v393
  %1051 = vmatprep.subr.mxu0 %v396
  %1052 = vmatpush1.msra.mxu0 %v395
  %1053 = vmatprep.subr.mxu0 %v398
  %1054 = vmatpush1.msra.mxu0 %v397
  %1055 = vmatprep.subr.mxu0 %v400
  %1056 = vmatpush1.msra.mxu0 %v399
  %1057 = vmatprep.subr.mxu0 0.0
  %1058 = vmatpush1.msra.mxu0 0.0
  %1059 = vmatprep.subr.mxu0 0.0
  %1060 = vmatpush1.msra.mxu0 0.0
  %1061 = vmatprep.subr.mxu0 0.0
  %1062 = vmatpush1.msra.mxu0 0.0
  %1063 = vmatprep.subr.mxu0 0.0
  %1064 = vmatpush1.msra.mxu0 0.0
  %1065 = vmatprep.subr.mxu0 0.0
  %1066 = vmatpush1.msra.mxu0 0.0
  %1067 = vmatprep.subr.mxu0 0.0
  %1068 = vmatpush1.msra.mxu0 0.0
  %1069 = vmatprep.subr.mxu0 0.0
  %1070 = vmatpush1.msra.mxu0 0.0
  %1071 = vmatprep.subr.mxu0 0.0
  %1072 = vmatpush1.msra.mxu0 0.0
  %1073 = vmatprep.subr.mxu0 0.0
  %1074 = vmatpush1.msra.mxu0 0.0
  %1075 = vmatprep.subr.mxu0 0.0
  %1076 = vmatpush1.msra.mxu0 0.0
  %1077 = vmatprep.subr.mxu0 0.0
  %1078 = vmatpush1.msra.mxu0 0.0
  %1079 = vmatprep.subr.mxu0 0.0
  %1080 = vmatpush1.msra.mxu0 0.0
  %1081 = vmatprep.subr.mxu0 0.0
  %1082 = vmatpush1.msra.mxu0 0.0
  %1083 = vmatprep.subr.mxu0 0.0
  %1084 = vmatpush1.msra.mxu0 0.0
  %1085 = vmatprep.subr.mxu0 0.0
  %1086 = vmatpush1.msra.mxu0 0.0
  %1087 = vmatprep.subr.mxu0 0.0
  %1088 = vmatpush1.msra.mxu0 0.0
  %1089 = vmatprep.subr.mxu0 0.0
  %1090 = vmatpush1.msra.mxu0 0.0
  %1091 = vmatprep.subr.mxu0 0.0
  %1092 = vmatpush1.msra.mxu0 0.0
  %1093 = vmatprep.subr.mxu0 0.0
  %1094 = vmatpush1.msra.mxu0 0.0
  %1095 = vmatprep.subr.mxu0 0.0
  %1096 = vmatpush1.msra.mxu0 0.0
  %1097 = vmatprep.subr.mxu0 0.0
  %1098 = vmatpush1.msra.mxu0 0.0
  %1099 = vmatprep.subr.mxu0 0.0
  %1100 = vmatpush1.msra.mxu0 0.0
  %1101 = vmatprep.subr.mxu0 0.0
  %1102 = vmatpush1.msra.mxu0 0.0
  %1103 = vmatprep.subr.mxu0 0.0
  %1104 = vmatpush1.msra.mxu0 0.0
  %1105 = vmatprep.mubr.f32.mxu0 0.0
  %1106 = vmatmul.mubr.f32.gmra.mrb[0].mxu0 %v1039
  %v1107 = vpop.f32.mrb[0].mxu0
  %v1108 = vadd.f32 0.0, %v1107
  %v1109 = vpop.f32.mrb[0].mxu0
  %v1110 = vadd.f32 0.0, %v1109
  %1111 = vdwg.mxu0
  %v1112 = vadd.f32 %v1037, %v1108
  %v1113 = vxor.u32 %v1112, 2147483648
  %v1114 = vmul.f32 %v1113, 1.442695
  %v1115 = vpow.pop %v1114
  %v1116 = vadd.f32 %v1115, 1.0
  %v1117 = vrcp.pop %v1116
  %v1118 = vmul.f32 1.0, %v1117
  %v1119 = vadd.f32 %v1110, %v423
  %v1120 = vmul.f32 %v1118, %v1119
  %v1121 = vadd.f32 %v1038, %v1120
  %v1122 = vtanh.pop %v1121
  %v1123 = vsub.f32 1.0, %v1118
  %1125 = vrot.lane.b32.xlu0 %v1122, 64
  %v1126 = vpop.permute.xlu0 %1125
  %v1128 = vmul.f32 %v1123, %v1126
  %v1129 = vmul.f32 %v1118, %v928
  %v1130 = vadd.f32 %v1128, %v1129
  %s1131 = scalar_lea.vmem [#allocation3], 64
  %v1132 = vld [vmem:[%s1131] sm:$0xff]
  %v1133 = vld [vmem:[%s1131 + $0x8] sm:$0xff]
  %v1134 = vsel %vm218, %v1032, 0
  %1136 = vmatprep.subr.mxu0 %v403
  %1137 = vmatpush1.msra.mxu0 %v402
  %1138 = vmatprep.subr.mxu0 %v405
  %1139 = vmatpush1.msra.mxu0 %v404
  %1140 = vmatprep.subr.mxu0 %v407
  %1141 = vmatpush1.msra.mxu0 %v406
  %1142 = vmatprep.subr.mxu0 %v409
  %1143 = vmatpush1.msra.mxu0 %v408
  %1144 = vmatprep.subr.mxu0 %v411
  %1145 = vmatpush1.msra.mxu0 %v410
  %1146 = vmatprep.subr.mxu0 %v413
  %1147 = vmatpush1.msra.mxu0 %v412
  %1148 = vmatprep.subr.mxu0 %v415
  %1149 = vmatpush1.msra.mxu0 %v414
  %1150 = vmatprep.subr.mxu0 %v417
  %1151 = vmatpush1.msra.mxu0 %v416
  %1152 = vmatprep.subr.mxu0 0.0
  %1153 = vmatpush1.msra.mxu0 0.0
  %1154 = vmatprep.subr.mxu0 0.0
  %1155 = vmatpush1.msra.mxu0 0.0
  %1156 = vmatprep.subr.mxu0 0.0
  %1157 = vmatpush1.msra.mxu0 0.0
  %1158 = vmatprep.subr.mxu0 0.0
  %1159 = vmatpush1.msra.mxu0 0.0
  %1160 = vmatprep.subr.mxu0 0.0
  %1161 = vmatpush1.msra.mxu0 0.0
  %1162 = vmatprep.subr.mxu0 0.0
  %1163 = vmatpush1.msra.mxu0 0.0
  %1164 = vmatprep.subr.mxu0 0.0
  %1165 = vmatpush1.msra.mxu0 0.0
  %1166 = vmatprep.subr.mxu0 0.0
  %1167 = vmatpush1.msra.mxu0 0.0
  %1168 = vmatprep.subr.mxu0 0.0
  %1169 = vmatpush1.msra.mxu0 0.0
  %1170 = vmatprep.subr.mxu0 0.0
  %1171 = vmatpush1.msra.mxu0 0.0
  %1172 = vmatprep.subr.mxu0 0.0
  %1173 = vmatpush1.msra.mxu0 0.0
  %1174 = vmatprep.subr.mxu0 0.0
  %1175 = vmatpush1.msra.mxu0 0.0
  %1176 = vmatprep.subr.mxu0 0.0
  %1177 = vmatpush1.msra.mxu0 0.0
  %1178 = vmatprep.subr.mxu0 0.0
  %1179 = vmatpush1.msra.mxu0 0.0
  %1180 = vmatprep.subr.mxu0 0.0
  %1181 = vmatpush1.msra.mxu0 0.0
  %1182 = vmatprep.subr.mxu0 0.0
  %1183 = vmatpush1.msra.mxu0 0.0
  %1184 = vmatprep.subr.mxu0 0.0
  %1185 = vmatpush1.msra.mxu0 0.0
  %1186 = vmatprep.subr.mxu0 0.0
  %1187 = vmatpush1.msra.mxu0 0.0
  %1188 = vmatprep.subr.mxu0 0.0
  %1189 = vmatpush1.msra.mxu0 0.0
  %1190 = vmatprep.subr.mxu0 0.0
  %1191 = vmatpush1.msra.mxu0 0.0
  %1192 = vmatprep.subr.mxu0 0.0
  %1193 = vmatpush1.msra.mxu0 0.0
  %1194 = vmatprep.subr.mxu0 0.0
  %1195 = vmatpush1.msra.mxu0 0.0
  %1196 = vmatprep.subr.mxu0 0.0
  %1197 = vmatpush1.msra.mxu0 0.0
  %1198 = vmatprep.subr.mxu0 0.0
  %1199 = vmatpush1.msra.mxu0 0.0
  %1200 = vmatprep.mubr.f32.mxu0 0.0
  %1201 = vmatmul.mubr.f32.gmra.mrb[0].mxu0 %v1134
  %v1202 = vpop.f32.mrb[0].mxu0
  %v1203 = vadd.f32 0.0, %v1202
  %v1204 = vpop.f32.mrb[0].mxu0
  %v1205 = vadd.f32 0.0, %v1204
  %1206 = vdwg.mxu0
  %v1207 = vadd.f32 %v1132, %v1203
  %v1208 = vxor.u32 %v1207, 2147483648
  %v1209 = vmul.f32 %v1208, 1.442695
  %v1210 = vpow.pop %v1209
  %v1211 = vadd.f32 %v1210, 1.0
  %v1212 = vrcp.pop %v1211
  %v1213 = vmul.f32 1.0, %v1212
  %v1214 = vadd.f32 %v1205, %v431
  %v1215 = vmul.f32 %v1213, %v1214
  %v1216 = vadd.f32 %v1133, %v1215
  %v1217 = vtanh.pop %v1216
  %v1218 = vsub.f32 1.0, %v1213
  %1220 = vrot.lane.b32.xlu0 %v1217, 64
  %v1221 = vpop.permute.xlu0 %1220
  %v1223 = vmul.f32 %v1218, %v1221
  %v1224 = vmul.f32 %v1213, %v1023
  %v1225 = vadd.f32 %v1223, %v1224
  %1227 = vrot.lane.b32.xlu0 %v1130, 64
  %v1228 = vpop.permute.xlu0 %1227
  %s1230 = scalar_lea.vmem [#allocation4], 24
  %1231 = vst.msk [vmem:[%s1230] sm:$0xff] %vm218, %v1228
  %1233 = vrot.lane.b32.xlu0 %v1225, 64
  %v1234 = vpop.permute.xlu0 %1233
  %s1236 = scalar_lea.vmem [#allocation5], 32
  %1237 = vst.msk [vmem:[%s1236] sm:$0xff] %vm218, %v1234
  %s1238 = scalar_lea.vmem [#allocation2], 64
  %v1239 = vld [vmem:[%s1238] sm:$0xff]
  %v1240 = vld [vmem:[%s1238 + $0x8] sm:$0xff]
  %v1241 = vsel %vm218, %v1228, 0
  %1243 = vmatprep.subr.mxu0 %v386
  %1244 = vmatpush1.msra.mxu0 %v385
  %1245 = vmatprep.subr.mxu0 %v388
  %1246 = vmatpush1.msra.mxu0 %v387
  %1247 = vmatprep.subr.mxu0 %v390
  %1248 = vmatpush1.msra.mxu0 %v389
  %1249 = vmatprep.subr.mxu0 %v392
  %1250 = vmatpush1.msra.mxu0 %v391
  %1251 = vmatprep.subr.mxu0 %v394
  %1252 = vmatpush1.msra.mxu0 %v393
  %1253 = vmatprep.subr.mxu0 %v396
  %1254 = vmatpush1.msra.mxu0 %v395
  %1255 = vmatprep.subr.mxu0 %v398
  %1256 = vmatpush1.msra.mxu0 %v397
  %1257 = vmatprep.subr.mxu0 %v400
  %1258 = vmatpush1.msra.mxu0 %v399
  %1259 = vmatprep.subr.mxu0 0.0
  %1260 = vmatpush1.msra.mxu0 0.0
  %1261 = vmatprep.subr.mxu0 0.0
  %1262 = vmatpush1.msra.mxu0 0.0
  %1263 = vmatprep.subr.mxu0 0.0
  %1264 = vmatpush1.msra.mxu0 0.0
  %1265 = vmatprep.subr.mxu0 0.0
  %1266 = vmatpush1.msra.mxu0 0.0
  %1267 = vmatprep.subr.mxu0 0.0
  %1268 = vmatpush1.msra.mxu0 0.0
  %1269 = vmatprep.subr.mxu0 0.0
  %1270 = vmatpush1.msra.mxu0 0.0
  %1271 = vmatprep.subr.mxu0 0.0
  %1272 = vmatpush1.msra.mxu0 0.0
  %1273 = vmatprep.subr.mxu0 0.0
  %1274 = vmatpush1.msra.mxu0 0.0
  %1275 = vmatprep.subr.mxu0 0.0
  %1276 = vmatpush1.msra.mxu0 0.0
  %1277 = vmatprep.subr.mxu0 0.0
  %1278 = vmatpush1.msra.mxu0 0.0
  %1279 = vmatprep.subr.mxu0 0.0
  %1280 = vmatpush1.msra.mxu0 0.0
  %1281 = vmatprep.subr.mxu0 0.0
  %1282 = vmatpush1.msra.mxu0 0.0
  %1283 = vmatprep.subr.mxu0 0.0
  %1284 = vmatpush1.msra.mxu0 0.0
  %1285 = vmatprep.subr.mxu0 0.0
  %1286 = vmatpush1.msra.mxu0 0.0
  %1287 = vmatprep.subr.mxu0 0.0
  %1288 = vmatpush1.msra.mxu0 0.0
  %1289 = vmatprep.subr.mxu0 0.0
  %1290 = vmatpush1.msra.mxu0 0.0
  %1291 = vmatprep.subr.mxu0 0.0
  %1292 = vmatpush1.msra.mxu0 0.0
  %1293 = vmatprep.subr.mxu0 0.0
  %1294 = vmatpush1.msra.mxu0 0.0
  %1295 = vmatprep.subr.mxu0 0.0
  %1296 = vmatpush1.msra.mxu0 0.0
  %1297 = vmatprep.subr.mxu0 0.0
  %1298 = vmatpush1.msra.mxu0 0.0
  %1299 = vmatprep.subr.mxu0 0.0
  %1300 = vmatpush1.msra.mxu0 0.0
  %1301 = vmatprep.subr.mxu0 0.0
  %1302 = vmatpush1.msra.mxu0 0.0
  %1303 = vmatprep.subr.mxu0 0.0
  %1304 = vmatpush1.msra.mxu0 0.0
  %1305 = vmatprep.subr.mxu0 0.0
  %1306 = vmatpush1.msra.mxu0 0.0
  %1307 = vmatprep.mubr.f32.mxu0 0.0
  %1308 = vmatmul.mubr.f32.gmra.mrb[0].mxu0 %v1241
  %v1309 = vpop.f32.mrb[0].mxu0
  %v1310 = vadd.f32 0.0, %v1309
  %v1311 = vpop.f32.mrb[0].mxu0
  %v1312 = vadd.f32 0.0, %v1311
  %1313 = vdwg.mxu0
  %v1314 = vadd.f32 %v1239, %v1310
  %v1315 = vxor.u32 %v1314, 2147483648
  %v1316 = vmul.f32 %v1315, 1.442695
  %v1317 = vpow.pop %v1316
  %v1318 = vadd.f32 %v1317, 1.0
  %v1319 = vrcp.pop %v1318
  %v1320 = vmul.f32 1.0, %v1319
  %v1321 = vadd.f32 %v1312, %v423
  %v1322 = vmul.f32 %v1320, %v1321
  %v1323 = vadd.f32 %v1240, %v1322
  %v1324 = vtanh.pop %v1323
  %v1325 = vsub.f32 1.0, %v1320
  %1327 = vrot.lane.b32.xlu0 %v1324, 64
  %v1328 = vpop.permute.xlu0 %1327
  %v1330 = vmul.f32 %v1325, %v1328
  %v1331 = vmul.f32 %v1320, %v1130
  %v1332 = vadd.f32 %v1330, %v1331
  %s1333 = scalar_lea.vmem [#allocation3], 48
  %v1334 = vld [vmem:[%s1333] sm:$0xff]
  %v1335 = vld [vmem:[%s1333 + $0x8] sm:$0xff]
  %v1336 = vsel %vm218, %v1234, 0
  %1338 = vmatprep.subr.mxu0 %v403
  %1339 = vmatpush1.msra.mxu0 %v402
  %1340 = vmatprep.subr.mxu0 %v405
  %1341 = vmatpush1.msra.mxu0 %v404
  %1342 = vmatprep.subr.mxu0 %v407
  %1343 = vmatpush1.msra.mxu0 %v406
  %1344 = vmatprep.subr.mxu0 %v409
  %1345 = vmatpush1.msra.mxu0 %v408
  %1346 = vmatprep.subr.mxu0 %v411
  %1347 = vmatpush1.msra.mxu0 %v410
  %1348 = vmatprep.subr.mxu0 %v413
  %1349 = vmatpush1.msra.mxu0 %v412
  %1350 = vmatprep.subr.mxu0 %v415
  %1351 = vmatpush1.msra.mxu0 %v414
  %1352 = vmatprep.subr.mxu0 %v417
  %1353 = vmatpush1.msra.mxu0 %v416
  %1354 = vmatprep.subr.mxu0 0.0
  %1355 = vmatpush1.msra.mxu0 0.0
  %1356 = vmatprep.subr.mxu0 0.0
  %1357 = vmatpush1.msra.mxu0 0.0
  %1358 = vmatprep.subr.mxu0 0.0
  %1359 = vmatpush1.msra.mxu0 0.0
  %1360 = vmatprep.subr.mxu0 0.0
  %1361 = vmatpush1.msra.mxu0 0.0
  %1362 = vmatprep.subr.mxu0 0.0
  %1363 = vmatpush1.msra.mxu0 0.0
  %1364 = vmatprep.subr.mxu0 0.0
  %1365 = vmatpush1.msra.mxu0 0.0
  %1366 = vmatprep.subr.mxu0 0.0
  %1367 = vmatpush1.msra.mxu0 0.0
  %1368 = vmatprep.subr.mxu0 0.0
  %1369 = vmatpush1.msra.mxu0 0.0
  %1370 = vmatprep.subr.mxu0 0.0
  %1371 = vmatpush1.msra.mxu0 0.0
  %1372 = vmatprep.subr.mxu0 0.0
  %1373 = vmatpush1.msra.mxu0 0.0
  %1374 = vmatprep.subr.mxu0 0.0
  %1375 = vmatpush1.msra.mxu0 0.0
  %1376 = vmatprep.subr.mxu0 0.0
  %1377 = vmatpush1.msra.mxu0 0.0
  %1378 = vmatprep.subr.mxu0 0.0
  %1379 = vmatpush1.msra.mxu0 0.0
  %1380 = vmatprep.subr.mxu0 0.0
  %1381 = vmatpush1.msra.mxu0 0.0
  %1382 = vmatprep.subr.mxu0 0.0
  %1383 = vmatpush1.msra.mxu0 0.0
  %1384 = vmatprep.subr.mxu0 0.0
  %1385 = vmatpush1.msra.mxu0 0.0
  %1386 = vmatprep.subr.mxu0 0.0
  %1387 = vmatpush1.msra.mxu0 0.0
  %1388 = vmatprep.subr.mxu0 0.0
  %1389 = vmatpush1.msra.mxu0 0.0
  %1390 = vmatprep.subr.mxu0 0.0
  %1391 = vmatpush1.msra.mxu0 0.0
  %1392 = vmatprep.subr.mxu0 0.0
  %1393 = vmatpush1.msra.mxu0 0.0
  %1394 = vmatprep.subr.mxu0 0.0
  %1395 = vmatpush1.msra.mxu0 0.0
  %1396 = vmatprep.subr.mxu0 0.0
  %1397 = vmatpush1.msra.mxu0 0.0
  %1398 = vmatprep.subr.mxu0 0.0
  %1399 = vmatpush1.msra.mxu0 0.0
  %1400 = vmatprep.subr.mxu0 0.0
  %1401 = vmatpush1.msra.mxu0 0.0
  %1402 = vmatprep.mubr.f32.mxu0 0.0
  %1403 = vmatmul.mubr.f32.gmra.mrb[0].mxu0 %v1336
  %v1404 = vpop.f32.mrb[0].mxu0
  %v1405 = vadd.f32 0.0, %v1404
  %v1406 = vpop.f32.mrb[0].mxu0
  %v1407 = vadd.f32 0.0, %v1406
  %1408 = vdwg.mxu0
  %v1409 = vadd.f32 %v1334, %v1405
  %v1410 = vxor.u32 %v1409, 2147483648
  %v1411 = vmul.f32 %v1410, 1.442695
  %v1412 = vpow.pop %v1411
  %v1413 = vadd.f32 %v1412, 1.0
  %v1414 = vrcp.pop %v1413
  %v1415 = vmul.f32 1.0, %v1414
  %v1416 = vadd.f32 %v1407, %v431
  %v1417 = vmul.f32 %v1415, %v1416
  %v1418 = vadd.f32 %v1335, %v1417
  %v1419 = vtanh.pop %v1418
  %v1420 = vsub.f32 1.0, %v1415
  %1422 = vrot.lane.b32.xlu0 %v1419, 64
  %v1423 = vpop.permute.xlu0 %1422
  %v1425 = vmul.f32 %v1420, %v1423
  %v1426 = vmul.f32 %v1415, %v1225
  %v1427 = vadd.f32 %v1425, %v1426
  %1429 = vrot.lane.b32.xlu0 %v1332, 64
  %v1430 = vpop.permute.xlu0 %1429
  %s1432 = scalar_lea.vmem [#allocation4], 32
  %1433 = vst.msk [vmem:[%s1432] sm:$0xff] %vm218, %v1430
  %1435 = vrot.lane.b32.xlu0 %v1427, 64
  %v1436 = vpop.permute.xlu0 %1435
  %s1438 = scalar_lea.vmem [#allocation5], 24
  %1439 = vst.msk [vmem:[%s1438] sm:$0xff] %vm218, %v1436
  %s1440 = scalar_lea.vmem [#allocation2], 80
  %v1441 = vld [vmem:[%s1440] sm:$0xff]
  %v1442 = vld [vmem:[%s1440 + $0x8] sm:$0xff]
  %v1443 = vsel %vm218, %v1430, 0
  %1445 = vmatprep.subr.mxu0 %v386
  %1446 = vmatpush1.msra.mxu0 %v385
  %1447 = vmatprep.subr.mxu0 %v388
  %1448 = vmatpush1.msra.mxu0 %v387
  %1449 = vmatprep.subr.mxu0 %v390
  %1450 = vmatpush1.msra.mxu0 %v389
  %1451 = vmatprep.subr.mxu0 %v392
  %1452 = vmatpush1.msra.mxu0 %v391
  %1453 = vmatprep.subr.mxu0 %v394
  %1454 = vmatpush1.msra.mxu0 %v393
  %1455 = vmatprep.subr.mxu0 %v396
  %1456 = vmatpush1.msra.mxu0 %v395
  %1457 = vmatprep.subr.mxu0 %v398
  %1458 = vmatpush1.msra.mxu0 %v397
  %1459 = vmatprep.subr.mxu0 %v400
  %1460 = vmatpush1.msra.mxu0 %v399
  %1461 = vmatprep.subr.mxu0 0.0
  %1462 = vmatpush1.msra.mxu0 0.0
  %1463 = vmatprep.subr.mxu0 0.0
  %1464 = vmatpush1.msra.mxu0 0.0
  %1465 = vmatprep.subr.mxu0 0.0
  %1466 = vmatpush1.msra.mxu0 0.0
  %1467 = vmatprep.subr.mxu0 0.0
  %1468 = vmatpush1.msra.mxu0 0.0
  %1469 = vmatprep.subr.mxu0 0.0
  %1470 = vmatpush1.msra.mxu0 0.0
  %1471 = vmatprep.subr.mxu0 0.0
  %1472 = vmatpush1.msra.mxu0 0.0
  %1473 = vmatprep.subr.mxu0 0.0
  %1474 = vmatpush1.msra.mxu0 0.0
  %1475 = vmatprep.subr.mxu0 0.0
  %1476 = vmatpush1.msra.mxu0 0.0
  %1477 = vmatprep.subr.mxu0 0.0
  %1478 = vmatpush1.msra.mxu0 0.0
  %1479 = vmatprep.subr.mxu0 0.0
  %1480 = vmatpush1.msra.mxu0 0.0
  %1481 = vmatprep.subr.mxu0 0.0
  %1482 = vmatpush1.msra.mxu0 0.0
  %1483 = vmatprep.subr.mxu0 0.0
  %1484 = vmatpush1.msra.mxu0 0.0
  %1485 = vmatprep.subr.mxu0 0.0
  %1486 = vmatpush1.msra.mxu0 0.0
  %1487 = vmatprep.subr.mxu0 0.0
  %1488 = vmatpush1.msra.mxu0 0.0
  %1489 = vmatprep.subr.mxu0 0.0
  %1490 = vmatpush1.msra.mxu0 0.0
  %1491 = vmatprep.subr.mxu0 0.0
  %1492 = vmatpush1.msra.mxu0 0.0
  %1493 = vmatprep.subr.mxu0 0.0
  %1494 = vmatpush1.msra.mxu0 0.0
  %1495 = vmatprep.subr.mxu0 0.0
  %1496 = vmatpush1.msra.mxu0 0.0
  %1497 = vmatprep.subr.mxu0 0.0
  %1498 = vmatpush1.msra.mxu0 0.0
  %1499 = vmatprep.subr.mxu0 0.0
  %1500 = vmatpush1.msra.mxu0 0.0
  %1501 = vmatprep.subr.mxu0 0.0
  %1502 = vmatpush1.msra.mxu0 0.0
  %1503 = vmatprep.subr.mxu0 0.0
  %1504 = vmatpush1.msra.mxu0 0.0
  %1505 = vmatprep.subr.mxu0 0.0
  %1506 = vmatpush1.msra.mxu0 0.0
  %1507 = vmatprep.subr.mxu0 0.0
  %1508 = vmatpush1.msra.mxu0 0.0
  %1509 = vmatprep.mubr.f32.mxu0 0.0
  %1510 = vmatmul.mubr.f32.gmra.mrb[0].mxu0 %v1443
  %v1511 = vpop.f32.mrb[0].mxu0
  %v1512 = vadd.f32 0.0, %v1511
  %v1513 = vpop.f32.mrb[0].mxu0
  %v1514 = vadd.f32 0.0, %v1513
  %1515 = vdwg.mxu0
  %v1516 = vadd.f32 %v1441, %v1512
  %v1517 = vxor.u32 %v1516, 2147483648
  %v1518 = vmul.f32 %v1517, 1.442695
  %v1519 = vpow.pop %v1518
  %v1520 = vadd.f32 %v1519, 1.0
  %v1521 = vrcp.pop %v1520
  %v1522 = vmul.f32 1.0, %v1521
  %v1523 = vadd.f32 %v1514, %v423
  %v1524 = vmul.f32 %v1522, %v1523
  %v1525 = vadd.f32 %v1442, %v1524
  %v1526 = vtanh.pop %v1525
  %v1527 = vsub.f32 1.0, %v1522
  %1529 = vrot.lane.b32.xlu0 %v1526, 64
  %v1530 = vpop.permute.xlu0 %1529
  %v1532 = vmul.f32 %v1527, %v1530
  %v1533 = vmul.f32 %v1522, %v1332
  %v1534 = vadd.f32 %v1532, %v1533
  %s1535 = scalar_lea.vmem [#allocation3], 32
  %v1536 = vld [vmem:[%s1535] sm:$0xff]
  %v1537 = vld [vmem:[%s1535 + $0x8] sm:$0xff]
  %v1538 = vsel %vm218, %v1436, 0
  %1540 = vmatprep.subr.mxu0 %v403
  %1541 = vmatpush1.msra.mxu0 %v402
  %1542 = vmatprep.subr.mxu0 %v405
  %1543 = vmatpush1.msra.mxu0 %v404
  %1544 = vmatprep.subr.mxu0 %v407
  %1545 = vmatpush1.msra.mxu0 %v406
  %1546 = vmatprep.subr.mxu0 %v409
  %1547 = vmatpush1.msra.mxu0 %v408
  %1548 = vmatprep.subr.mxu0 %v411
  %1549 = vmatpush1.msra.mxu0 %v410
  %1550 = vmatprep.subr.mxu0 %v413
  %1551 = vmatpush1.msra.mxu0 %v412
  %1552 = vmatprep.subr.mxu0 %v415
  %1553 = vmatpush1.msra.mxu0 %v414
  %1554 = vmatprep.subr.mxu0 %v417
  %1555 = vmatpush1.msra.mxu0 %v416
  %1556 = vmatprep.subr.mxu0 0.0
  %1557 = vmatpush1.msra.mxu0 0.0
  %1558 = vmatprep.subr.mxu0 0.0
  %1559 = vmatpush1.msra.mxu0 0.0
  %1560 = vmatprep.subr.mxu0 0.0
  %1561 = vmatpush1.msra.mxu0 0.0
  %1562 = vmatprep.subr.mxu0 0.0
  %1563 = vmatpush1.msra.mxu0 0.0
  %1564 = vmatprep.subr.mxu0 0.0
  %1565 = vmatpush1.msra.mxu0 0.0
  %1566 = vmatprep.subr.mxu0 0.0
  %1567 = vmatpush1.msra.mxu0 0.0
  %1568 = vmatprep.subr.mxu0 0.0
  %1569 = vmatpush1.msra.mxu0 0.0
  %1570 = vmatprep.subr.mxu0 0.0
  %1571 = vmatpush1.msra.mxu0 0.0
  %1572 = vmatprep.subr.mxu0 0.0
  %1573 = vmatpush1.msra.mxu0 0.0
  %1574 = vmatprep.subr.mxu0 0.0
  %1575 = vmatpush1.msra.mxu0 0.0
  %1576 = vmatprep.subr.mxu0 0.0
  %1577 = vmatpush1.msra.mxu0 0.0
  %1578 = vmatprep.subr.mxu0 0.0
  %1579 = vmatpush1.msra.mxu0 0.0
  %1580 = vmatprep.subr.mxu0 0.0
  %1581 = vmatpush1.msra.mxu0 0.0
  %1582 = vmatprep.subr.mxu0 0.0
  %1583 = vmatpush1.msra.mxu0 0.0
  %1584 = vmatprep.subr.mxu0 0.0
  %1585 = vmatpush1.msra.mxu0 0.0
  %1586 = vmatprep.subr.mxu0 0.0
  %1587 = vmatpush1.msra.mxu0 0.0
  %1588 = vmatprep.subr.mxu0 0.0
  %1589 = vmatpush1.msra.mxu0 0.0
  %1590 = vmatprep.subr.mxu0 0.0
  %1591 = vmatpush1.msra.mxu0 0.0
  %1592 = vmatprep.subr.mxu0 0.0
  %1593 = vmatpush1.msra.mxu0 0.0
  %1594 = vmatprep.subr.mxu0 0.0
  %1595 = vmatpush1.msra.mxu0 0.0
  %1596 = vmatprep.subr.mxu0 0.0
  %1597 = vmatpush1.msra.mxu0 0.0
  %1598 = vmatprep.subr.mxu0 0.0
  %1599 = vmatpush1.msra.mxu0 0.0
  %1600 = vmatprep.subr.mxu0 0.0
  %1601 = vmatpush1.msra.mxu0 0.0
  %1602 = vmatprep.subr.mxu0 0.0
  %1603 = vmatpush1.msra.mxu0 0.0
  %1604 = vmatprep.mubr.f32.mxu0 0.0
  %1605 = vmatmul.mubr.f32.gmra.mrb[0].mxu0 %v1538
  %v1606 = vpop.f32.mrb[0].mxu0
  %v1607 = vadd.f32 0.0, %v1606
  %v1608 = vpop.f32.mrb[0].mxu0
  %v1609 = vadd.f32 0.0, %v1608
  %1610 = vdwg.mxu0
  %v1611 = vadd.f32 %v1536, %v1607
  %v1612 = vxor.u32 %v1611, 2147483648
  %v1613 = vmul.f32 %v1612, 1.442695
  %v1614 = vpow.pop %v1613
  %v1615 = vadd.f32 %v1614, 1.0
  %v1616 = vrcp.pop %v1615
  %v1617 = vmul.f32 1.0, %v1616
  %v1618 = vadd.f32 %v1609, %v431
  %v1619 = vmul.f32 %v1617, %v1618
  %v1620 = vadd.f32 %v1537, %v1619
  %v1621 = vtanh.pop %v1620
  %v1622 = vsub.f32 1.0, %v1617
  %1624 = vrot.lane.b32.xlu0 %v1621, 64
  %v1625 = vpop.permute.xlu0 %1624
  %v1627 = vmul.f32 %v1622, %v1625
  %v1628 = vmul.f32 %v1617, %v1427
  %v1629 = vadd.f32 %v1627, %v1628
  %1631 = vrot.lane.b32.xlu0 %v1534, 64
  %v1632 = vpop.permute.xlu0 %1631
  %s1634 = scalar_lea.vmem [#allocation4], 40
  %1635 = vst.msk [vmem:[%s1634] sm:$0xff] %vm218, %v1632
  %1637 = vrot.lane.b32.xlu0 %v1629, 64
  %v1638 = vpop.permute.xlu0 %1637
  %s1640 = scalar_lea.vmem [#allocation5], 16
  %1641 = vst.msk [vmem:[%s1640] sm:$0xff] %vm218, %v1638
  %s1642 = scalar_lea.vmem [#allocation2], 96
  %v1643 = vld [vmem:[%s1642] sm:$0xff]
  %v1644 = vld [vmem:[%s1642 + $0x8] sm:$0xff]
  %v1645 = vsel %vm218, %v1632, 0
  %1647 = vmatprep.subr.mxu0 %v386
  %1648 = vmatpush1.msra.mxu0 %v385
  %1649 = vmatprep.subr.mxu0 %v388
  %1650 = vmatpush1.msra.mxu0 %v387
  %1651 = vmatprep.subr.mxu0 %v390
  %1652 = vmatpush1.msra.mxu0 %v389
  %1653 = vmatprep.subr.mxu0 %v392
  %1654 = vmatpush1.msra.mxu0 %v391
  %1655 = vmatprep.subr.mxu0 %v394
  %1656 = vmatpush1.msra.mxu0 %v393
  %1657 = vmatprep.subr.mxu0 %v396
  %1658 = vmatpush1.msra.mxu0 %v395
  %1659 = vmatprep.subr.mxu0 %v398
  %1660 = vmatpush1.msra.mxu0 %v397
  %1661 = vmatprep.subr.mxu0 %v400
  %1662 = vmatpush1.msra.mxu0 %v399
  %1663 = vmatprep.subr.mxu0 0.0
  %1664 = vmatpush1.msra.mxu0 0.0
  %1665 = vmatprep.subr.mxu0 0.0
  %1666 = vmatpush1.msra.mxu0 0.0
  %1667 = vmatprep.subr.mxu0 0.0
  %1668 = vmatpush1.msra.mxu0 0.0
  %1669 = vmatprep.subr.mxu0 0.0
  %1670 = vmatpush1.msra.mxu0 0.0
  %1671 = vmatprep.subr.mxu0 0.0
  %1672 = vmatpush1.msra.mxu0 0.0
  %1673 = vmatprep.subr.mxu0 0.0
  %1674 = vmatpush1.msra.mxu0 0.0
  %1675 = vmatprep.subr.mxu0 0.0
  %1676 = vmatpush1.msra.mxu0 0.0
  %1677 = vmatprep.subr.mxu0 0.0
  %1678 = vmatpush1.msra.mxu0 0.0
  %1679 = vmatprep.subr.mxu0 0.0
  %1680 = vmatpush1.msra.mxu0 0.0
  %1681 = vmatprep.subr.mxu0 0.0
  %1682 = vmatpush1.msra.mxu0 0.0
  %1683 = vmatprep.subr.mxu0 0.0
  %1684 = vmatpush1.msra.mxu0 0.0
  %1685 = vmatprep.subr.mxu0 0.0
  %1686 = vmatpush1.msra.mxu0 0.0
  %1687 = vmatprep.subr.mxu0 0.0
  %1688 = vmatpush1.msra.mxu0 0.0
  %1689 = vmatprep.subr.mxu0 0.0
  %1690 = vmatpush1.msra.mxu0 0.0
  %1691 = vmatprep.subr.mxu0 0.0
  %1692 = vmatpush1.msra.mxu0 0.0
  %1693 = vmatprep.subr.mxu0 0.0
  %1694 = vmatpush1.msra.mxu0 0.0
  %1695 = vmatprep.subr.mxu0 0.0
  %1696 = vmatpush1.msra.mxu0 0.0
  %1697 = vmatprep.subr.mxu0 0.0
  %1698 = vmatpush1.msra.mxu0 0.0
  %1699 = vmatprep.subr.mxu0 0.0
  %1700 = vmatpush1.msra.mxu0 0.0
  %1701 = vmatprep.subr.mxu0 0.0
  %1702 = vmatpush1.msra.mxu0 0.0
  %1703 = vmatprep.subr.mxu0 0.0
  %1704 = vmatpush1.msra.mxu0 0.0
  %1705 = vmatprep.subr.mxu0 0.0
  %1706 = vmatpush1.msra.mxu0 0.0
  %1707 = vmatprep.subr.mxu0 0.0
  %1708 = vmatpush1.msra.mxu0 0.0
  %1709 = vmatprep.subr.mxu0 0.0
  %1710 = vmatpush1.msra.mxu0 0.0
  %1711 = vmatprep.mubr.f32.mxu0 0.0
  %1712 = vmatmul.mubr.f32.gmra.mrb[0].mxu0 %v1645
  %v1713 = vpop.f32.mrb[0].mxu0
  %v1714 = vadd.f32 0.0, %v1713
  %v1715 = vpop.f32.mrb[0].mxu0
  %v1716 = vadd.f32 0.0, %v1715
  %1717 = vdwg.mxu0
  %v1718 = vadd.f32 %v1643, %v1714
  %v1719 = vxor.u32 %v1718, 2147483648
  %v1720 = vmul.f32 %v1719, 1.442695
  %v1721 = vpow.pop %v1720
  %v1722 = vadd.f32 %v1721, 1.0
  %v1723 = vrcp.pop %v1722
  %v1724 = vmul.f32 1.0, %v1723
  %v1725 = vadd.f32 %v1716, %v423
  %v1726 = vmul.f32 %v1724, %v1725
  %v1727 = vadd.f32 %v1644, %v1726
  %v1728 = vtanh.pop %v1727
  %v1729 = vsub.f32 1.0, %v1724
  %1731 = vrot.lane.b32.xlu0 %v1728, 64
  %v1732 = vpop.permute.xlu0 %1731
  %v1734 = vmul.f32 %v1729, %v1732
  %v1735 = vmul.f32 %v1724, %v1534
  %v1736 = vadd.f32 %v1734, %v1735
  %s1737 = scalar_lea.vmem [#allocation3], 16
  %v1738 = vld [vmem:[%s1737] sm:$0xff]
  %v1739 = vld [vmem:[%s1737 + $0x8] sm:$0xff]
  %v1740 = vsel %vm218, %v1638, 0
  %1742 = vmatprep.subr.mxu0 %v403
  %1743 = vmatpush1.msra.mxu0 %v402
  %1744 = vmatprep.subr.mxu0 %v405
  %1745 = vmatpush1.msra.mxu0 %v404
  %1746 = vmatprep.subr.mxu0 %v407
  %1747 = vmatpush1.msra.mxu0 %v406
  %1748 = vmatprep.subr.mxu0 %v409
  %1749 = vmatpush1.msra.mxu0 %v408
  %1750 = vmatprep.subr.mxu0 %v411
  %1751 = vmatpush1.msra.mxu0 %v410
  %1752 = vmatprep.subr.mxu0 %v413
  %1753 = vmatpush1.msra.mxu0 %v412
  %1754 = vmatprep.subr.mxu0 %v415
  %1755 = vmatpush1.msra.mxu0 %v414
  %1756 = vmatprep.subr.mxu0 %v417
  %1757 = vmatpush1.msra.mxu0 %v416
  %1758 = vmatprep.subr.mxu0 0.0
  %1759 = vmatpush1.msra.mxu0 0.0
  %1760 = vmatprep.subr.mxu0 0.0
  %1761 = vmatpush1.msra.mxu0 0.0
  %1762 = vmatprep.subr.mxu0 0.0
  %1763 = vmatpush1.msra.mxu0 0.0
  %1764 = vmatprep.subr.mxu0 0.0
  %1765 = vmatpush1.msra.mxu0 0.0
  %1766 = vmatprep.subr.mxu0 0.0
  %1767 = vmatpush1.msra.mxu0 0.0
  %1768 = vmatprep.subr.mxu0 0.0
  %1769 = vmatpush1.msra.mxu0 0.0
  %1770 = vmatprep.subr.mxu0 0.0
  %1771 = vmatpush1.msra.mxu0 0.0
  %1772 = vmatprep.subr.mxu0 0.0
  %1773 = vmatpush1.msra.mxu0 0.0
  %1774 = vmatprep.subr.mxu0 0.0
  %1775 = vmatpush1.msra.mxu0 0.0
  %1776 = vmatprep.subr.mxu0 0.0
  %1777 = vmatpush1.msra.mxu0 0.0
  %1778 = vmatprep.subr.mxu0 0.0
  %1779 = vmatpush1.msra.mxu0 0.0
  %1780 = vmatprep.subr.mxu0 0.0
  %1781 = vmatpush1.msra.mxu0 0.0
  %1782 = vmatprep.subr.mxu0 0.0
  %1783 = vmatpush1.msra.mxu0 0.0
  %1784 = vmatprep.subr.mxu0 0.0
  %1785 = vmatpush1.msra.mxu0 0.0
  %1786 = vmatprep.subr.mxu0 0.0
  %1787 = vmatpush1.msra.mxu0 0.0
  %1788 = vmatprep.subr.mxu0 0.0
  %1789 = vmatpush1.msra.mxu0 0.0
  %1790 = vmatprep.subr.mxu0 0.0
  %1791 = vmatpush1.msra.mxu0 0.0
  %1792 = vmatprep.subr.mxu0 0.0
  %1793 = vmatpush1.msra.mxu0 0.0
  %1794 = vmatprep.subr.mxu0 0.0
  %1795 = vmatpush1.msra.mxu0 0.0
  %1796 = vmatprep.subr.mxu0 0.0
  %1797 = vmatpush1.msra.mxu0 0.0
  %1798 = vmatprep.subr.mxu0 0.0
  %1799 = vmatpush1.msra.mxu0 0.0
  %1800 = vmatprep.subr.mxu0 0.0
  %1801 = vmatpush1.msra.mxu0 0.0
  %1802 = vmatprep.subr.mxu0 0.0
  %1803 = vmatpush1.msra.mxu0 0.0
  %1804 = vmatprep.subr.mxu0 0.0
  %1805 = vmatpush1.msra.mxu0 0.0
  %1806 = vmatprep.mubr.f32.mxu0 0.0
  %1807 = vmatmul.mubr.f32.gmra.mrb[0].mxu0 %v1740
  %v1808 = vpop.f32.mrb[0].mxu0
  %v1809 = vadd.f32 0.0, %v1808
  %v1810 = vpop.f32.mrb[0].mxu0
  %v1811 = vadd.f32 0.0, %v1810
  %1812 = vdwg.mxu0
  %v1813 = vadd.f32 %v1738, %v1809
  %v1814 = vxor.u32 %v1813, 2147483648
  %v1815 = vmul.f32 %v1814, 1.442695
  %v1816 = vpow.pop %v1815
  %v1817 = vadd.f32 %v1816, 1.0
  %v1818 = vrcp.pop %v1817
  %v1819 = vmul.f32 1.0, %v1818
  %v1820 = vadd.f32 %v1811, %v431
  %v1821 = vmul.f32 %v1819, %v1820
  %v1822 = vadd.f32 %v1739, %v1821
  %v1823 = vtanh.pop %v1822
  %v1824 = vsub.f32 1.0, %v1819
  %1826 = vrot.lane.b32.xlu0 %v1823, 64
  %v1827 = vpop.permute.xlu0 %1826
  %v1829 = vmul.f32 %v1824, %v1827
  %v1830 = vmul.f32 %v1819, %v1629
  %v1831 = vadd.f32 %v1829, %v1830
  %1833 = vrot.lane.b32.xlu0 %v1736, 64
  %v1834 = vpop.permute.xlu0 %1833
  %s1836 = scalar_lea.vmem [#allocation4], 48
  %1837 = vst.msk [vmem:[%s1836] sm:$0xff] %vm218, %v1834
  %1839 = vrot.lane.b32.xlu0 %v1831, 64
  %v1840 = vpop.permute.xlu0 %1839
  %s1842 = scalar_lea.vmem [#allocation5], 8
  %1843 = vst.msk [vmem:[%s1842] sm:$0xff] %vm218, %v1840
  %s1844 = scalar_lea.vmem [#allocation2], 112
  %v1845 = vld [vmem:[%s1844] sm:$0xff]
  %v1846 = vld [vmem:[%s1844 + $0x8] sm:$0xff]
  %v1847 = vsel %vm218, %v1834, 0
  %1849 = vmatprep.subr.mxu0 %v386
  %1850 = vmatpush1.msra.mxu0 %v385
  %1851 = vmatprep.subr.mxu0 %v388
  %1852 = vmatpush1.msra.mxu0 %v387
  %1853 = vmatprep.subr.mxu0 %v390
  %1854 = vmatpush1.msra.mxu0 %v389
  %1855 = vmatprep.subr.mxu0 %v392
  %1856 = vmatpush1.msra.mxu0 %v391
  %1857 = vmatprep.subr.mxu0 %v394
  %1858 = vmatpush1.msra.mxu0 %v393
  %1859 = vmatprep.subr.mxu0 %v396
  %1860 = vmatpush1.msra.mxu0 %v395
  %1861 = vmatprep.subr.mxu0 %v398
  %1862 = vmatpush1.msra.mxu0 %v397
  %1863 = vmatprep.subr.mxu0 %v400
  %1864 = vmatpush1.msra.mxu0 %v399
  %1865 = vmatprep.subr.mxu0 0.0
  %1866 = vmatpush1.msra.mxu0 0.0
  %1867 = vmatprep.subr.mxu0 0.0
  %1868 = vmatpush1.msra.mxu0 0.0
  %1869 = vmatprep.subr.mxu0 0.0
  %1870 = vmatpush1.msra.mxu0 0.0
  %1871 = vmatprep.subr.mxu0 0.0
  %1872 = vmatpush1.msra.mxu0 0.0
  %1873 = vmatprep.subr.mxu0 0.0
  %1874 = vmatpush1.msra.mxu0 0.0
  %1875 = vmatprep.subr.mxu0 0.0
  %1876 = vmatpush1.msra.mxu0 0.0
  %1877 = vmatprep.subr.mxu0 0.0
  %1878 = vmatpush1.msra.mxu0 0.0
  %1879 = vmatprep.subr.mxu0 0.0
  %1880 = vmatpush1.msra.mxu0 0.0
  %1881 = vmatprep.subr.mxu0 0.0
  %1882 = vmatpush1.msra.mxu0 0.0
  %1883 = vmatprep.subr.mxu0 0.0
  %1884 = vmatpush1.msra.mxu0 0.0
  %1885 = vmatprep.subr.mxu0 0.0
  %1886 = vmatpush1.msra.mxu0 0.0
  %1887 = vmatprep.subr.mxu0 0.0
  %1888 = vmatpush1.msra.mxu0 0.0
  %1889 = vmatprep.subr.mxu0 0.0
  %1890 = vmatpush1.msra.mxu0 0.0
  %1891 = vmatprep.subr.mxu0 0.0
  %1892 = vmatpush1.msra.mxu0 0.0
  %1893 = vmatprep.subr.mxu0 0.0
  %1894 = vmatpush1.msra.mxu0 0.0
  %1895 = vmatprep.subr.mxu0 0.0
  %1896 = vmatpush1.msra.mxu0 0.0
  %1897 = vmatprep.subr.mxu0 0.0
  %1898 = vmatpush1.msra.mxu0 0.0
  %1899 = vmatprep.subr.mxu0 0.0
  %1900 = vmatpush1.msra.mxu0 0.0
  %1901 = vmatprep.subr.mxu0 0.0
  %1902 = vmatpush1.msra.mxu0 0.0
  %1903 = vmatprep.subr.mxu0 0.0
  %1904 = vmatpush1.msra.mxu0 0.0
  %1905 = vmatprep.subr.mxu0 0.0
  %1906 = vmatpush1.msra.mxu0 0.0
  %1907 = vmatprep.subr.mxu0 0.0
  %1908 = vmatpush1.msra.mxu0 0.0
  %1909 = vmatprep.subr.mxu0 0.0
  %1910 = vmatpush1.msra.mxu0 0.0
  %1911 = vmatprep.subr.mxu0 0.0
  %1912 = vmatpush1.msra.mxu0 0.0
  %1913 = vmatprep.mubr.f32.mxu0 0.0
  %1914 = vmatmul.mubr.f32.gmra.mrb[0].mxu0 %v1847
  %v1915 = vpop.f32.mrb[0].mxu0
  %v1916 = vadd.f32 0.0, %v1915
  %v1917 = vpop.f32.mrb[0].mxu0
  %v1918 = vadd.f32 0.0, %v1917
  %1919 = vdwg.mxu0
  %v1920 = vadd.f32 %v1845, %v1916
  %v1921 = vxor.u32 %v1920, 2147483648
  %v1922 = vmul.f32 %v1921, 1.442695
  %v1923 = vpow.pop %v1922
  %v1924 = vadd.f32 %v1923, 1.0
  %v1925 = vrcp.pop %v1924
  %v1926 = vmul.f32 1.0, %v1925
  %v1927 = vadd.f32 %v1918, %v423
  %v1928 = vmul.f32 %v1926, %v1927
  %v1929 = vadd.f32 %v1846, %v1928
  %v1930 = vtanh.pop %v1929
  %v1931 = vsub.f32 1.0, %v1926
  %1933 = vrot.lane.b32.xlu0 %v1930, 64
  %v1934 = vpop.permute.xlu0 %1933
  %v1936 = vmul.f32 %v1931, %v1934
  %v1937 = vmul.f32 %v1926, %v1736
  %v1938 = vadd.f32 %v1936, %v1937
  %v1939 = vld [vmem:[#allocation3] sm:$0xff]
  %v1940 = vld [vmem:[#allocation3 + $0x8] sm:$0xff]
  %v1941 = vsel %vm218, %v1840, 0
  %1943 = vmatprep.subr.mxu0 %v403
  %1944 = vmatpush1.msra.mxu0 %v402
  %1945 = vmatprep.subr.mxu0 %v405
  %1946 = vmatpush1.msra.mxu0 %v404
  %1947 = vmatprep.subr.mxu0 %v407
  %1948 = vmatpush1.msra.mxu0 %v406
  %1949 = vmatprep.subr.mxu0 %v409
  %1950 = vmatpush1.msra.mxu0 %v408
  %1951 = vmatprep.subr.mxu0 %v411
  %1952 = vmatpush1.msra.mxu0 %v410
  %1953 = vmatprep.subr.mxu0 %v413
  %1954 = vmatpush1.msra.mxu0 %v412
  %1955 = vmatprep.subr.mxu0 %v415
  %1956 = vmatpush1.msra.mxu0 %v414
  %1957 = vmatprep.subr.mxu0 %v417
  %1958 = vmatpush1.msra.mxu0 %v416
  %1959 = vmatprep.subr.mxu0 0.0
  %1960 = vmatpush1.msra.mxu0 0.0
  %1961 = vmatprep.subr.mxu0 0.0
  %1962 = vmatpush1.msra.mxu0 0.0
  %1963 = vmatprep.subr.mxu0 0.0
  %1964 = vmatpush1.msra.mxu0 0.0
  %1965 = vmatprep.subr.mxu0 0.0
  %1966 = vmatpush1.msra.mxu0 0.0
  %1967 = vmatprep.subr.mxu0 0.0
  %1968 = vmatpush1.msra.mxu0 0.0
  %1969 = vmatprep.subr.mxu0 0.0
  %1970 = vmatpush1.msra.mxu0 0.0
  %1971 = vmatprep.subr.mxu0 0.0
  %1972 = vmatpush1.msra.mxu0 0.0
  %1973 = vmatprep.subr.mxu0 0.0
  %1974 = vmatpush1.msra.mxu0 0.0
  %1975 = vmatprep.subr.mxu0 0.0
  %1976 = vmatpush1.msra.mxu0 0.0
  %1977 = vmatprep.subr.mxu0 0.0
  %1978 = vmatpush1.msra.mxu0 0.0
  %1979 = vmatprep.subr.mxu0 0.0
  %1980 = vmatpush1.msra.mxu0 0.0
  %1981 = vmatprep.subr.mxu0 0.0
  %1982 = vmatpush1.msra.mxu0 0.0
  %1983 = vmatprep.subr.mxu0 0.0
  %1984 = vmatpush1.msra.mxu0 0.0
  %1985 = vmatprep.subr.mxu0 0.0
  %1986 = vmatpush1.msra.mxu0 0.0
  %1987 = vmatprep.subr.mxu0 0.0
  %1988 = vmatpush1.msra.mxu0 0.0
  %1989 = vmatprep.subr.mxu0 0.0
  %1990 = vmatpush1.msra.mxu0 0.0
  %1991 = vmatprep.subr.mxu0 0.0
  %1992 = vmatpush1.msra.mxu0 0.0
  %1993 = vmatprep.subr.mxu0 0.0
  %1994 = vmatpush1.msra.mxu0 0.0
  %1995 = vmatprep.subr.mxu0 0.0
  %1996 = vmatpush1.msra.mxu0 0.0
  %1997 = vmatprep.subr.mxu0 0.0
  %1998 = vmatpush1.msra.mxu0 0.0
  %1999 = vmatprep.subr.mxu0 0.0
  %2000 = vmatpush1.msra.mxu0 0.0
  %2001 = vmatprep.subr.mxu0 0.0
  %2002 = vmatpush1.msra.mxu0 0.0
  %2003 = vmatprep.subr.mxu0 0.0
  %2004 = vmatpush1.msra.mxu0 0.0
  %2005 = vmatprep.subr.mxu0 0.0
  %2006 = vmatpush1.msra.mxu0 0.0
  %2007 = vmatprep.mubr.f32.mxu0 0.0
  %2008 = vmatmul.mubr.f32.gmra.mrb[0].mxu0 %v1941
  %v2009 = vpop.f32.mrb[0].mxu0
  %v2010 = vadd.f32 0.0, %v2009
  %v2011 = vpop.f32.mrb[0].mxu0
  %v2012 = vadd.f32 0.0, %v2011
  %2013 = vdwg.mxu0
  %v2014 = vadd.f32 %v1939, %v2010
  %v2015 = vxor.u32 %v2014, 2147483648
  %v2016 = vmul.f32 %v2015, 1.442695
  %v2017 = vpow.pop %v2016
  %v2018 = vadd.f32 %v2017, 1.0
  %v2019 = vrcp.pop %v2018
  %v2020 = vmul.f32 1.0, %v2019
  %v2021 = vadd.f32 %v2012, %v431
  %v2022 = vmul.f32 %v2020, %v2021
  %v2023 = vadd.f32 %v1940, %v2022
  %v2024 = vtanh.pop %v2023
  %v2025 = vsub.f32 1.0, %v2020
  %2027 = vrot.lane.b32.xlu0 %v2024, 64
  %v2028 = vpop.permute.xlu0 %2027
  %v2030 = vmul.f32 %v2025, %v2028
  %v2031 = vmul.f32 %v2020, %v1831
  %v2032 = vadd.f32 %v2030, %v2031
  %2034 = vrot.lane.b32.xlu0 %v1938, 64
  %v2035 = vpop.permute.xlu0 %2034
  %s2037 = scalar_lea.vmem [#allocation4], 56
  %2038 = vst.msk [vmem:[%s2037] sm:$0xff] %vm218, %v2035
  %2040 = vrot.lane.b32.xlu0 %v2032, 64
  %v2041 = vpop.permute.xlu0 %2040
  %2043 = vst.msk [vmem:[#allocation5] sm:$0xff] %vm218, %v2041
  %v2044 = vld [vmem:[#allocation4] sm:$0xff]
  %v2045 = vld [vmem:[#allocation4 + $0x8] sm:$0xff]
  %v2046 = vld [vmem:[#allocation4 + $0x10] sm:$0xff]
  %v2047 = vld [vmem:[#allocation4 + $0x18] sm:$0xff]
  %v2048 = vld [vmem:[#allocation4 + $0x20] sm:$0xff]
  %v2049 = vld [vmem:[#allocation4 + $0x28] sm:$0xff]
  %v2050 = vld [vmem:[#allocation4 + $0x30] sm:$0xff]
  %v2051 = vld [vmem:[#allocation4 + $0x38] sm:$0xff]
  %v2052 = vld [vmem:[#allocation5] sm:$0xff]
  %v2053 = vld [vmem:[#allocation5 + $0x8] sm:$0xff]
  %v2054 = vld [vmem:[#allocation5 + $0x10] sm:$0xff]
  %v2055 = vld [vmem:[#allocation5 + $0x18] sm:$0xff]
  %v2056 = vld [vmem:[#allocation5 + $0x20] sm:$0xff]
  %v2057 = vld [vmem:[#allocation5 + $0x28] sm:$0xff]
  %v2058 = vld [vmem:[#allocation5 + $0x30] sm:$0xff]
  %v2059 = vld [vmem:[#allocation5 + $0x38] sm:$0xff]
  %s2060 = scalar_lea.vmem %s5, 256
  %v2061 = vld [vmem:[%s2060] sm:$0xff]
  %v2062 = vld [vmem:[%s2060 + $0x8] sm:$0xff]
  %v2063 = vld [vmem:[%s2060 + $0x10] sm:$0xff]
  %v2064 = vld [vmem:[%s2060 + $0x18] sm:$0xff]
  %v2065 = vld [vmem:[%s2060 + $0x20] sm:$0xff]
  %v2066 = vld [vmem:[%s2060 + $0x28] sm:$0xff]
  %v2067 = vld [vmem:[%s2060 + $0x30] sm:$0xff]
  %v2068 = vld [vmem:[%s2060 + $0x38] sm:$0xff]
  %v2069 = vld [vmem:[%s2060 + $0x40] sm:$0xff]
  %v2070 = vld [vmem:[%s2060 + $0x48] sm:$0xff]
  %v2071 = vld [vmem:[%s2060 + $0x50] sm:$0xff]
  %v2072 = vld [vmem:[%s2060 + $0x58] sm:$0xff]
  %v2073 = vld [vmem:[%s2060 + $0x60] sm:$0xff]
  %v2074 = vld [vmem:[%s2060 + $0x68] sm:$0xff]
  %v2075 = vld [vmem:[%s2060 + $0x70] sm:$0xff]
  %v2076 = vld [vmem:[%s2060 + $0x78] sm:$0xff]
  %v2077 = vld [vmem:[%s2060 + $0x80] sm:$0xff]
  %v2078 = vld [vmem:[%s2060 + $0x88] sm:$0xff]
  %v2079 = vld [vmem:[%s2060 + $0x90] sm:$0xff]
  %v2080 = vld [vmem:[%s2060 + $0x98] sm:$0xff]
  %v2081 = vld [vmem:[%s2060 + $0xa0] sm:$0xff]
  %v2082 = vld [vmem:[%s2060 + $0xa8] sm:$0xff]
  %v2083 = vld [vmem:[%s2060 + $0xb0] sm:$0xff]
  %v2084 = vld [vmem:[%s2060 + $0xb8] sm:$0xff]
  %v2085 = vld [vmem:[%s2060 + $0xc0] sm:$0xff]
  %v2086 = vld [vmem:[%s2060 + $0xc8] sm:$0xff]
  %v2087 = vld [vmem:[%s2060 + $0xd0] sm:$0xff]
  %v2088 = vld [vmem:[%s2060 + $0xd8] sm:$0xff]
  %v2089 = vld [vmem:[%s2060 + $0xe0] sm:$0xff]
  %v2090 = vld [vmem:[%s2060 + $0xe8] sm:$0xff]
  %v2091 = vld [vmem:[%s2060 + $0xf0] sm:$0xff]
  %v2092 = vld [vmem:[%s2060 + $0xf8] sm:$0xff]
  %v2094 = vsel %vm218, %v2052, 0
  %v2097 = vsel %vm218, %v2053, 0
  %v2100 = vsel %vm218, %v2054, 0
  %v2103 = vsel %vm218, %v2055, 0
  %v2106 = vsel %vm218, %v2056, 0
  %v2109 = vsel %vm218, %v2057, 0
  %v2112 = vsel %vm218, %v2058, 0
  %v2115 = vsel %vm218, %v2059, 0
  %2117 = vmatprep.subr.mxu0 %v2078
  %2118 = vmatpush1.msra.mxu0 %v2077
  %2119 = vmatprep.subr.mxu0 %v2080
  %2120 = vmatpush1.msra.mxu0 %v2079
  %2121 = vmatprep.subr.mxu0 %v2082
  %2122 = vmatpush1.msra.mxu0 %v2081
  %2123 = vmatprep.subr.mxu0 %v2084
  %2124 = vmatpush1.msra.mxu0 %v2083
  %2125 = vmatprep.subr.mxu0 %v2086
  %2126 = vmatpush1.msra.mxu0 %v2085
  %2127 = vmatprep.subr.mxu0 %v2088
  %2128 = vmatpush1.msra.mxu0 %v2087
  %2129 = vmatprep.subr.mxu0 %v2090
  %2130 = vmatpush1.msra.mxu0 %v2089
  %2131 = vmatprep.subr.mxu0 %v2092
  %2132 = vmatpush1.msra.mxu0 %v2091
  %2133 = vmatprep.subr.mxu0 0.0
  %2134 = vmatpush1.msra.mxu0 0.0
  %2135 = vmatprep.subr.mxu0 0.0
  %2136 = vmatpush1.msra.mxu0 0.0
  %2137 = vmatprep.subr.mxu0 0.0
  %2138 = vmatpush1.msra.mxu0 0.0
  %2139 = vmatprep.subr.mxu0 0.0
  %2140 = vmatpush1.msra.mxu0 0.0
  %2141 = vmatprep.subr.mxu0 0.0
  %2142 = vmatpush1.msra.mxu0 0.0
  %2143 = vmatprep.subr.mxu0 0.0
  %2144 = vmatpush1.msra.mxu0 0.0
  %2145 = vmatprep.subr.mxu0 0.0
  %2146 = vmatpush1.msra.mxu0 0.0
  %2147 = vmatprep.subr.mxu0 0.0
  %2148 = vmatpush1.msra.mxu0 0.0
  %2149 = vmatprep.subr.mxu0 0.0
  %2150 = vmatpush1.msra.mxu0 0.0
  %2151 = vmatprep.subr.mxu0 0.0
  %2152 = vmatpush1.msra.mxu0 0.0
  %2153 = vmatprep.subr.mxu0 0.0
  %2154 = vmatpush1.msra.mxu0 0.0
  %2155 = vmatprep.subr.mxu0 0.0
  %2156 = vmatpush1.msra.mxu0 0.0
  %2157 = vmatprep.subr.mxu0 0.0
  %2158 = vmatpush1.msra.mxu0 0.0
  %2159 = vmatprep.subr.mxu0 0.0
  %2160 = vmatpush1.msra.mxu0 0.0
  %2161 = vmatprep.subr.mxu0 0.0
  %2162 = vmatpush1.msra.mxu0 0.0
  %2163 = vmatprep.subr.mxu0 0.0
  %2164 = vmatpush1.msra.mxu0 0.0
  %2165 = vmatprep.subr.mxu0 0.0
  %2166 = vmatpush1.msra.mxu0 0.0
  %2167 = vmatprep.subr.mxu0 0.0
  %2168 = vmatpush1.msra.mxu0 0.0
  %2169 = vmatprep.subr.mxu0 0.0
  %2170 = vmatpush1.msra.mxu0 0.0
  %2171 = vmatprep.subr.mxu0 0.0
  %2172 = vmatpush1.msra.mxu0 0.0
  %2173 = vmatprep.subr.mxu0 0.0
  %2174 = vmatpush1.msra.mxu0 0.0
  %2175 = vmatprep.subr.mxu0 0.0
  %2176 = vmatpush1.msra.mxu0 0.0
  %2177 = vmatprep.subr.mxu0 0.0
  %2178 = vmatpush1.msra.mxu0 0.0
  %2179 = vmatprep.subr.mxu0 0.0
  %2180 = vmatpush1.msra.mxu0 0.0
  %2181 = vmatprep.mubr.f32.mxu0 0.0
  %2182 = vmatmul.mubr.f32.gmra.mrb[0].mxu0 %v2094
  %v2183 = vpop.f32.mrb[0].mxu0
  %v2184 = vadd.f32 0.0, %v2183
  %v2185 = vpop.f32.mrb[0].mxu0
  %v2186 = vadd.f32 0.0, %v2185
  %2187 = vmatprep.mubr.f32.mxu0 0.0
  %2188 = vmatmul.mubr.f32.gmra.mrb[0].mxu0 %v2097
  %v2189 = vpop.f32.mrb[0].mxu0
  %v2190 = vadd.f32 0.0, %v2189
  %v2191 = vpop.f32.mrb[0].mxu0
  %v2192 = vadd.f32 0.0, %v2191
  %2193 = vmatprep.mubr.f32.mxu0 0.0
  %2194 = vmatmul.mubr.f32.gmra.mrb[0].mxu0 %v2100
  %v2195 = vpop.f32.mrb[0].mxu0
  %v2196 = vadd.f32 0.0, %v2195
  %v2197 = vpop.f32.mrb[0].mxu0
  %v2198 = vadd.f32 0.0, %v2197
  %2199 = vmatprep.mubr.f32.mxu0 0.0
  %2200 = vmatmul.mubr.f32.gmra.mrb[0].mxu0 %v2103
  %v2201 = vpop.f32.mrb[0].mxu0
  %v2202 = vadd.f32 0.0, %v2201
  %v2203 = vpop.f32.mrb[0].mxu0
  %v2204 = vadd.f32 0.0, %v2203
  %2205 = vmatprep.mubr.f32.mxu0 0.0
  %2206 = vmatmul.mubr.f32.gmra.mrb[0].mxu0 %v2106
  %v2207 = vpop.f32.mrb[0].mxu0
  %v2208 = vadd.f32 0.0, %v2207
  %v2209 = vpop.f32.mrb[0].mxu0
  %v2210 = vadd.f32 0.0, %v2209
  %2211 = vmatprep.mubr.f32.mxu0 0.0
  %2212 = vmatmul.mubr.f32.gmra.mrb[0].mxu0 %v2109
  %v2213 = vpop.f32.mrb[0].mxu0
  %v2214 = vadd.f32 0.0, %v2213
  %v2215 = vpop.f32.mrb[0].mxu0
  %v2216 = vadd.f32 0.0, %v2215
  %2217 = vmatprep.mubr.f32.mxu0 0.0
  %2218 = vmatmul.mubr.f32.gmra.mrb[0].mxu0 %v2112
  %v2219 = vpop.f32.mrb[0].mxu0
  %v2220 = vadd.f32 0.0, %v2219
  %v2221 = vpop.f32.mrb[0].mxu0
  %v2222 = vadd.f32 0.0, %v2221
  %2223 = vmatprep.mubr.f32.mxu0 0.0
  %2224 = vmatmul.mubr.f32.gmra.mrb[0].mxu0 %v2115
  %v2225 = vpop.f32.mrb[0].mxu0
  %v2226 = vadd.f32 0.0, %v2225
  %v2227 = vpop.f32.mrb[0].mxu0
  %v2228 = vadd.f32 0.0, %v2227
  %2229 = vdwg.mxu0
  %v2231 = vsel %vm218, %v2044, 0
  %v2234 = vsel %vm218, %v2045, 0
  %v2237 = vsel %vm218, %v2046, 0
  %v2240 = vsel %vm218, %v2047, 0
  %v2243 = vsel %vm218, %v2048, 0
  %v2246 = vsel %vm218, %v2049, 0
  %v2249 = vsel %vm218, %v2050, 0
  %v2252 = vsel %vm218, %v2051, 0
  %2254 = vmatprep.subr.mxu0 %v2062
  %2255 = vmatpush1.msra.mxu0 %v2061
  %2256 = vmatprep.subr.mxu0 %v2064
  %2257 = vmatpush1.msra.mxu0 %v2063
  %2258 = vmatprep.subr.mxu0 %v2066
  %2259 = vmatpush1.msra.mxu0 %v2065
  %2260 = vmatprep.subr.mxu0 %v2068
  %2261 = vmatpush1.msra.mxu0 %v2067
  %2262 = vmatprep.subr.mxu0 %v2070
  %2263 = vmatpush1.msra.mxu0 %v2069
  %2264 = vmatprep.subr.mxu0 %v2072
  %2265 = vmatpush1.msra.mxu0 %v2071
  %2266 = vmatprep.subr.mxu0 %v2074
  %2267 = vmatpush1.msra.mxu0 %v2073
  %2268 = vmatprep.subr.mxu0 %v2076
  %2269 = vmatpush1.msra.mxu0 %v2075
  %2270 = vmatprep.subr.mxu0 0.0
  %2271 = vmatpush1.msra.mxu0 0.0
  %2272 = vmatprep.subr.mxu0 0.0
  %2273 = vmatpush1.msra.mxu0 0.0
  %2274 = vmatprep.subr.mxu0 0.0
  %2275 = vmatpush1.msra.mxu0 0.0
  %2276 = vmatprep.subr.mxu0 0.0
  %2277 = vmatpush1.msra.mxu0 0.0
  %2278 = vmatprep.subr.mxu0 0.0
  %2279 = vmatpush1.msra.mxu0 0.0
  %2280 = vmatprep.subr.mxu0 0.0
  %2281 = vmatpush1.msra.mxu0 0.0
  %2282 = vmatprep.subr.mxu0 0.0
  %2283 = vmatpush1.msra.mxu0 0.0
  %2284 = vmatprep.subr.mxu0 0.0
  %2285 = vmatpush1.msra.mxu0 0.0
  %2286 = vmatprep.subr.mxu0 0.0
  %2287 = vmatpush1.msra.mxu0 0.0
  %2288 = vmatprep.subr.mxu0 0.0
  %2289 = vmatpush1.msra.mxu0 0.0
  %2290 = vmatprep.subr.mxu0 0.0
  %2291 = vmatpush1.msra.mxu0 0.0
  %2292 = vmatprep.subr.mxu0 0.0
  %2293 = vmatpush1.msra.mxu0 0.0
  %2294 = vmatprep.subr.mxu0 0.0
  %2295 = vmatpush1.msra.mxu0 0.0
  %2296 = vmatprep.subr.mxu0 0.0
  %2297 = vmatpush1.msra.mxu0 0.0
  %2298 = vmatprep.subr.mxu0 0.0
  %2299 = vmatpush1.msra.mxu0 0.0
  %2300 = vmatprep.subr.mxu0 0.0
  %2301 = vmatpush1.msra.mxu0 0.0
  %2302 = vmatprep.subr.mxu0 0.0
  %2303 = vmatpush1.msra.mxu0 0.0
  %2304 = vmatprep.subr.mxu0 0.0
  %2305 = vmatpush1.msra.mxu0 0.0
  %2306 = vmatprep.subr.mxu0 0.0
  %2307 = vmatpush1.msra.mxu0 0.0
  %2308 = vmatprep.subr.mxu0 0.0
  %2309 = vmatpush1.msra.mxu0 0.0
  %2310 = vmatprep.subr.mxu0 0.0
  %2311 = vmatpush1.msra.mxu0 0.0
  %2312 = vmatprep.subr.mxu0 0.0
  %2313 = vmatpush1.msra.mxu0 0.0
  %2314 = vmatprep.subr.mxu0 0.0
  %2315 = vmatpush1.msra.mxu0 0.0
  %2316 = vmatprep.subr.mxu0 0.0
  %2317 = vmatpush1.msra.mxu0 0.0
  %2318 = vmatprep.mubr.f32.mxu0 0.0
  %2319 = vmatmul.mubr.f32.gmra.mrb[0].mxu0 %v2231
  %v2320 = vpop.f32.mrb[0].mxu0
  %v2321 = vadd.f32 %v2184, %v2320
  %v2322 = vpop.f32.mrb[0].mxu0
  %v2323 = vadd.f32 %v2186, %v2322
  %2324 = vmatprep.mubr.f32.mxu0 0.0
  %2325 = vmatmul.mubr.f32.gmra.mrb[0].mxu0 %v2234
  %v2326 = vpop.f32.mrb[0].mxu0
  %v2327 = vadd.f32 %v2190, %v2326
  %v2328 = vpop.f32.mrb[0].mxu0
  %v2329 = vadd.f32 %v2192, %v2328
  %2330 = vmatprep.mubr.f32.mxu0 0.0
  %2331 = vmatmul.mubr.f32.gmra.mrb[0].mxu0 %v2237
  %v2332 = vpop.f32.mrb[0].mxu0
  %v2333 = vadd.f32 %v2196, %v2332
  %v2334 = vpop.f32.mrb[0].mxu0
  %v2335 = vadd.f32 %v2198, %v2334
  %2336 = vmatprep.mubr.f32.mxu0 0.0
  %2337 = vmatmul.mubr.f32.gmra.mrb[0].mxu0 %v2240
  %v2338 = vpop.f32.mrb[0].mxu0
  %v2339 = vadd.f32 %v2202, %v2338
  %v2340 = vpop.f32.mrb[0].mxu0
  %v2341 = vadd.f32 %v2204, %v2340
  %2342 = vmatprep.mubr.f32.mxu0 0.0
  %2343 = vmatmul.mubr.f32.gmra.mrb[0].mxu0 %v2243
  %v2344 = vpop.f32.mrb[0].mxu0
  %v2345 = vadd.f32 %v2208, %v2344
  %v2346 = vpop.f32.mrb[0].mxu0
  %v2347 = vadd.f32 %v2210, %v2346
  %2348 = vmatprep.mubr.f32.mxu0 0.0
  %2349 = vmatmul.mubr.f32.gmra.mrb[0].mxu0 %v2246
  %v2350 = vpop.f32.mrb[0].mxu0
  %v2351 = vadd.f32 %v2214, %v2350
  %v2352 = vpop.f32.mrb[0].mxu0
  %v2353 = vadd.f32 %v2216, %v2352
  %2354 = vmatprep.mubr.f32.mxu0 0.0
  %2355 = vmatmul.mubr.f32.gmra.mrb[0].mxu0 %v2249
  %v2356 = vpop.f32.mrb[0].mxu0
  %v2357 = vadd.f32 %v2220, %v2356
  %v2358 = vpop.f32.mrb[0].mxu0
  %v2359 = vadd.f32 %v2222, %v2358
  %2360 = vmatprep.mubr.f32.mxu0 0.0
  %2361 = vmatmul.mubr.f32.gmra.mrb[0].mxu0 %v2252
  %v2362 = vpop.f32.mrb[0].mxu0
  %v2363 = vadd.f32 %v2226, %v2362
  %v2364 = vpop.f32.mrb[0].mxu0
  %v2365 = vadd.f32 %v2228, %v2364
  %2366 = vdwg.mxu0
  %s2367 = scalar_lea.vmem %s6, 2
  %v2368 = vld [vmem:[%s2367] sm:$0x3]
  %v2370 = vlaneseq
  %v2371 = vshrl.u32 %v2370, 7
  %v2372 = vsub.s32 0, %v2371
  %v2373 = vrot.slane %v2368, %v2372
  %v2374 = vlaneseq
  %v2375 = vshrl.u32 %v2374, 7
  %v2376 = vsub.s32 1, %v2375
  %v2377 = vrot.slane %v2368, %v2376
  %v2380 = vadd.f32 %v2321, %v2373
  %v2381 = vadd.f32 %v2323, %v2377
  %v2382 = vadd.f32 %v2327, %v2373
  %v2383 = vadd.f32 %v2329, %v2377
  %v2384 = vadd.f32 %v2333, %v2373
  %v2385 = vadd.f32 %v2335, %v2377
  %v2386 = vadd.f32 %v2339, %v2373
  %v2387 = vadd.f32 %v2341, %v2377
  %v2388 = vadd.f32 %v2345, %v2373
  %v2389 = vadd.f32 %v2347, %v2377
  %v2390 = vadd.f32 %v2351, %v2373
  %v2391 = vadd.f32 %v2353, %v2377
  %v2392 = vadd.f32 %v2357, %v2373
  %v2393 = vadd.f32 %v2359, %v2377
  %v2394 = vadd.f32 %v2363, %v2373
  %v2395 = vadd.f32 %v2365, %v2377
  %2396 = vst [vmem:[#allocation6] sm:$0xff] %v2380
  %2397 = vst.msk [vmem:[#allocation6 + $0x8] sm:$0xff] %vm218, %v2381
  %2398 = vst [vmem:[#allocation6 + $0x10] sm:$0xff] %v2382
  %2399 = vst.msk [vmem:[#allocation6 + $0x18] sm:$0xff] %vm218, %v2383
  %2400 = vst [vmem:[#allocation6 + $0x20] sm:$0xff] %v2384
  %2401 = vst.msk [vmem:[#allocation6 + $0x28] sm:$0xff] %vm218, %v2385
  %2402 = vst [vmem:[#allocation6 + $0x30] sm:$0xff] %v2386
  %2403 = vst.msk [vmem:[#allocation6 + $0x38] sm:$0xff] %vm218, %v2387
  %2404 = vst [vmem:[#allocation6 + $0x40] sm:$0xff] %v2388
  %2405 = vst.msk [vmem:[#allocation6 + $0x48] sm:$0xff] %vm218, %v2389
  %2406 = vst [vmem:[#allocation6 + $0x50] sm:$0xff] %v2390
  %2407 = vst.msk [vmem:[#allocation6 + $0x58] sm:$0xff] %vm218, %v2391
  %2408 = vst [vmem:[#allocation6 + $0x60] sm:$0xff] %v2392
  %2409 = vst.msk [vmem:[#allocation6 + $0x68] sm:$0xff] %vm218, %v2393
  %2410 = vst [vmem:[#allocation6 + $0x70] sm:$0xff] %v2394
  %2411 = vst.msk [vmem:[#allocation6 + $0x78] sm:$0xff] %vm218, %v2395
  %s2412 = scalar_lea.vmem %s7, 128
  %v2413 = vld [vmem:[%s2412] sm:$0xff]
  %v2414 = vld [vmem:[%s2412 + $0x8] sm:$0xff]
  %v2415 = vld [vmem:[%s2412 + $0x10] sm:$0xff]
  %v2416 = vld [vmem:[%s2412 + $0x18] sm:$0xff]
  %v2417 = vld [vmem:[%s2412 + $0x20] sm:$0xff]
  %v2418 = vld [vmem:[%s2412 + $0x28] sm:$0xff]
  %v2419 = vld [vmem:[%s2412 + $0x30] sm:$0xff]
  %v2420 = vld [vmem:[%s2412 + $0x38] sm:$0xff]
  %v2421 = vld [vmem:[%s2412 + $0x40] sm:$0xff]
  %v2422 = vld [vmem:[%s2412 + $0x48] sm:$0xff]
  %v2423 = vld [vmem:[%s2412 + $0x50] sm:$0xff]
  %v2424 = vld [vmem:[%s2412 + $0x58] sm:$0xff]
  %v2425 = vld [vmem:[%s2412 + $0x60] sm:$0xff]
  %v2426 = vld [vmem:[%s2412 + $0x68] sm:$0xff]
  %v2427 = vld [vmem:[%s2412 + $0x70] sm:$0xff]
  %v2428 = vld [vmem:[%s2412 + $0x78] sm:$0xff]
  %s2429 = scalar_lea.vmem %s8, 1
  %v2430 = vld [vmem:[%s2429] sm:$0x1]
  %v2432 = vlaneseq
  %v2433 = vshrl.u32 %v2432, 7
  %v2434 = vsub.s32 0, %v2433
  %v2435 = vrot.slane %v2430, %v2434
  %s2437 = scalar_lea.vmem [#allocation6], 112
  %v2438 = vld [vmem:[%s2437] sm:$0xff]
  %v2439 = vld [vmem:[%s2437 + $0x8] sm:$0xff]
  %2440 = vmatprep.subr.mxu0 %v2414
  %2441 = vmatpush1.msra.mxu0 %v2413
  %2442 = vmatprep.subr.mxu0 %v2416
  %2443 = vmatpush1.msra.mxu0 %v2415
  %2444 = vmatprep.subr.mxu0 %v2418
  %2445 = vmatpush1.msra.mxu0 %v2417
  %2446 = vmatprep.subr.mxu0 %v2420
  %2447 = vmatpush1.msra.mxu0 %v2419
  %2448 = vmatprep.subr.mxu0 %v2422
  %2449 = vmatpush1.msra.mxu0 %v2421
  %2450 = vmatprep.subr.mxu0 %v2424
  %2451 = vmatpush1.msra.mxu0 %v2423
  %2452 = vmatprep.subr.mxu0 %v2426
  %2453 = vmatpush1.msra.mxu0 %v2425
  %2454 = vmatprep.subr.mxu0 %v2428
  %2455 = vmatpush1.msra.mxu0 %v2427
  %2456 = vmatprep.subr.mxu0 0.0
  %2457 = vmatpush1.msra.mxu0 0.0
  %2458 = vmatprep.subr.mxu0 0.0
  %2459 = vmatpush1.msra.mxu0 0.0
  %2460 = vmatprep.subr.mxu0 0.0
  %2461 = vmatpush1.msra.mxu0 0.0
  %2462 = vmatprep.subr.mxu0 0.0
  %2463 = vmatpush1.msra.mxu0 0.0
  %2464 = vmatprep.subr.mxu0 0.0
  %2465 = vmatpush1.msra.mxu0 0.0
  %2466 = vmatprep.subr.mxu0 0.0
  %2467 = vmatpush1.msra.mxu0 0.0
  %2468 = vmatprep.subr.mxu0 0.0
  %2469 = vmatpush1.msra.mxu0 0.0
  %2470 = vmatprep.subr.mxu0 0.0
  %2471 = vmatpush1.msra.mxu0 0.0
  %2472 = vmatprep.subr.mxu0 0.0
  %2473 = vmatpush1.msra.mxu0 0.0
  %2474 = vmatprep.subr.mxu0 0.0
  %2475 = vmatpush1.msra.mxu0 0.0
  %2476 = vmatprep.subr.mxu0 0.0
  %2477 = vmatpush1.msra.mxu0 0.0
  %2478 = vmatprep.subr.mxu0 0.0
  %2479 = vmatpush1.msra.mxu0 0.0
  %2480 = vmatprep.subr.mxu0 0.0
  %2481 = vmatpush1.msra.mxu0 0.0
  %2482 = vmatprep.subr.mxu0 0.0
  %2483 = vmatpush1.msra.mxu0 0.0
  %2484 = vmatprep.subr.mxu0 0.0
  %2485 = vmatpush1.msra.mxu0 0.0
  %2486 = vmatprep.subr.mxu0 0.0
  %2487 = vmatpush1.msra.mxu0 0.0
  %2488 = vmatprep.subr.mxu0 0.0
  %2489 = vmatpush1.msra.mxu0 0.0
  %2490 = vmatprep.subr.mxu0 0.0
  %2491 = vmatpush1.msra.mxu0 0.0
  %2492 = vmatprep.subr.mxu0 0.0
  %2493 = vmatpush1.msra.mxu0 0.0
  %2494 = vmatprep.subr.mxu0 0.0
  %2495 = vmatpush1.msra.mxu0 0.0
  %2496 = vmatprep.subr.mxu0 0.0
  %2497 = vmatpush1.msra.mxu0 0.0
  %2498 = vmatprep.subr.mxu0 0.0
  %2499 = vmatpush1.msra.mxu0 0.0
  %2500 = vmatprep.subr.mxu0 0.0
  %2501 = vmatpush1.msra.mxu0 0.0
  %2502 = vmatprep.subr.mxu0 0.0
  %2503 = vmatpush1.msra.mxu0 0.0
  %2504 = vmatprep.mubr.f32.mxu0 0.0
  %2505 = vmatmul.mubr.f32.gmra.mrb[0].mxu0 %v436
  %v2506 = vpop.f32.mrb[0].mxu0
  %v2507 = vadd.f32 0.0, %v2506
  %v2508 = vpop.f32.mrb[0].mxu0
  %v2509 = vadd.f32 0.0, %v2508
  %2510 = vdwg.mxu0
  %v2511 = vadd.f32 %v2438, %v2507
  %v2512 = vxor.u32 %v2511, 2147483648
  %v2513 = vmul.f32 %v2512, 1.442695
  %v2514 = vpow.pop %v2513
  %v2515 = vadd.f32 %v2514, 1.0
  %v2516 = vrcp.pop %v2515
  %v2517 = vmul.f32 1.0, %v2516
  %v2518 = vadd.f32 %v2509, %v2435
  %v2519 = vmul.f32 %v2517, %v2518
  %v2520 = vadd.f32 %v2439, %v2519
  %v2521 = vtanh.pop %v2520
  %v2522 = vsub.f32 1.0, %v2517
  %2524 = vrot.lane.b32.xlu0 %v2521, 64
  %v2525 = vpop.permute.xlu0 %2524
  %v2527 = vmul.f32 %v2522, %v2525
  %v2528 = vmul.f32 %v2517, 0.0
  %v2529 = vadd.f32 %v2527, %v2528
  %s2530 = scalar_lea.vmem [#allocation6], 96
  %v2531 = vld [vmem:[%s2530] sm:$0xff]
  %v2532 = vld [vmem:[%s2530 + $0x8] sm:$0xff]
  %2534 = vrot.lane.b32.xlu0 %v2529, 64
  %v2535 = vpop.permute.xlu0 %2534
  %v2536 = vsel %vm218, %v2535, 0
  %2538 = vmatprep.subr.mxu0 %v2414
  %2539 = vmatpush1.msra.mxu0 %v2413
  %2540 = vmatprep.subr.mxu0 %v2416
  %2541 = vmatpush1.msra.mxu0 %v2415
  %2542 = vmatprep.subr.mxu0 %v2418
  %2543 = vmatpush1.msra.mxu0 %v2417
  %2544 = vmatprep.subr.mxu0 %v2420
  %2545 = vmatpush1.msra.mxu0 %v2419
  %2546 = vmatprep.subr.mxu0 %v2422
  %2547 = vmatpush1.msra.mxu0 %v2421
  %2548 = vmatprep.subr.mxu0 %v2424
  %2549 = vmatpush1.msra.mxu0 %v2423
  %2550 = vmatprep.subr.mxu0 %v2426
  %2551 = vmatpush1.msra.mxu0 %v2425
  %2552 = vmatprep.subr.mxu0 %v2428
  %2553 = vmatpush1.msra.mxu0 %v2427
  %2554 = vmatprep.subr.mxu0 0.0
  %2555 = vmatpush1.msra.mxu0 0.0
  %2556 = vmatprep.subr.mxu0 0.0
  %2557 = vmatpush1.msra.mxu0 0.0
  %2558 = vmatprep.subr.mxu0 0.0
  %2559 = vmatpush1.msra.mxu0 0.0
  %2560 = vmatprep.subr.mxu0 0.0
  %2561 = vmatpush1.msra.mxu0 0.0
  %2562 = vmatprep.subr.mxu0 0.0
  %2563 = vmatpush1.msra.mxu0 0.0
  %2564 = vmatprep.subr.mxu0 0.0
  %2565 = vmatpush1.msra.mxu0 0.0
  %2566 = vmatprep.subr.mxu0 0.0
  %2567 = vmatpush1.msra.mxu0 0.0
  %2568 = vmatprep.subr.mxu0 0.0
  %2569 = vmatpush1.msra.mxu0 0.0
  %2570 = vmatprep.subr.mxu0 0.0
  %2571 = vmatpush1.msra.mxu0 0.0
  %2572 = vmatprep.subr.mxu0 0.0
  %2573 = vmatpush1.msra.mxu0 0.0
  %2574 = vmatprep.subr.mxu0 0.0
  %2575 = vmatpush1.msra.mxu0 0.0
  %2576 = vmatprep.subr.mxu0 0.0
  %2577 = vmatpush1.msra.mxu0 0.0
  %2578 = vmatprep.subr.mxu0 0.0
  %2579 = vmatpush1.msra.mxu0 0.0
  %2580 = vmatprep.subr.mxu0 0.0
  %2581 = vmatpush1.msra.mxu0 0.0
  %2582 = vmatprep.subr.mxu0 0.0
  %2583 = vmatpush1.msra.mxu0 0.0
  %2584 = vmatprep.subr.mxu0 0.0
  %2585 = vmatpush1.msra.mxu0 0.0
  %2586 = vmatprep.subr.mxu0 0.0
  %2587 = vmatpush1.msra.mxu0 0.0
  %2588 = vmatprep.subr.mxu0 0.0
  %2589 = vmatpush1.msra.mxu0 0.0
  %2590 = vmatprep.subr.mxu0 0.0
  %2591 = vmatpush1.msra.mxu0 0.0
  %2592 = vmatprep.subr.mxu0 0.0
  %2593 = vmatpush1.msra.mxu0 0.0
  %2594 = vmatprep.subr.mxu0 0.0
  %2595 = vmatpush1.msra.mxu0 0.0
  %2596 = vmatprep.subr.mxu0 0.0
  %2597 = vmatpush1.msra.mxu0 0.0
  %2598 = vmatprep.subr.mxu0 0.0
  %2599 = vmatpush1.msra.mxu0 0.0
  %2600 = vmatprep.subr.mxu0 0.0
  %2601 = vmatpush1.msra.mxu0 0.0
  %2602 = vmatprep.mubr.f32.mxu0 0.0
  %2603 = vmatmul.mubr.f32.gmra.mrb[0].mxu0 %v2536
  %v2604 = vpop.f32.mrb[0].mxu0
  %v2605 = vadd.f32 0.0, %v2604
  %v2606 = vpop.f32.mrb[0].mxu0
  %v2607 = vadd.f32 0.0, %v2606
  %2608 = vdwg.mxu0
  %v2609 = vadd.f32 %v2531, %v2605
  %v2610 = vxor.u32 %v2609, 2147483648
  %v2611 = vmul.f32 %v2610, 1.442695
  %v2612 = vpow.pop %v2611
  %v2613 = vadd.f32 %v2612, 1.0
  %v2614 = vrcp.pop %v2613
  %v2615 = vmul.f32 1.0, %v2614
  %v2616 = vadd.f32 %v2607, %v2435
  %v2617 = vmul.f32 %v2615, %v2616
  %v2618 = vadd.f32 %v2532, %v2617
  %v2619 = vtanh.pop %v2618
  %v2620 = vsub.f32 1.0, %v2615
  %2622 = vrot.lane.b32.xlu0 %v2619, 64
  %v2623 = vpop.permute.xlu0 %2622
  %v2625 = vmul.f32 %v2620, %v2623
  %v2626 = vmul.f32 %v2615, %v2529
  %v2627 = vadd.f32 %v2625, %v2626
  %s2628 = scalar_lea.vmem [#allocation6], 80
  %v2629 = vld [vmem:[%s2628] sm:$0xff]
  %v2630 = vld [vmem:[%s2628 + $0x8] sm:$0xff]
  %2632 = vrot.lane.b32.xlu0 %v2627, 64
  %v2633 = vpop.permute.xlu0 %2632
  %v2634 = vsel %vm218, %v2633, 0
  %2636 = vmatprep.subr.mxu0 %v2414
  %2637 = vmatpush1.msra.mxu0 %v2413
  %2638 = vmatprep.subr.mxu0 %v2416
  %2639 = vmatpush1.msra.mxu0 %v2415
  %2640 = vmatprep.subr.mxu0 %v2418
  %2641 = vmatpush1.msra.mxu0 %v2417
  %2642 = vmatprep.subr.mxu0 %v2420
  %2643 = vmatpush1.msra.mxu0 %v2419
  %2644 = vmatprep.subr.mxu0 %v2422
  %2645 = vmatpush1.msra.mxu0 %v2421
  %2646 = vmatprep.subr.mxu0 %v2424
  %2647 = vmatpush1.msra.mxu0 %v2423
  %2648 = vmatprep.subr.mxu0 %v2426
  %2649 = vmatpush1.msra.mxu0 %v2425
  %2650 = vmatprep.subr.mxu0 %v2428
  %2651 = vmatpush1.msra.mxu0 %v2427
  %2652 = vmatprep.subr.mxu0 0.0
  %2653 = vmatpush1.msra.mxu0 0.0
  %2654 = vmatprep.subr.mxu0 0.0
  %2655 = vmatpush1.msra.mxu0 0.0
  %2656 = vmatprep.subr.mxu0 0.0
  %2657 = vmatpush1.msra.mxu0 0.0
  %2658 = vmatprep.subr.mxu0 0.0
  %2659 = vmatpush1.msra.mxu0 0.0
  %2660 = vmatprep.subr.mxu0 0.0
  %2661 = vmatpush1.msra.mxu0 0.0
  %2662 = vmatprep.subr.mxu0 0.0
  %2663 = vmatpush1.msra.mxu0 0.0
  %2664 = vmatprep.subr.mxu0 0.0
  %2665 = vmatpush1.msra.mxu0 0.0
  %2666 = vmatprep.subr.mxu0 0.0
  %2667 = vmatpush1.msra.mxu0 0.0
  %2668 = vmatprep.subr.mxu0 0.0
  %2669 = vmatpush1.msra.mxu0 0.0
  %2670 = vmatprep.subr.mxu0 0.0
  %2671 = vmatpush1.msra.mxu0 0.0
  %2672 = vmatprep.subr.mxu0 0.0
  %2673 = vmatpush1.msra.mxu0 0.0
  %2674 = vmatprep.subr.mxu0 0.0
  %2675 = vmatpush1.msra.mxu0 0.0
  %2676 = vmatprep.subr.mxu0 0.0
  %2677 = vmatpush1.msra.mxu0 0.0
  %2678 = vmatprep.subr.mxu0 0.0
  %2679 = vmatpush1.msra.mxu0 0.0
  %2680 = vmatprep.subr.mxu0 0.0
  %2681 = vmatpush1.msra.mxu0 0.0
  %2682 = vmatprep.subr.mxu0 0.0
  %2683 = vmatpush1.msra.mxu0 0.0
  %2684 = vmatprep.subr.mxu0 0.0
  %2685 = vmatpush1.msra.mxu0 0.0
  %2686 = vmatprep.subr.mxu0 0.0
  %2687 = vmatpush1.msra.mxu0 0.0
  %2688 = vmatprep.subr.mxu0 0.0
  %2689 = vmatpush1.msra.mxu0 0.0
  %2690 = vmatprep.subr.mxu0 0.0
  %2691 = vmatpush1.msra.mxu0 0.0
  %2692 = vmatprep.subr.mxu0 0.0
  %2693 = vmatpush1.msra.mxu0 0.0
  %2694 = vmatprep.subr.mxu0 0.0
  %2695 = vmatpush1.msra.mxu0 0.0
  %2696 = vmatprep.subr.mxu0 0.0
  %2697 = vmatpush1.msra.mxu0 0.0
  %2698 = vmatprep.subr.mxu0 0.0
  %2699 = vmatpush1.msra.mxu0 0.0
  %2700 = vmatprep.mubr.f32.mxu0 0.0
  %2701 = vmatmul.mubr.f32.gmra.mrb[0].mxu0 %v2634
  %v2702 = vpop.f32.mrb[0].mxu0
  %v2703 = vadd.f32 0.0, %v2702
  %v2704 = vpop.f32.mrb[0].mxu0
  %v2705 = vadd.f32 0.0, %v2704
  %2706 = vdwg.mxu0
  %v2707 = vadd.f32 %v2629, %v2703
  %v2708 = vxor.u32 %v2707, 2147483648
  %v2709 = vmul.f32 %v2708, 1.442695
  %v2710 = vpow.pop %v2709
  %v2711 = vadd.f32 %v2710, 1.0
  %v2712 = vrcp.pop %v2711
  %v2713 = vmul.f32 1.0, %v2712
  %v2714 = vadd.f32 %v2705, %v2435
  %v2715 = vmul.f32 %v2713, %v2714
  %v2716 = vadd.f32 %v2630, %v2715
  %v2717 = vtanh.pop %v2716
  %v2718 = vsub.f32 1.0, %v2713
  %2720 = vrot.lane.b32.xlu0 %v2717, 64
  %v2721 = vpop.permute.xlu0 %2720
  %v2723 = vmul.f32 %v2718, %v2721
  %v2724 = vmul.f32 %v2713, %v2627
  %v2725 = vadd.f32 %v2723, %v2724
  %s2726 = scalar_lea.vmem [#allocation6], 64
  %v2727 = vld [vmem:[%s2726] sm:$0xff]
  %v2728 = vld [vmem:[%s2726 + $0x8] sm:$0xff]
  %2730 = vrot.lane.b32.xlu0 %v2725, 64
  %v2731 = vpop.permute.xlu0 %2730
  %v2732 = vsel %vm218, %v2731, 0
  %2734 = vmatprep.subr.mxu0 %v2414
  %2735 = vmatpush1.msra.mxu0 %v2413
  %2736 = vmatprep.subr.mxu0 %v2416
  %2737 = vmatpush1.msra.mxu0 %v2415
  %2738 = vmatprep.subr.mxu0 %v2418
  %2739 = vmatpush1.msra.mxu0 %v2417
  %2740 = vmatprep.subr.mxu0 %v2420
  %2741 = vmatpush1.msra.mxu0 %v2419
  %2742 = vmatprep.subr.mxu0 %v2422
  %2743 = vmatpush1.msra.mxu0 %v2421
  %2744 = vmatprep.subr.mxu0 %v2424
  %2745 = vmatpush1.msra.mxu0 %v2423
  %2746 = vmatprep.subr.mxu0 %v2426
  %2747 = vmatpush1.msra.mxu0 %v2425
  %2748 = vmatprep.subr.mxu0 %v2428
  %2749 = vmatpush1.msra.mxu0 %v2427
  %2750 = vmatprep.subr.mxu0 0.0
  %2751 = vmatpush1.msra.mxu0 0.0
  %2752 = vmatprep.subr.mxu0 0.0
  %2753 = vmatpush1.msra.mxu0 0.0
  %2754 = vmatprep.subr.mxu0 0.0
  %2755 = vmatpush1.msra.mxu0 0.0
  %2756 = vmatprep.subr.mxu0 0.0
  %2757 = vmatpush1.msra.mxu0 0.0
  %2758 = vmatprep.subr.mxu0 0.0
  %2759 = vmatpush1.msra.mxu0 0.0
  %2760 = vmatprep.subr.mxu0 0.0
  %2761 = vmatpush1.msra.mxu0 0.0
  %2762 = vmatprep.subr.mxu0 0.0
  %2763 = vmatpush1.msra.mxu0 0.0
  %2764 = vmatprep.subr.mxu0 0.0
  %2765 = vmatpush1.msra.mxu0 0.0
  %2766 = vmatprep.subr.mxu0 0.0
  %2767 = vmatpush1.msra.mxu0 0.0
  %2768 = vmatprep.subr.mxu0 0.0
  %2769 = vmatpush1.msra.mxu0 0.0
  %2770 = vmatprep.subr.mxu0 0.0
  %2771 = vmatpush1.msra.mxu0 0.0
  %2772 = vmatprep.subr.mxu0 0.0
  %2773 = vmatpush1.msra.mxu0 0.0
  %2774 = vmatprep.subr.mxu0 0.0
  %2775 = vmatpush1.msra.mxu0 0.0
  %2776 = vmatprep.subr.mxu0 0.0
  %2777 = vmatpush1.msra.mxu0 0.0
  %2778 = vmatprep.subr.mxu0 0.0
  %2779 = vmatpush1.msra.mxu0 0.0
  %2780 = vmatprep.subr.mxu0 0.0
  %2781 = vmatpush1.msra.mxu0 0.0
  %2782 = vmatprep.subr.mxu0 0.0
  %2783 = vmatpush1.msra.mxu0 0.0
  %2784 = vmatprep.subr.mxu0 0.0
  %2785 = vmatpush1.msra.mxu0 0.0
  %2786 = vmatprep.subr.mxu0 0.0
  %2787 = vmatpush1.msra.mxu0 0.0
  %2788 = vmatprep.subr.mxu0 0.0
  %2789 = vmatpush1.msra.mxu0 0.0
  %2790 = vmatprep.subr.mxu0 0.0
  %2791 = vmatpush1.msra.mxu0 0.0
  %2792 = vmatprep.subr.mxu0 0.0
  %2793 = vmatpush1.msra.mxu0 0.0
  %2794 = vmatprep.subr.mxu0 0.0
  %2795 = vmatpush1.msra.mxu0 0.0
  %2796 = vmatprep.subr.mxu0 0.0
  %2797 = vmatpush1.msra.mxu0 0.0
  %2798 = vmatprep.mubr.f32.mxu0 0.0
  %2799 = vmatmul.mubr.f32.gmra.mrb[0].mxu0 %v2732
  %v2800 = vpop.f32.mrb[0].mxu0
  %v2801 = vadd.f32 0.0, %v2800
  %v2802 = vpop.f32.mrb[0].mxu0
  %v2803 = vadd.f32 0.0, %v2802
  %2804 = vdwg.mxu0
  %v2805 = vadd.f32 %v2727, %v2801
  %v2806 = vxor.u32 %v2805, 2147483648
  %v2807 = vmul.f32 %v2806, 1.442695
  %v2808 = vpow.pop %v2807
  %v2809 = vadd.f32 %v2808, 1.0
  %v2810 = vrcp.pop %v2809
  %v2811 = vmul.f32 1.0, %v2810
  %v2812 = vadd.f32 %v2803, %v2435
  %v2813 = vmul.f32 %v2811, %v2812
  %v2814 = vadd.f32 %v2728, %v2813
  %v2815 = vtanh.pop %v2814
  %v2816 = vsub.f32 1.0, %v2811
  %2818 = vrot.lane.b32.xlu0 %v2815, 64
  %v2819 = vpop.permute.xlu0 %2818
  %v2821 = vmul.f32 %v2816, %v2819
  %v2822 = vmul.f32 %v2811, %v2725
  %v2823 = vadd.f32 %v2821, %v2822
  %s2824 = scalar_lea.vmem [#allocation6], 48
  %v2825 = vld [vmem:[%s2824] sm:$0xff]
  %v2826 = vld [vmem:[%s2824 + $0x8] sm:$0xff]
  %2828 = vrot.lane.b32.xlu0 %v2823, 64
  %v2829 = vpop.permute.xlu0 %2828
  %v2830 = vsel %vm218, %v2829, 0
  %2832 = vmatprep.subr.mxu0 %v2414
  %2833 = vmatpush1.msra.mxu0 %v2413
  %2834 = vmatprep.subr.mxu0 %v2416
  %2835 = vmatpush1.msra.mxu0 %v2415
  %2836 = vmatprep.subr.mxu0 %v2418
  %2837 = vmatpush1.msra.mxu0 %v2417
  %2838 = vmatprep.subr.mxu0 %v2420
  %2839 = vmatpush1.msra.mxu0 %v2419
  %2840 = vmatprep.subr.mxu0 %v2422
  %2841 = vmatpush1.msra.mxu0 %v2421
  %2842 = vmatprep.subr.mxu0 %v2424
  %2843 = vmatpush1.msra.mxu0 %v2423
  %2844 = vmatprep.subr.mxu0 %v2426
  %2845 = vmatpush1.msra.mxu0 %v2425
  %2846 = vmatprep.subr.mxu0 %v2428
  %2847 = vmatpush1.msra.mxu0 %v2427
  %2848 = vmatprep.subr.mxu0 0.0
  %2849 = vmatpush1.msra.mxu0 0.0
  %2850 = vmatprep.subr.mxu0 0.0
  %2851 = vmatpush1.msra.mxu0 0.0
  %2852 = vmatprep.subr.mxu0 0.0
  %2853 = vmatpush1.msra.mxu0 0.0
  %2854 = vmatprep.subr.mxu0 0.0
  %2855 = vmatpush1.msra.mxu0 0.0
  %2856 = vmatprep.subr.mxu0 0.0
  %2857 = vmatpush1.msra.mxu0 0.0
  %2858 = vmatprep.subr.mxu0 0.0
  %2859 = vmatpush1.msra.mxu0 0.0
  %2860 = vmatprep.subr.mxu0 0.0
  %2861 = vmatpush1.msra.mxu0 0.0
  %2862 = vmatprep.subr.mxu0 0.0
  %2863 = vmatpush1.msra.mxu0 0.0
  %2864 = vmatprep.subr.mxu0 0.0
  %2865 = vmatpush1.msra.mxu0 0.0
  %2866 = vmatprep.subr.mxu0 0.0
  %2867 = vmatpush1.msra.mxu0 0.0
  %2868 = vmatprep.subr.mxu0 0.0
  %2869 = vmatpush1.msra.mxu0 0.0
  %2870 = vmatprep.subr.mxu0 0.0
  %2871 = vmatpush1.msra.mxu0 0.0
  %2872 = vmatprep.subr.mxu0 0.0
  %2873 = vmatpush1.msra.mxu0 0.0
  %2874 = vmatprep.subr.mxu0 0.0
  %2875 = vmatpush1.msra.mxu0 0.0
  %2876 = vmatprep.subr.mxu0 0.0
  %2877 = vmatpush1.msra.mxu0 0.0
  %2878 = vmatprep.subr.mxu0 0.0
  %2879 = vmatpush1.msra.mxu0 0.0
  %2880 = vmatprep.subr.mxu0 0.0
  %2881 = vmatpush1.msra.mxu0 0.0
  %2882 = vmatprep.subr.mxu0 0.0
  %2883 = vmatpush1.msra.mxu0 0.0
  %2884 = vmatprep.subr.mxu0 0.0
  %2885 = vmatpush1.msra.mxu0 0.0
  %2886 = vmatprep.subr.mxu0 0.0
  %2887 = vmatpush1.msra.mxu0 0.0
  %2888 = vmatprep.subr.mxu0 0.0
  %2889 = vmatpush1.msra.mxu0 0.0
  %2890 = vmatprep.subr.mxu0 0.0
  %2891 = vmatpush1.msra.mxu0 0.0
  %2892 = vmatprep.subr.mxu0 0.0
  %2893 = vmatpush1.msra.mxu0 0.0
  %2894 = vmatprep.subr.mxu0 0.0
  %2895 = vmatpush1.msra.mxu0 0.0
  %2896 = vmatprep.mubr.f32.mxu0 0.0
  %2897 = vmatmul.mubr.f32.gmra.mrb[0].mxu0 %v2830
  %v2898 = vpop.f32.mrb[0].mxu0
  %v2899 = vadd.f32 0.0, %v2898
  %v2900 = vpop.f32.mrb[0].mxu0
  %v2901 = vadd.f32 0.0, %v2900
  %2902 = vdwg.mxu0
  %v2903 = vadd.f32 %v2825, %v2899
  %v2904 = vxor.u32 %v2903, 2147483648
  %v2905 = vmul.f32 %v2904, 1.442695
  %v2906 = vpow.pop %v2905
  %v2907 = vadd.f32 %v2906, 1.0
  %v2908 = vrcp.pop %v2907
  %v2909 = vmul.f32 1.0, %v2908
  %v2910 = vadd.f32 %v2901, %v2435
  %v2911 = vmul.f32 %v2909, %v2910
  %v2912 = vadd.f32 %v2826, %v2911
  %v2913 = vtanh.pop %v2912
  %v2914 = vsub.f32 1.0, %v2909
  %2916 = vrot.lane.b32.xlu0 %v2913, 64
  %v2917 = vpop.permute.xlu0 %2916
  %v2919 = vmul.f32 %v2914, %v2917
  %v2920 = vmul.f32 %v2909, %v2823
  %v2921 = vadd.f32 %v2919, %v2920
  %s2922 = scalar_lea.vmem [#allocation6], 32
  %v2923 = vld [vmem:[%s2922] sm:$0xff]
  %v2924 = vld [vmem:[%s2922 + $0x8] sm:$0xff]
  %2926 = vrot.lane.b32.xlu0 %v2921, 64
  %v2927 = vpop.permute.xlu0 %2926
  %v2928 = vsel %vm218, %v2927, 0
  %2930 = vmatprep.subr.mxu0 %v2414
  %2931 = vmatpush1.msra.mxu0 %v2413
  %2932 = vmatprep.subr.mxu0 %v2416
  %2933 = vmatpush1.msra.mxu0 %v2415
  %2934 = vmatprep.subr.mxu0 %v2418
  %2935 = vmatpush1.msra.mxu0 %v2417
  %2936 = vmatprep.subr.mxu0 %v2420
  %2937 = vmatpush1.msra.mxu0 %v2419
  %2938 = vmatprep.subr.mxu0 %v2422
  %2939 = vmatpush1.msra.mxu0 %v2421
  %2940 = vmatprep.subr.mxu0 %v2424
  %2941 = vmatpush1.msra.mxu0 %v2423
  %2942 = vmatprep.subr.mxu0 %v2426
  %2943 = vmatpush1.msra.mxu0 %v2425
  %2944 = vmatprep.subr.mxu0 %v2428
  %2945 = vmatpush1.msra.mxu0 %v2427
  %2946 = vmatprep.subr.mxu0 0.0
  %2947 = vmatpush1.msra.mxu0 0.0
  %2948 = vmatprep.subr.mxu0 0.0
  %2949 = vmatpush1.msra.mxu0 0.0
  %2950 = vmatprep.subr.mxu0 0.0
  %2951 = vmatpush1.msra.mxu0 0.0
  %2952 = vmatprep.subr.mxu0 0.0
  %2953 = vmatpush1.msra.mxu0 0.0
  %2954 = vmatprep.subr.mxu0 0.0
  %2955 = vmatpush1.msra.mxu0 0.0
  %2956 = vmatprep.subr.mxu0 0.0
  %2957 = vmatpush1.msra.mxu0 0.0
  %2958 = vmatprep.subr.mxu0 0.0
  %2959 = vmatpush1.msra.mxu0 0.0
  %2960 = vmatprep.subr.mxu0 0.0
  %2961 = vmatpush1.msra.mxu0 0.0
  %2962 = vmatprep.subr.mxu0 0.0
  %2963 = vmatpush1.msra.mxu0 0.0
  %2964 = vmatprep.subr.mxu0 0.0
  %2965 = vmatpush1.msra.mxu0 0.0
  %2966 = vmatprep.subr.mxu0 0.0
  %2967 = vmatpush1.msra.mxu0 0.0
  %2968 = vmatprep.subr.mxu0 0.0
  %2969 = vmatpush1.msra.mxu0 0.0
  %2970 = vmatprep.subr.mxu0 0.0
  %2971 = vmatpush1.msra.mxu0 0.0
  %2972 = vmatprep.subr.mxu0 0.0
  %2973 = vmatpush1.msra.mxu0 0.0
  %2974 = vmatprep.subr.mxu0 0.0
  %2975 = vmatpush1.msra.mxu0 0.0
  %2976 = vmatprep.subr.mxu0 0.0
  %2977 = vmatpush1.msra.mxu0 0.0
  %2978 = vmatprep.subr.mxu0 0.0
  %2979 = vmatpush1.msra.mxu0 0.0
  %2980 = vmatprep.subr.mxu0 0.0
  %2981 = vmatpush1.msra.mxu0 0.0
  %2982 = vmatprep.subr.mxu0 0.0
  %2983 = vmatpush1.msra.mxu0 0.0
  %2984 = vmatprep.subr.mxu0 0.0
  %2985 = vmatpush1.msra.mxu0 0.0
  %2986 = vmatprep.subr.mxu0 0.0
  %2987 = vmatpush1.msra.mxu0 0.0
  %2988 = vmatprep.subr.mxu0 0.0
  %2989 = vmatpush1.msra.mxu0 0.0
  %2990 = vmatprep.subr.mxu0 0.0
  %2991 = vmatpush1.msra.mxu0 0.0
  %2992 = vmatprep.subr.mxu0 0.0
  %2993 = vmatpush1.msra.mxu0 0.0
  %2994 = vmatprep.mubr.f32.mxu0 0.0
  %2995 = vmatmul.mubr.f32.gmra.mrb[0].mxu0 %v2928
  %v2996 = vpop.f32.mrb[0].mxu0
  %v2997 = vadd.f32 0.0, %v2996
  %v2998 = vpop.f32.mrb[0].mxu0
  %v2999 = vadd.f32 0.0, %v2998
  %3000 = vdwg.mxu0
  %v3001 = vadd.f32 %v2923, %v2997
  %v3002 = vxor.u32 %v3001, 2147483648
  %v3003 = vmul.f32 %v3002, 1.442695
  %v3004 = vpow.pop %v3003
  %v3005 = vadd.f32 %v3004, 1.0
  %v3006 = vrcp.pop %v3005
  %v3007 = vmul.f32 1.0, %v3006
  %v3008 = vadd.f32 %v2999, %v2435
  %v3009 = vmul.f32 %v3007, %v3008
  %v3010 = vadd.f32 %v2924, %v3009
  %v3011 = vtanh.pop %v3010
  %v3012 = vsub.f32 1.0, %v3007
  %3014 = vrot.lane.b32.xlu0 %v3011, 64
  %v3015 = vpop.permute.xlu0 %3014
  %v3017 = vmul.f32 %v3012, %v3015
  %v3018 = vmul.f32 %v3007, %v2921
  %v3019 = vadd.f32 %v3017, %v3018
  %s3020 = scalar_lea.vmem [#allocation6], 16
  %v3021 = vld [vmem:[%s3020] sm:$0xff]
  %v3022 = vld [vmem:[%s3020 + $0x8] sm:$0xff]
  %3024 = vrot.lane.b32.xlu0 %v3019, 64
  %v3025 = vpop.permute.xlu0 %3024
  %v3026 = vsel %vm218, %v3025, 0
  %3028 = vmatprep.subr.mxu0 %v2414
  %3029 = vmatpush1.msra.mxu0 %v2413
  %3030 = vmatprep.subr.mxu0 %v2416
  %3031 = vmatpush1.msra.mxu0 %v2415
  %3032 = vmatprep.subr.mxu0 %v2418
  %3033 = vmatpush1.msra.mxu0 %v2417
  %3034 = vmatprep.subr.mxu0 %v2420
  %3035 = vmatpush1.msra.mxu0 %v2419
  %3036 = vmatprep.subr.mxu0 %v2422
  %3037 = vmatpush1.msra.mxu0 %v2421
  %3038 = vmatprep.subr.mxu0 %v2424
  %3039 = vmatpush1.msra.mxu0 %v2423
  %3040 = vmatprep.subr.mxu0 %v2426
  %3041 = vmatpush1.msra.mxu0 %v2425
  %3042 = vmatprep.subr.mxu0 %v2428
  %3043 = vmatpush1.msra.mxu0 %v2427
  %3044 = vmatprep.subr.mxu0 0.0
  %3045 = vmatpush1.msra.mxu0 0.0
  %3046 = vmatprep.subr.mxu0 0.0
  %3047 = vmatpush1.msra.mxu0 0.0
  %3048 = vmatprep.subr.mxu0 0.0
  %3049 = vmatpush1.msra.mxu0 0.0
  %3050 = vmatprep.subr.mxu0 0.0
  %3051 = vmatpush1.msra.mxu0 0.0
  %3052 = vmatprep.subr.mxu0 0.0
  %3053 = vmatpush1.msra.mxu0 0.0
  %3054 = vmatprep.subr.mxu0 0.0
  %3055 = vmatpush1.msra.mxu0 0.0
  %3056 = vmatprep.subr.mxu0 0.0
  %3057 = vmatpush1.msra.mxu0 0.0
  %3058 = vmatprep.subr.mxu0 0.0
  %3059 = vmatpush1.msra.mxu0 0.0
  %3060 = vmatprep.subr.mxu0 0.0
  %3061 = vmatpush1.msra.mxu0 0.0
  %3062 = vmatprep.subr.mxu0 0.0
  %3063 = vmatpush1.msra.mxu0 0.0
  %3064 = vmatprep.subr.mxu0 0.0
  %3065 = vmatpush1.msra.mxu0 0.0
  %3066 = vmatprep.subr.mxu0 0.0
  %3067 = vmatpush1.msra.mxu0 0.0
  %3068 = vmatprep.subr.mxu0 0.0
  %3069 = vmatpush1.msra.mxu0 0.0
  %3070 = vmatprep.subr.mxu0 0.0
  %3071 = vmatpush1.msra.mxu0 0.0
  %3072 = vmatprep.subr.mxu0 0.0
  %3073 = vmatpush1.msra.mxu0 0.0
  %3074 = vmatprep.subr.mxu0 0.0
  %3075 = vmatpush1.msra.mxu0 0.0
  %3076 = vmatprep.subr.mxu0 0.0
  %3077 = vmatpush1.msra.mxu0 0.0
  %3078 = vmatprep.subr.mxu0 0.0
  %3079 = vmatpush1.msra.mxu0 0.0
  %3080 = vmatprep.subr.mxu0 0.0
  %3081 = vmatpush1.msra.mxu0 0.0
  %3082 = vmatprep.subr.mxu0 0.0
  %3083 = vmatpush1.msra.mxu0 0.0
  %3084 = vmatprep.subr.mxu0 0.0
  %3085 = vmatpush1.msra.mxu0 0.0
  %3086 = vmatprep.subr.mxu0 0.0
  %3087 = vmatpush1.msra.mxu0 0.0
  %3088 = vmatprep.subr.mxu0 0.0
  %3089 = vmatpush1.msra.mxu0 0.0
  %3090 = vmatprep.subr.mxu0 0.0
  %3091 = vmatpush1.msra.mxu0 0.0
  %3092 = vmatprep.mubr.f32.mxu0 0.0
  %3093 = vmatmul.mubr.f32.gmra.mrb[0].mxu0 %v3026
  %v3094 = vpop.f32.mrb[0].mxu0
  %v3095 = vadd.f32 0.0, %v3094
  %v3096 = vpop.f32.mrb[0].mxu0
  %v3097 = vadd.f32 0.0, %v3096
  %3098 = vdwg.mxu0
  %v3099 = vadd.f32 %v3021, %v3095
  %v3100 = vxor.u32 %v3099, 2147483648
  %v3101 = vmul.f32 %v3100, 1.442695
  %v3102 = vpow.pop %v3101
  %v3103 = vadd.f32 %v3102, 1.0
  %v3104 = vrcp.pop %v3103
  %v3105 = vmul.f32 1.0, %v3104
  %v3106 = vadd.f32 %v3097, %v2435
  %v3107 = vmul.f32 %v3105, %v3106
  %v3108 = vadd.f32 %v3022, %v3107
  %v3109 = vtanh.pop %v3108
  %v3110 = vsub.f32 1.0, %v3105
  %3112 = vrot.lane.b32.xlu0 %v3109, 64
  %v3113 = vpop.permute.xlu0 %3112
  %v3115 = vmul.f32 %v3110, %v3113
  %v3116 = vmul.f32 %v3105, %v3019
  %v3117 = vadd.f32 %v3115, %v3116
  %v3118 = vld [vmem:[#allocation6] sm:$0xff]
  %v3119 = vld [vmem:[#allocation6 + $0x8] sm:$0xff]
  %3121 = vrot.lane.b32.xlu0 %v3117, 64
  %v3122 = vpop.permute.xlu0 %3121
  %v3123 = vsel %vm218, %v3122, 0
  %3125 = vmatprep.subr.mxu0 %v2414
  %3126 = vmatpush1.msra.mxu0 %v2413
  %3127 = vmatprep.subr.mxu0 %v2416
  %3128 = vmatpush1.msra.mxu0 %v2415
  %3129 = vmatprep.subr.mxu0 %v2418
  %3130 = vmatpush1.msra.mxu0 %v2417
  %3131 = vmatprep.subr.mxu0 %v2420
  %3132 = vmatpush1.msra.mxu0 %v2419
  %3133 = vmatprep.subr.mxu0 %v2422
  %3134 = vmatpush1.msra.mxu0 %v2421
  %3135 = vmatprep.subr.mxu0 %v2424
  %3136 = vmatpush1.msra.mxu0 %v2423
  %3137 = vmatprep.subr.mxu0 %v2426
  %3138 = vmatpush1.msra.mxu0 %v2425
  %3139 = vmatprep.subr.mxu0 %v2428
  %3140 = vmatpush1.msra.mxu0 %v2427
  %3141 = vmatprep.subr.mxu0 0.0
  %3142 = vmatpush1.msra.mxu0 0.0
  %3143 = vmatprep.subr.mxu0 0.0
  %3144 = vmatpush1.msra.mxu0 0.0
  %3145 = vmatprep.subr.mxu0 0.0
  %3146 = vmatpush1.msra.mxu0 0.0
  %3147 = vmatprep.subr.mxu0 0.0
  %3148 = vmatpush1.msra.mxu0 0.0
  %3149 = vmatprep.subr.mxu0 0.0
  %3150 = vmatpush1.msra.mxu0 0.0
  %3151 = vmatprep.subr.mxu0 0.0
  %3152 = vmatpush1.msra.mxu0 0.0
  %3153 = vmatprep.subr.mxu0 0.0
  %3154 = vmatpush1.msra.mxu0 0.0
  %3155 = vmatprep.subr.mxu0 0.0
  %3156 = vmatpush1.msra.mxu0 0.0
  %3157 = vmatprep.subr.mxu0 0.0
  %3158 = vmatpush1.msra.mxu0 0.0
  %3159 = vmatprep.subr.mxu0 0.0
  %3160 = vmatpush1.msra.mxu0 0.0
  %3161 = vmatprep.subr.mxu0 0.0
  %3162 = vmatpush1.msra.mxu0 0.0
  %3163 = vmatprep.subr.mxu0 0.0
  %3164 = vmatpush1.msra.mxu0 0.0
  %3165 = vmatprep.subr.mxu0 0.0
  %3166 = vmatpush1.msra.mxu0 0.0
  %3167 = vmatprep.subr.mxu0 0.0
  %3168 = vmatpush1.msra.mxu0 0.0
  %3169 = vmatprep.subr.mxu0 0.0
  %3170 = vmatpush1.msra.mxu0 0.0
  %3171 = vmatprep.subr.mxu0 0.0
  %3172 = vmatpush1.msra.mxu0 0.0
  %3173 = vmatprep.subr.mxu0 0.0
  %3174 = vmatpush1.msra.mxu0 0.0
  %3175 = vmatprep.subr.mxu0 0.0
  %3176 = vmatpush1.msra.mxu0 0.0
  %3177 = vmatprep.subr.mxu0 0.0
  %3178 = vmatpush1.msra.mxu0 0.0
  %3179 = vmatprep.subr.mxu0 0.0
  %3180 = vmatpush1.msra.mxu0 0.0
  %3181 = vmatprep.subr.mxu0 0.0
  %3182 = vmatpush1.msra.mxu0 0.0
  %3183 = vmatprep.subr.mxu0 0.0
  %3184 = vmatpush1.msra.mxu0 0.0
  %3185 = vmatprep.subr.mxu0 0.0
  %3186 = vmatpush1.msra.mxu0 0.0
  %3187 = vmatprep.subr.mxu0 0.0
  %3188 = vmatpush1.msra.mxu0 0.0
  %3189 = vmatprep.mubr.f32.mxu0 0.0
  %3190 = vmatmul.mubr.f32.gmra.mrb[0].mxu0 %v3123
  %v3191 = vpop.f32.mrb[0].mxu0
  %v3192 = vadd.f32 0.0, %v3191
  %v3193 = vpop.f32.mrb[0].mxu0
  %v3194 = vadd.f32 0.0, %v3193
  %3195 = vdwg.mxu0
  %v3196 = vadd.f32 %v3118, %v3192
  %v3197 = vxor.u32 %v3196, 2147483648
  %v3198 = vmul.f32 %v3197, 1.442695
  %v3199 = vpow.pop %v3198
  %v3200 = vadd.f32 %v3199, 1.0
  %v3201 = vrcp.pop %v3200
  %v3202 = vmul.f32 1.0, %v3201
  %v3203 = vadd.f32 %v3194, %v2435
  %v3204 = vmul.f32 %v3202, %v3203
  %v3205 = vadd.f32 %v3119, %v3204
  %v3206 = vtanh.pop %v3205
  %v3207 = vsub.f32 1.0, %v3202
  %3209 = vrot.lane.b32.xlu0 %v3206, 64
  %v3210 = vpop.permute.xlu0 %3209
  %v3212 = vmul.f32 %v3207, %v3210
  %v3213 = vmul.f32 %v3202, %v3117
  %v3214 = vadd.f32 %v3212, %v3213
  %v3215 = vld [vmem:[#allocation4] sm:$0xff]
  %v3216 = vld [vmem:[%s5] sm:$0xff]
  %v3217 = vld [vmem:[%s5 + $0x8] sm:$0xff]
  %v3218 = vld [vmem:[%s5 + $0x10] sm:$0xff]
  %v3219 = vld [vmem:[%s5 + $0x18] sm:$0xff]
  %v3220 = vld [vmem:[%s5 + $0x20] sm:$0xff]
  %v3221 = vld [vmem:[%s5 + $0x28] sm:$0xff]
  %v3222 = vld [vmem:[%s5 + $0x30] sm:$0xff]
  %v3223 = vld [vmem:[%s5 + $0x38] sm:$0xff]
  %v3224 = vld [vmem:[%s5 + $0x40] sm:$0xff]
  %v3225 = vld [vmem:[%s5 + $0x48] sm:$0xff]
  %v3226 = vld [vmem:[%s5 + $0x50] sm:$0xff]
  %v3227 = vld [vmem:[%s5 + $0x58] sm:$0xff]
  %v3228 = vld [vmem:[%s5 + $0x60] sm:$0xff]
  %v3229 = vld [vmem:[%s5 + $0x68] sm:$0xff]
  %v3230 = vld [vmem:[%s5 + $0x70] sm:$0xff]
  %v3231 = vld [vmem:[%s5 + $0x78] sm:$0xff]
  %v3232 = vld [vmem:[#allocation5] sm:$0xff]
  %v3233 = vld [vmem:[%s5 + $0x80] sm:$0xff]
  %v3234 = vld [vmem:[%s5 + $0x88] sm:$0xff]
  %v3235 = vld [vmem:[%s5 + $0x90] sm:$0xff]
  %v3236 = vld [vmem:[%s5 + $0x98] sm:$0xff]
  %v3237 = vld [vmem:[%s5 + $0xa0] sm:$0xff]
  %v3238 = vld [vmem:[%s5 + $0xa8] sm:$0xff]
  %v3239 = vld [vmem:[%s5 + $0xb0] sm:$0xff]
  %v3240 = vld [vmem:[%s5 + $0xb8] sm:$0xff]
  %v3241 = vld [vmem:[%s5 + $0xc0] sm:$0xff]
  %v3242 = vld [vmem:[%s5 + $0xc8] sm:$0xff]
  %v3243 = vld [vmem:[%s5 + $0xd0] sm:$0xff]
  %v3244 = vld [vmem:[%s5 + $0xd8] sm:$0xff]
  %v3245 = vld [vmem:[%s5 + $0xe0] sm:$0xff]
  %v3246 = vld [vmem:[%s5 + $0xe8] sm:$0xff]
  %v3247 = vld [vmem:[%s5 + $0xf0] sm:$0xff]
  %v3248 = vld [vmem:[%s5 + $0xf8] sm:$0xff]
  %v3250 = vsel %vm218, %v3232, 0
  %3252 = vmatprep.subr.mxu0 %v3234
  %3253 = vmatpush1.msra.mxu0 %v3233
  %3254 = vmatprep.subr.mxu0 %v3236
  %3255 = vmatpush1.msra.mxu0 %v3235
  %3256 = vmatprep.subr.mxu0 %v3238
  %3257 = vmatpush1.msra.mxu0 %v3237
  %3258 = vmatprep.subr.mxu0 %v3240
  %3259 = vmatpush1.msra.mxu0 %v3239
  %3260 = vmatprep.subr.mxu0 %v3242
  %3261 = vmatpush1.msra.mxu0 %v3241
  %3262 = vmatprep.subr.mxu0 %v3244
  %3263 = vmatpush1.msra.mxu0 %v3243
  %3264 = vmatprep.subr.mxu0 %v3246
  %3265 = vmatpush1.msra.mxu0 %v3245
  %3266 = vmatprep.subr.mxu0 %v3248
  %3267 = vmatpush1.msra.mxu0 %v3247
  %3268 = vmatprep.subr.mxu0 0.0
  %3269 = vmatpush1.msra.mxu0 0.0
  %3270 = vmatprep.subr.mxu0 0.0
  %3271 = vmatpush1.msra.mxu0 0.0
  %3272 = vmatprep.subr.mxu0 0.0
  %3273 = vmatpush1.msra.mxu0 0.0
  %3274 = vmatprep.subr.mxu0 0.0
  %3275 = vmatpush1.msra.mxu0 0.0
  %3276 = vmatprep.subr.mxu0 0.0
  %3277 = vmatpush1.msra.mxu0 0.0
  %3278 = vmatprep.subr.mxu0 0.0
  %3279 = vmatpush1.msra.mxu0 0.0
  %3280 = vmatprep.subr.mxu0 0.0
  %3281 = vmatpush1.msra.mxu0 0.0
  %3282 = vmatprep.subr.mxu0 0.0
  %3283 = vmatpush1.msra.mxu0 0.0
  %3284 = vmatprep.subr.mxu0 0.0
  %3285 = vmatpush1.msra.mxu0 0.0
  %3286 = vmatprep.subr.mxu0 0.0
  %3287 = vmatpush1.msra.mxu0 0.0
  %3288 = vmatprep.subr.mxu0 0.0
  %3289 = vmatpush1.msra.mxu0 0.0
  %3290 = vmatprep.subr.mxu0 0.0
  %3291 = vmatpush1.msra.mxu0 0.0
  %3292 = vmatprep.subr.mxu0 0.0
  %3293 = vmatpush1.msra.mxu0 0.0
  %3294 = vmatprep.subr.mxu0 0.0
  %3295 = vmatpush1.msra.mxu0 0.0
  %3296 = vmatprep.subr.mxu0 0.0
  %3297 = vmatpush1.msra.mxu0 0.0
  %3298 = vmatprep.subr.mxu0 0.0
  %3299 = vmatpush1.msra.mxu0 0.0
  %3300 = vmatprep.subr.mxu0 0.0
  %3301 = vmatpush1.msra.mxu0 0.0
  %3302 = vmatprep.subr.mxu0 0.0
  %3303 = vmatpush1.msra.mxu0 0.0
  %3304 = vmatprep.subr.mxu0 0.0
  %3305 = vmatpush1.msra.mxu0 0.0
  %3306 = vmatprep.subr.mxu0 0.0
  %3307 = vmatpush1.msra.mxu0 0.0
  %3308 = vmatprep.subr.mxu0 0.0
  %3309 = vmatpush1.msra.mxu0 0.0
  %3310 = vmatprep.subr.mxu0 0.0
  %3311 = vmatpush1.msra.mxu0 0.0
  %3312 = vmatprep.subr.mxu0 0.0
  %3313 = vmatpush1.msra.mxu0 0.0
  %3314 = vmatprep.subr.mxu0 0.0
  %3315 = vmatpush1.msra.mxu0 0.0
  %3316 = vmatprep.mubr.f32.mxu0 0.0
  %3317 = vmatmul.mubr.f32.gmra.mrb[0].mxu0 %v3250
  %v3318 = vpop.f32.mrb[0].mxu0
  %v3319 = vadd.f32 0.0, %v3318
  %v3320 = vpop.f32.mrb[0].mxu0
  %v3321 = vadd.f32 0.0, %v3320
  %3322 = vdwg.mxu0
  %v3324 = vsel %vm218, %v3215, 0
  %3326 = vmatprep.subr.mxu0 %v3217
  %3327 = vmatpush1.msra.mxu0 %v3216
  %3328 = vmatprep.subr.mxu0 %v3219
  %3329 = vmatpush1.msra.mxu0 %v3218
  %3330 = vmatprep.subr.mxu0 %v3221
  %3331 = vmatpush1.msra.mxu0 %v3220
  %3332 = vmatprep.subr.mxu0 %v3223
  %3333 = vmatpush1.msra.mxu0 %v3222
  %3334 = vmatprep.subr.mxu0 %v3225
  %3335 = vmatpush1.msra.mxu0 %v3224
  %3336 = vmatprep.subr.mxu0 %v3227
  %3337 = vmatpush1.msra.mxu0 %v3226
  %3338 = vmatprep.subr.mxu0 %v3229
  %3339 = vmatpush1.msra.mxu0 %v3228
  %3340 = vmatprep.subr.mxu0 %v3231
  %3341 = vmatpush1.msra.mxu0 %v3230
  %3342 = vmatprep.subr.mxu0 0.0
  %3343 = vmatpush1.msra.mxu0 0.0
  %3344 = vmatprep.subr.mxu0 0.0
  %3345 = vmatpush1.msra.mxu0 0.0
  %3346 = vmatprep.subr.mxu0 0.0
  %3347 = vmatpush1.msra.mxu0 0.0
  %3348 = vmatprep.subr.mxu0 0.0
  %3349 = vmatpush1.msra.mxu0 0.0
  %3350 = vmatprep.subr.mxu0 0.0
  %3351 = vmatpush1.msra.mxu0 0.0
  %3352 = vmatprep.subr.mxu0 0.0
  %3353 = vmatpush1.msra.mxu0 0.0
  %3354 = vmatprep.subr.mxu0 0.0
  %3355 = vmatpush1.msra.mxu0 0.0
  %3356 = vmatprep.subr.mxu0 0.0
  %3357 = vmatpush1.msra.mxu0 0.0
  %3358 = vmatprep.subr.mxu0 0.0
  %3359 = vmatpush1.msra.mxu0 0.0
  %3360 = vmatprep.subr.mxu0 0.0
  %3361 = vmatpush1.msra.mxu0 0.0
  %3362 = vmatprep.subr.mxu0 0.0
  %3363 = vmatpush1.msra.mxu0 0.0
  %3364 = vmatprep.subr.mxu0 0.0
  %3365 = vmatpush1.msra.mxu0 0.0
  %3366 = vmatprep.subr.mxu0 0.0
  %3367 = vmatpush1.msra.mxu0 0.0
  %3368 = vmatprep.subr.mxu0 0.0
  %3369 = vmatpush1.msra.mxu0 0.0
  %3370 = vmatprep.subr.mxu0 0.0
  %3371 = vmatpush1.msra.mxu0 0.0
  %3372 = vmatprep.subr.mxu0 0.0
  %3373 = vmatpush1.msra.mxu0 0.0
  %3374 = vmatprep.subr.mxu0 0.0
  %3375 = vmatpush1.msra.mxu0 0.0
  %3376 = vmatprep.subr.mxu0 0.0
  %3377 = vmatpush1.msra.mxu0 0.0
  %3378 = vmatprep.subr.mxu0 0.0
  %3379 = vmatpush1.msra.mxu0 0.0
  %3380 = vmatprep.subr.mxu0 0.0
  %3381 = vmatpush1.msra.mxu0 0.0
  %3382 = vmatprep.subr.mxu0 0.0
  %3383 = vmatpush1.msra.mxu0 0.0
  %3384 = vmatprep.subr.mxu0 0.0
  %3385 = vmatpush1.msra.mxu0 0.0
  %3386 = vmatprep.subr.mxu0 0.0
  %3387 = vmatpush1.msra.mxu0 0.0
  %3388 = vmatprep.subr.mxu0 0.0
  %3389 = vmatpush1.msra.mxu0 0.0
  %3390 = vmatprep.mubr.f32.mxu0 0.0
  %3391 = vmatmul.mubr.f32.gmra.mrb[0].mxu0 %v3324
  %v3392 = vpop.f32.mrb[0].mxu0
  %v3393 = vadd.f32 %v3319, %v3392
  %v3394 = vpop.f32.mrb[0].mxu0
  %v3395 = vadd.f32 %v3321, %v3394
  %3396 = vdwg.mxu0
  %v3397 = vld [vmem:[%s6] sm:$0x3]
  %v3399 = vlaneseq
  %v3400 = vshrl.u32 %v3399, 7
  %v3401 = vsub.s32 0, %v3400
  %v3402 = vrot.slane %v3397, %v3401
  %v3403 = vlaneseq
  %v3404 = vshrl.u32 %v3403, 7
  %v3405 = vsub.s32 1, %v3404
  %v3406 = vrot.slane %v3397, %v3405
  %v3409 = vadd.f32 %v3393, %v3402
  %v3410 = vadd.f32 %v3395, %v3406
  %v3411 = vld [vmem:[%s8] sm:$0x1]
  %v3413 = vlaneseq
  %v3414 = vshrl.u32 %v3413, 7
  %v3415 = vsub.s32 0, %v3414
  %v3416 = vrot.slane %v3411, %v3415
  %v3418 = vadd.f32 %v3409, 0.0
  %v3419 = vxor.u32 %v3418, 2147483648
  %v3420 = vmul.f32 %v3419, 1.442695
  %v3421 = vpow.pop %v3420
  %v3422 = vadd.f32 %v3421, 1.0
  %v3423 = vrcp.pop %v3422
  %v3424 = vmul.f32 1.0, %v3423
  %v3425 = vadd.f32 %v3416, 0.0
  %v3426 = vmul.f32 %v3424, %v3425
  %v3427 = vadd.f32 %v3410, %v3426
  %v3428 = vtanh.pop %v3427
  %v3429 = vsub.f32 1.0, %v3424
  %3431 = vrot.lane.b32.xlu0 %v3428, 64
  %v3432 = vpop.permute.xlu0 %3431
  %v3434 = vmul.f32 %v3429, %v3432
  %v3435 = vmul.f32 %v3424, 0.0
  %v3436 = vadd.f32 %v3434, %v3435
  %v3437 = vld [vmem:[%s9] sm:$0xff]
  %v3438 = vld [vmem:[%s9 + $0x8] sm:$0xff]
  %v3439 = vld [vmem:[%s9 + $0x10] sm:$0xff]
  %v3440 = vld [vmem:[%s9 + $0x18] sm:$0xff]
  %v3441 = vld [vmem:[%s9 + $0x20] sm:$0xff]
  %v3442 = vld [vmem:[%s9 + $0x28] sm:$0xff]
  %v3443 = vld [vmem:[%s9 + $0x30] sm:$0xff]
  %v3444 = vld [vmem:[%s9 + $0x38] sm:$0xff]
  %v3445 = vld [vmem:[%s9 + $0x40] sm:$0xff]
  %v3446 = vld [vmem:[%s9 + $0x48] sm:$0xff]
  %v3447 = vld [vmem:[%s9 + $0x50] sm:$0xff]
  %v3448 = vld [vmem:[%s9 + $0x58] sm:$0xff]
  %v3449 = vld [vmem:[%s9 + $0x60] sm:$0xff]
  %v3450 = vld [vmem:[%s9 + $0x68] sm:$0xff]
  %v3451 = vld [vmem:[%s9 + $0x70] sm:$0xff]
  %v3452 = vld [vmem:[%s9 + $0x78] sm:$0xff]
  %3454 = vrot.lane.b32.xlu0 %v3214, 64
  %v3455 = vpop.permute.xlu0 %3454
  %v3456 = vsel %vm218, %v3455, 0
  %3458 = vmatprep.subr.mxu0 0.0
  %3459 = vmatpush1.msra.mxu0 %v3445
  %3460 = vmatprep.subr.mxu0 0.0
  %3461 = vmatpush1.msra.mxu0 %v3446
  %3462 = vmatprep.subr.mxu0 0.0
  %3463 = vmatpush1.msra.mxu0 %v3447
  %3464 = vmatprep.subr.mxu0 0.0
  %3465 = vmatpush1.msra.mxu0 %v3448
  %3466 = vmatprep.subr.mxu0 0.0
  %3467 = vmatpush1.msra.mxu0 %v3449
  %3468 = vmatprep.subr.mxu0 0.0
  %3469 = vmatpush1.msra.mxu0 %v3450
  %3470 = vmatprep.subr.mxu0 0.0
  %3471 = vmatpush1.msra.mxu0 %v3451
  %3472 = vmatprep.subr.mxu0 0.0
  %3473 = vmatpush1.msra.mxu0 %v3452
  %3474 = vmatprep.subr.mxu0 0.0
  %3475 = vmatpush1.msra.mxu0 0.0
  %3476 = vmatprep.subr.mxu0 0.0
  %3477 = vmatpush1.msra.mxu0 0.0
  %3478 = vmatprep.subr.mxu0 0.0
  %3479 = vmatpush1.msra.mxu0 0.0
  %3480 = vmatprep.subr.mxu0 0.0
  %3481 = vmatpush1.msra.mxu0 0.0
  %3482 = vmatprep.subr.mxu0 0.0
  %3483 = vmatpush1.msra.mxu0 0.0
  %3484 = vmatprep.subr.mxu0 0.0
  %3485 = vmatpush1.msra.mxu0 0.0
  %3486 = vmatprep.subr.mxu0 0.0
  %3487 = vmatpush1.msra.mxu0 0.0
  %3488 = vmatprep.subr.mxu0 0.0
  %3489 = vmatpush1.msra.mxu0 0.0
  %3490 = vmatprep.subr.mxu0 0.0
  %3491 = vmatpush1.msra.mxu0 0.0
  %3492 = vmatprep.subr.mxu0 0.0
  %3493 = vmatpush1.msra.mxu0 0.0
  %3494 = vmatprep.subr.mxu0 0.0
  %3495 = vmatpush1.msra.mxu0 0.0
  %3496 = vmatprep.subr.mxu0 0.0
  %3497 = vmatpush1.msra.mxu0 0.0
  %3498 = vmatprep.subr.mxu0 0.0
  %3499 = vmatpush1.msra.mxu0 0.0
  %3500 = vmatprep.subr.mxu0 0.0
  %3501 = vmatpush1.msra.mxu0 0.0
  %3502 = vmatprep.subr.mxu0 0.0
  %3503 = vmatpush1.msra.mxu0 0.0
  %3504 = vmatprep.subr.mxu0 0.0
  %3505 = vmatpush1.msra.mxu0 0.0
  %3506 = vmatprep.subr.mxu0 0.0
  %3507 = vmatpush1.msra.mxu0 0.0
  %3508 = vmatprep.subr.mxu0 0.0
  %3509 = vmatpush1.msra.mxu0 0.0
  %3510 = vmatprep.subr.mxu0 0.0
  %3511 = vmatpush1.msra.mxu0 0.0
  %3512 = vmatprep.subr.mxu0 0.0
  %3513 = vmatpush1.msra.mxu0 0.0
  %3514 = vmatprep.subr.mxu0 0.0
  %3515 = vmatpush1.msra.mxu0 0.0
  %3516 = vmatprep.subr.mxu0 0.0
  %3517 = vmatpush1.msra.mxu0 0.0
  %3518 = vmatprep.subr.mxu0 0.0
  %3519 = vmatpush1.msra.mxu0 0.0
  %3520 = vmatprep.subr.mxu0 0.0
  %3521 = vmatpush1.msra.mxu0 0.0
  %3522 = vmatprep.mubr.f32.mxu0 0.0
  %3523 = vmatmul.mubr.f32.gmra.mrb[0].mxu0 %v3456
  %v3524 = vpop.f32.mrb[0].mxu0
  %v3525 = vadd.f32 0.0, %v3524
  %v3526 = vpop.f32.mrb[0].mxu0
  %3527 = vdwg.mxu0
  %3529 = vrot.lane.b32.xlu0 %v3436, 64
  %v3530 = vpop.permute.xlu0 %3529
  %v3531 = vsel %vm218, %v3530, 0
  %3533 = vmatprep.subr.mxu0 0.0
  %3534 = vmatpush1.msra.mxu0 %v3437
  %3535 = vmatprep.subr.mxu0 0.0
  %3536 = vmatpush1.msra.mxu0 %v3438
  %3537 = vmatprep.subr.mxu0 0.0
  %3538 = vmatpush1.msra.mxu0 %v3439
  %3539 = vmatprep.subr.mxu0 0.0
  %3540 = vmatpush1.msra.mxu0 %v3440
  %3541 = vmatprep.subr.mxu0 0.0
  %3542 = vmatpush1.msra.mxu0 %v3441
  %3543 = vmatprep.subr.mxu0 0.0
  %3544 = vmatpush1.msra.mxu0 %v3442
  %3545 = vmatprep.subr.mxu0 0.0
  %3546 = vmatpush1.msra.mxu0 %v3443
  %3547 = vmatprep.subr.mxu0 0.0
  %3548 = vmatpush1.msra.mxu0 %v3444
  %3549 = vmatprep.subr.mxu0 0.0
  %3550 = vmatpush1.msra.mxu0 0.0
  %3551 = vmatprep.subr.mxu0 0.0
  %3552 = vmatpush1.msra.mxu0 0.0
  %3553 = vmatprep.subr.mxu0 0.0
  %3554 = vmatpush1.msra.mxu0 0.0
  %3555 = vmatprep.subr.mxu0 0.0
  %3556 = vmatpush1.msra.mxu0 0.0
  %3557 = vmatprep.subr.mxu0 0.0
  %3558 = vmatpush1.msra.mxu0 0.0
  %3559 = vmatprep.subr.mxu0 0.0
  %3560 = vmatpush1.msra.mxu0 0.0
  %3561 = vmatprep.subr.mxu0 0.0
  %3562 = vmatpush1.msra.mxu0 0.0
  %3563 = vmatprep.subr.mxu0 0.0
  %3564 = vmatpush1.msra.mxu0 0.0
  %3565 = vmatprep.subr.mxu0 0.0
  %3566 = vmatpush1.msra.mxu0 0.0
  %3567 = vmatprep.subr.mxu0 0.0
  %3568 = vmatpush1.msra.mxu0 0.0
  %3569 = vmatprep.subr.mxu0 0.0
  %3570 = vmatpush1.msra.mxu0 0.0
  %3571 = vmatprep.subr.mxu0 0.0
  %3572 = vmatpush1.msra.mxu0 0.0
  %3573 = vmatprep.subr.mxu0 0.0
  %3574 = vmatpush1.msra.mxu0 0.0
  %3575 = vmatprep.subr.mxu0 0.0
  %3576 = vmatpush1.msra.mxu0 0.0
  %3577 = vmatprep.subr.mxu0 0.0
  %3578 = vmatpush1.msra.mxu0 0.0
  %3579 = vmatprep.subr.mxu0 0.0
  %3580 = vmatpush1.msra.mxu0 0.0
  %3581 = vmatprep.subr.mxu0 0.0
  %3582 = vmatpush1.msra.mxu0 0.0
  %3583 = vmatprep.subr.mxu0 0.0
  %3584 = vmatpush1.msra.mxu0 0.0
  %3585 = vmatprep.subr.mxu0 0.0
  %3586 = vmatpush1.msra.mxu0 0.0
  %3587 = vmatprep.subr.mxu0 0.0
  %3588 = vmatpush1.msra.mxu0 0.0
  %3589 = vmatprep.subr.mxu0 0.0
  %3590 = vmatpush1.msra.mxu0 0.0
  %3591 = vmatprep.subr.mxu0 0.0
  %3592 = vmatpush1.msra.mxu0 0.0
  %3593 = vmatprep.subr.mxu0 0.0
  %3594 = vmatpush1.msra.mxu0 0.0
  %3595 = vmatprep.subr.mxu0 0.0
  %3596 = vmatpush1.msra.mxu0 0.0
  %3597 = vmatprep.mubr.f32.mxu0 0.0
  %3598 = vmatmul.mubr.f32.gmra.mrb[0].mxu0 %v3531
  %v3599 = vpop.f32.mrb[0].mxu0
  %v3600 = vadd.f32 %v3525, %v3599
  %v3601 = vpop.f32.mrb[0].mxu0
  %3602 = vdwg.mxu0
  %v3603 = vld [vmem:[%s10] sm:$0x1]
  %v3605 = vlaneseq
  %v3606 = vshrl.u32 %v3605, 7
  %v3607 = vsub.s32 0, %v3606
  %v3608 = vrot.slane %v3603, %v3607
  %v3610 = vadd.f32 %v3600, %v3608
  %v3611 = vmax.f32 %v3610, 0.0
  %v3612 = vld [vmem:[%s11] sm:$0xff]
  %v3613 = vld [vmem:[%s11 + $0x8] sm:$0xff]
  %v3614 = vld [vmem:[%s11 + $0x10] sm:$0xff]
  %v3615 = vld [vmem:[%s11 + $0x18] sm:$0xff]
  %v3616 = vld [vmem:[%s11 + $0x20] sm:$0xff]
  %v3617 = vld [vmem:[%s11 + $0x28] sm:$0xff]
  %v3618 = vld [vmem:[%s11 + $0x30] sm:$0xff]
  %v3619 = vld [vmem:[%s11 + $0x38] sm:$0xff]
  %v3620 = vld [vmem:[%s11 + $0x40] sm:$0xff]
  %v3621 = vld [vmem:[%s11 + $0x48] sm:$0xff]
  %v3622 = vld [vmem:[%s11 + $0x50] sm:$0xff]
  %v3623 = vld [vmem:[%s11 + $0x58] sm:$0xff]
  %v3624 = vld [vmem:[%s11 + $0x60] sm:$0xff]
  %v3625 = vld [vmem:[%s11 + $0x68] sm:$0xff]
  %v3626 = vld [vmem:[%s11 + $0x70] sm:$0xff]
  %v3627 = vld [vmem:[%s11 + $0x78] sm:$0xff]
  %v3628 = vld [vmem:[%s11 + $0x80] sm:$0xff]
  %v3629 = vld [vmem:[%s11 + $0x88] sm:$0xff]
  %v3630 = vld [vmem:[%s11 + $0x90] sm:$0xff]
  %v3631 = vld [vmem:[%s11 + $0x98] sm:$0xff]
  %v3632 = vld [vmem:[%s11 + $0xa0] sm:$0xff]
  %v3633 = vld [vmem:[%s11 + $0xa8] sm:$0xff]
  %v3634 = vld [vmem:[%s11 + $0xb0] sm:$0xff]
  %v3635 = vld [vmem:[%s11 + $0xb8] sm:$0xff]
  %v3636 = vld [vmem:[%s11 + $0xc0] sm:$0xff]
  %v3637 = vld [vmem:[%s11 + $0xc8] sm:$0xff]
  %v3638 = vld [vmem:[%s11 + $0xd0] sm:$0xff]
  %v3639 = vld [vmem:[%s11 + $0xd8] sm:$0xff]
  %v3640 = vld [vmem:[%s11 + $0xe0] sm:$0xff]
  %v3641 = vld [vmem:[%s11 + $0xe8] sm:$0xff]
  %v3642 = vld [vmem:[%s11 + $0xf0] sm:$0xff]
  %v3643 = vld [vmem:[%s11 + $0xf8] sm:$0xff]
  %v3644 = vld [vmem:[%s12] sm:$0x3]
  %v3646 = vlaneseq
  %v3647 = vshrl.u32 %v3646, 7
  %v3648 = vsub.s32 0, %v3647
  %v3649 = vrot.slane %v3644, %v3648
  %v3650 = vlaneseq
  %v3651 = vshrl.u32 %v3650, 7
  %v3652 = vsub.s32 1, %v3651
  %v3653 = vrot.slane %v3644, %v3652
  %3656 = vmatprep.subr.mxu0 %v3613
  %3657 = vmatpush1.msra.mxu0 %v3612
  %3658 = vmatprep.subr.mxu0 %v3615
  %3659 = vmatpush1.msra.mxu0 %v3614
  %3660 = vmatprep.subr.mxu0 %v3617
  %3661 = vmatpush1.msra.mxu0 %v3616
  %3662 = vmatprep.subr.mxu0 %v3619
  %3663 = vmatpush1.msra.mxu0 %v3618
  %3664 = vmatprep.subr.mxu0 %v3621
  %3665 = vmatpush1.msra.mxu0 %v3620
  %3666 = vmatprep.subr.mxu0 %v3623
  %3667 = vmatpush1.msra.mxu0 %v3622
  %3668 = vmatprep.subr.mxu0 %v3625
  %3669 = vmatpush1.msra.mxu0 %v3624
  %3670 = vmatprep.subr.mxu0 %v3627
  %3671 = vmatpush1.msra.mxu0 %v3626
  %3672 = vmatprep.subr.mxu0 %v3629
  %3673 = vmatpush1.msra.mxu0 %v3628
  %3674 = vmatprep.subr.mxu0 %v3631
  %3675 = vmatpush1.msra.mxu0 %v3630
  %3676 = vmatprep.subr.mxu0 %v3633
  %3677 = vmatpush1.msra.mxu0 %v3632
  %3678 = vmatprep.subr.mxu0 %v3635
  %3679 = vmatpush1.msra.mxu0 %v3634
  %3680 = vmatprep.subr.mxu0 %v3637
  %3681 = vmatpush1.msra.mxu0 %v3636
  %3682 = vmatprep.subr.mxu0 %v3639
  %3683 = vmatpush1.msra.mxu0 %v3638
  %3684 = vmatprep.subr.mxu0 %v3641
  %3685 = vmatpush1.msra.mxu0 %v3640
  %3686 = vmatprep.subr.mxu0 %v3643
  %3687 = vmatpush1.msra.mxu0 %v3642
  %3688 = vmatprep.subr.mxu0 0.0
  %3689 = vmatpush1.msra.mxu0 0.0
  %3690 = vmatprep.subr.mxu0 0.0
  %3691 = vmatpush1.msra.mxu0 0.0
  %3692 = vmatprep.subr.mxu0 0.0
  %3693 = vmatpush1.msra.mxu0 0.0
  %3694 = vmatprep.subr.mxu0 0.0
  %3695 = vmatpush1.msra.mxu0 0.0
  %3696 = vmatprep.subr.mxu0 0.0
  %3697 = vmatpush1.msra.mxu0 0.0
  %3698 = vmatprep.subr.mxu0 0.0
  %3699 = vmatpush1.msra.mxu0 0.0
  %3700 = vmatprep.subr.mxu0 0.0
  %3701 = vmatpush1.msra.mxu0 0.0
  %3702 = vmatprep.subr.mxu0 0.0
  %3703 = vmatpush1.msra.mxu0 0.0
  %3704 = vmatprep.subr.mxu0 0.0
  %3705 = vmatpush1.msra.mxu0 0.0
  %3706 = vmatprep.subr.mxu0 0.0
  %3707 = vmatpush1.msra.mxu0 0.0
  %3708 = vmatprep.subr.mxu0 0.0
  %3709 = vmatpush1.msra.mxu0 0.0
  %3710 = vmatprep.subr.mxu0 0.0
  %3711 = vmatpush1.msra.mxu0 0.0
  %3712 = vmatprep.subr.mxu0 0.0
  %3713 = vmatpush1.msra.mxu0 0.0
  %3714 = vmatprep.subr.mxu0 0.0
  %3715 = vmatpush1.msra.mxu0 0.0
  %3716 = vmatprep.subr.mxu0 0.0
  %3717 = vmatpush1.msra.mxu0 0.0
  %3718 = vmatprep.subr.mxu0 0.0
  %3719 = vmatpush1.msra.mxu0 0.0
  %3720 = vmatprep.mubr.f32.mxu0 0.0
  %3721 = vmatmul.mubr.f32.gmra.mrb[0].mxu0 %v3611
  %v3722 = vpop.f32.mrb[0].mxu0
  %v3723 = vadd.f32 %v3649, %v3722
  %v3724 = vpop.f32.mrb[0].mxu0
  %v3725 = vadd.f32 %v3653, %v3724
  %3726 = vdwg.mxu0
  %v3727 = vmax.f32 %v3723, 0.0
  %v3728 = vmax.f32 %v3725, 0.0
  %v3729 = vld [vmem:[%s13] sm:$0xff]
  %v3730 = vld [vmem:[%s13 + $0x8] sm:$0xff]
  %v3731 = vld [vmem:[%s13 + $0x10] sm:$0xff]
  %v3732 = vld [vmem:[%s13 + $0x18] sm:$0xff]
  %v3733 = vld [vmem:[%s13 + $0x20] sm:$0xff]
  %v3734 = vld [vmem:[%s13 + $0x28] sm:$0xff]
  %v3735 = vld [vmem:[%s13 + $0x30] sm:$0xff]
  %v3736 = vld [vmem:[%s13 + $0x38] sm:$0xff]
  %v3737 = vld [vmem:[%s13 + $0x40] sm:$0xff]
  %v3738 = vld [vmem:[%s13 + $0x48] sm:$0xff]
  %v3739 = vld [vmem:[%s13 + $0x50] sm:$0xff]
  %v3740 = vld [vmem:[%s13 + $0x58] sm:$0xff]
  %v3741 = vld [vmem:[%s13 + $0x60] sm:$0xff]
  %v3742 = vld [vmem:[%s13 + $0x68] sm:$0xff]
  %v3743 = vld [vmem:[%s13 + $0x70] sm:$0xff]
  %v3744 = vld [vmem:[%s13 + $0x78] sm:$0xff]
  %v3745 = vld [vmem:[%s13 + $0x80] sm:$0xff]
  %v3746 = vld [vmem:[%s13 + $0x88] sm:$0xff]
  %v3747 = vld [vmem:[%s13 + $0x90] sm:$0xff]
  %v3748 = vld [vmem:[%s13 + $0x98] sm:$0xff]
  %v3749 = vld [vmem:[%s13 + $0xa0] sm:$0xff]
  %v3750 = vld [vmem:[%s13 + $0xa8] sm:$0xff]
  %v3751 = vld [vmem:[%s13 + $0xb0] sm:$0xff]
  %v3752 = vld [vmem:[%s13 + $0xb8] sm:$0xff]
  %v3753 = vld [vmem:[%s13 + $0xc0] sm:$0xff]
  %v3754 = vld [vmem:[%s13 + $0xc8] sm:$0xff]
  %v3755 = vld [vmem:[%s13 + $0xd0] sm:$0xff]
  %v3756 = vld [vmem:[%s13 + $0xd8] sm:$0xff]
  %v3757 = vld [vmem:[%s13 + $0xe0] sm:$0xff]
  %v3758 = vld [vmem:[%s13 + $0xe8] sm:$0xff]
  %v3759 = vld [vmem:[%s13 + $0xf0] sm:$0xff]
  %v3760 = vld [vmem:[%s13 + $0xf8] sm:$0xff]
  %v3761 = vld [vmem:[%s14] sm:$0x1]
  %v3763 = vlaneseq
  %v3764 = vshrl.u32 %v3763, 7
  %v3765 = vsub.s32 0, %v3764
  %v3766 = vrot.slane %v3761, %v3765
  %3768 = vmatprep.subr.mxu0 0.0
  %3769 = vmatpush1.msra.mxu0 %v3729
  %3770 = vmatprep.subr.mxu0 0.0
  %3771 = vmatpush1.msra.mxu0 %v3730
  %3772 = vmatprep.subr.mxu0 0.0
  %3773 = vmatpush1.msra.mxu0 %v3731
  %3774 = vmatprep.subr.mxu0 0.0
  %3775 = vmatpush1.msra.mxu0 %v3732
  %3776 = vmatprep.subr.mxu0 0.0
  %3777 = vmatpush1.msra.mxu0 %v3733
  %3778 = vmatprep.subr.mxu0 0.0
  %3779 = vmatpush1.msra.mxu0 %v3734
  %3780 = vmatprep.subr.mxu0 0.0
  %3781 = vmatpush1.msra.mxu0 %v3735
  %3782 = vmatprep.subr.mxu0 0.0
  %3783 = vmatpush1.msra.mxu0 %v3736
  %3784 = vmatprep.subr.mxu0 0.0
  %3785 = vmatpush1.msra.mxu0 %v3737
  %3786 = vmatprep.subr.mxu0 0.0
  %3787 = vmatpush1.msra.mxu0 %v3738
  %3788 = vmatprep.subr.mxu0 0.0
  %3789 = vmatpush1.msra.mxu0 %v3739
  %3790 = vmatprep.subr.mxu0 0.0
  %3791 = vmatpush1.msra.mxu0 %v3740
  %3792 = vmatprep.subr.mxu0 0.0
  %3793 = vmatpush1.msra.mxu0 %v3741
  %3794 = vmatprep.subr.mxu0 0.0
  %3795 = vmatpush1.msra.mxu0 %v3742
  %3796 = vmatprep.subr.mxu0 0.0
  %3797 = vmatpush1.msra.mxu0 %v3743
  %3798 = vmatprep.subr.mxu0 0.0
  %3799 = vmatpush1.msra.mxu0 %v3744
  %3800 = vmatprep.subr.mxu0 0.0
  %3801 = vmatpush1.msra.mxu0 %v3745
  %3802 = vmatprep.subr.mxu0 0.0
  %3803 = vmatpush1.msra.mxu0 %v3746
  %3804 = vmatprep.subr.mxu0 0.0
  %3805 = vmatpush1.msra.mxu0 %v3747
  %3806 = vmatprep.subr.mxu0 0.0
  %3807 = vmatpush1.msra.mxu0 %v3748
  %3808 = vmatprep.subr.mxu0 0.0
  %3809 = vmatpush1.msra.mxu0 %v3749
  %3810 = vmatprep.subr.mxu0 0.0
  %3811 = vmatpush1.msra.mxu0 %v3750
  %3812 = vmatprep.subr.mxu0 0.0
  %3813 = vmatpush1.msra.mxu0 %v3751
  %3814 = vmatprep.subr.mxu0 0.0
  %3815 = vmatpush1.msra.mxu0 %v3752
  %3816 = vmatprep.subr.mxu0 0.0
  %3817 = vmatpush1.msra.mxu0 %v3753
  %3818 = vmatprep.subr.mxu0 0.0
  %3819 = vmatpush1.msra.mxu0 %v3754
  %3820 = vmatprep.subr.mxu0 0.0
  %3821 = vmatpush1.msra.mxu0 %v3755
  %3822 = vmatprep.subr.mxu0 0.0
  %3823 = vmatpush1.msra.mxu0 %v3756
  %3824 = vmatprep.subr.mxu0 0.0
  %3825 = vmatpush1.msra.mxu0 %v3757
  %3826 = vmatprep.subr.mxu0 0.0
  %3827 = vmatpush1.msra.mxu0 %v3758
  %3828 = vmatprep.subr.mxu0 0.0
  %3829 = vmatpush1.msra.mxu0 %v3759
  %3830 = vmatprep.subr.mxu0 0.0
  %3831 = vmatpush1.msra.mxu0 %v3760
  %3832 = vmatprep.mubr.f32.mxu0 %v3728
  %3833 = vmatmul.mubr.f32.gmra.mrb[0].mxu0 %v3727
  %v3834 = vpop.f32.mrb[0].mxu0
  %v3835 = vadd.f32 %v3766, %v3834
  %v3836 = vpop.f32.mrb[0].mxu0
  %3837 = vdwg.mxu0
  %3838 = vst [vmem:[%s15] sm:$0xff] %v3835
  // Predicated region
  $region62: #{rnnet_forward.1} parent=0 // pred_check
    _
  $region63: #{rnnet_forward.1} parent=0 // pred_check_branch
    %3840 = sbr.rel (0) target = $region65
  $region64: #{rnnet_forward.1} parent=0 // pred_region
    _
  $region65: #{rnnet_forward.1} parent=0 // pred_fallthru
    _
  // Predicated region
  $region66: #{rnnet_forward.1} parent=0 // pred_check
    _
  $region67: #{rnnet_forward.1} parent=0 // pred_check_branch
    %3842 = sbr.rel (0) target = $region69
  $region68: #{rnnet_forward.1} parent=0 // pred_region
    _
  $region69: #{rnnet_forward.1} parent=0 // pred_fallthru
    _

</llo_original>
